<compile_context>
chip_gen: v7x
topology: tpu7x:2x2x1
jax: 0.10.0
libtpu: 0.0.40
codegen_flags: <defaults>
</compile_context>

<pallas_src>
import functools

import jax
import jax.numpy as jnp
import numpy as np
from jax.experimental import pallas as pl
from jax.experimental.pallas import tpu as pltpu


# ----------------------------------------------------------------------------- kernel
def _im2col_kernel(x_ref, o_ref, *, k, d, pad, H, W):
    # x_ref: (1, c_tile, H*W)       flattened, UNPADDED input channels
    # o_ref: (1, c_tile, k*k*H*W)   lane-dense output; plane p at [p*H*W, (p+1)*H*W)
    HW = H * W
    if pad > 0:
        # Zero once so out-of-image (halo) positions are 0; interiors are
        # overwritten below.  Full-width unmasked stores -> cheap.
        o_ref[...] = jnp.zeros_like(o_ref)
    for di in range(k):
        # Valid output rows h: 0 <= h + di*d - pad < H   (all compile-time ints)
        row_lo = max(0, pad - di * d)
        row_hi = min(H, H + pad - di * d)
        for dj in range(k):
            p = di * k + dj
            ws = dj * d - pad                      # source col = dest col + ws
            col_lo = max(0, -ws)                   # valid dest cols [col_lo, col_hi)
            col_hi = min(W, W - ws)
            if row_lo >= row_hi or col_lo >= col_hi:
                continue
            base = p * HW
            for h in range(row_lo, row_hi):
                hs = h + di * d - pad
                o_ref[0, :, base + h * W + col_lo: base + h * W + col_hi] = \
                    x_ref[0, :, hs * W + col_lo + ws: hs * W + col_hi + ws]


# ----------------------------------------------------------------------------- sizing
def _sublane(itemsize):
    # Native sublane granularity per dtype width (f32:8, bf16:16, int8/fp8:32).
    return {4: 8, 2: 16, 1: 32}.get(itemsize, 8)


def _round_up(x, m):
    return ((x + m - 1) // m) * m


def _block_vmem_bytes(c_tile, HW, kk, itemsize):
    sub = _sublane(itemsize)
    in_b = _round_up(c_tile, sub) * _round_up(HW, 128) * itemsize
    out_b = _round_up(c_tile, sub) * _round_up(kk * HW, 128) * itemsize
    return 2 * (in_b + out_b)          # x2: double-buffered input + output blocks


def _vmem_capacity_bytes():
    try:
        info = pltpu.get_tpu_info()
        for attr in ("vmem_capacity_bytes", "vmem_size_bytes", "vmem_bytes"):
            cap = getattr(info, attr, None)
            if cap:
                return int(cap)
    except Exception:
        pass
    return 64 * 1024 * 1024            # conservative fallback (v7x per-core VMEM)


def _pick_c_tile(N, C, HW, kk, itemsize, budget_bytes):
    """Largest channel tile whose double-buffered blocks fit the VMEM budget.

    The 2nd-minor block dim must be a multiple of the sublane granule or equal
    to the full channel dim (TPU block-shape constraint), so candidates are C
    itself plus multiples of the granule.
    """
    sub = _sublane(itemsize)
    cands = [C] + list(range(sub, C, sub))
    fitting = [ct for ct in cands
               if _block_vmem_bytes(ct, HW, kk, itemsize) <= budget_bytes]
    if fitting:
        ct = max(fitting)
    else:
        # TODO(synk): spatial (H-row) tiling fallback instead of over-budget blocks.
        ct = min(C, sub)
    # Keep >=2 blocks along the parallel axes so both v7x TensorCores get work.
    if N == 1 and pl.cdiv(C, ct) < 2 and C >= 2 * sub:
        ct = _round_up(pl.cdiv(C, 2), sub)
    return ct


# ----------------------------------------------------------------------------- wrapper
def im2col(x, k: int, d: int = 2, is5D: bool = True):
    """Pallas equivalent of Im2ColLayer.forward (stride=1, 'same' output size)."""
    N, C, H, W = x.shape
    assert (d * (k - 1)) % 2 == 0, "Im2ColLayer assumes d*(k-1) even (same-size output)"
    pad = d * (k - 1) // 2
    kk = k * k
    HW = H * W
    itemsize = x.dtype.itemsize

    vmem_cap = _vmem_capacity_bytes()
    vmem_budget = int(vmem_cap * 0.65)     # live double-buffered blocks
    vmem_limit = int(vmem_cap * 0.85)      # headroom for Mosaic-internal scratch

    c_tile = _pick_c_tile(N, C, HW, kk, itemsize, vmem_budget)
    grid = (N, pl.cdiv(C, c_tile))

    # Free, contiguous reshape: lane-dense (H*W) spatial axis, no jnp.pad pass.
    xf = x.reshape(N, C, HW)

    kernel = functools.partial(_im2col_kernel, k=k, d=d, pad=pad, H=H, W=W)
    bytes_accessed = N * C * HW * itemsize * (1 + kk)   # 1 read + k*k writes

    out_flat = pl.pallas_call(
        kernel,
        out_shape=jax.ShapeDtypeStruct((N, C, kk * HW), x.dtype),
        grid_spec=pltpu.PrefetchScalarGridSpec(
            num_scalar_prefetch=0,
            grid=grid,
            in_specs=[pl.BlockSpec((1, c_tile, HW), lambda n, c: (n, c, 0))],
            out_specs=pl.BlockSpec((1, c_tile, kk * HW), lambda n, c: (n, c, 0)),
        ),
        compiler_params=pltpu.CompilerParams(
            dimension_semantics=("parallel", "parallel"),
            vmem_limit_bytes=vmem_limit,
        ),
        cost_estimate=pl.CostEstimate(flops=0, transcendentals=0,
                                      bytes_accessed=bytes_accessed),
    )(xf)

    if is5D:
        return out_flat.reshape(N, C, kk, H, W)
    # Same contiguous layout as PyTorch's .view(N, C*k*k, H, W) — free reshape.
    return out_flat.reshape(N, C * kk, H, W)


# ----------------------------------------------------------------------------- reference
def _ref_im2col(x, k, d):
    """Plain-JAX reference matching nn.Unfold + view(N, C, k*k, H, W)."""
    N, C, H, W = x.shape
    pad = d * (k - 1) // 2
    xp = jnp.pad(x, ((0, 0), (0, 0), (pad, pad), (pad, pad)))
    cols = [
        xp[:, :, di * d:di * d + H, dj * d:dj * d + W]
        for di in range(k) for dj in range(k)
    ]
    return jnp.stack(cols, axis=2)  # (N, C, k*k, H, W)


if __name__ == "__main__":
    # Module config: k=3, d=2 -> padding=2, output spatial size == input size.
    k, d = 3, 2
    N, C, H, W = 2, 4, 16, 16

    key = jax.random.PRNGKey(0)
    x = jax.random.normal(key, (N, C, H, W), dtype=jnp.float32)

    out5d = jax.block_until_ready(im2col(x, k, d, is5D=True))
    out4d = jax.block_until_ready(im2col(x, k, d, is5D=False))

    ref5d = _ref_im2col(x, k, d)
    assert out5d.shape == (N, C, k * k, H, W)
    assert out4d.shape == (N, C * k * k, H, W)
    np.testing.assert_array_equal(np.asarray(out5d), np.asarray(ref5d))
    np.testing.assert_array_equal(
        np.asarray(out4d), np.asarray(ref5d).reshape(N, C * k * k, H, W))

    print("KERNEL_OK")
</pallas_src>

<mosaic_0001>
module attributes {stable_mosaic.version = 11 : i64} {
  func.func @_im2col_kernel(%arg0: i32, %arg1: i32, %arg2: memref<1x4x256xf32, #tpu.memory_space<vmem>>, %arg3: memref<1x4x2304xf32, #tpu.memory_space<vmem>>) attributes {dimension_semantics = [#tpu.dimension_semantics<parallel>, #tpu.dimension_semantics<parallel>], iteration_bounds = array<i64: 2, 1>, scalar_prefetch = 0 : i64, scratch_operands = 0 : i64, tpu.core_type = #tpu.core_type<tc>, window_params = [{transform_indices = @transform_0, window_bounds = array<i64: 1, 4, 256>}, {transform_indices = @transform_1, window_bounds = array<i64: 1, 4, 2304>}]} {
    %cst = arith.constant 0.000000e+00 : f32
    %0 = vector.broadcast %cst : f32 to vector<1x4x2304xf32>
    %c0 = arith.constant 0 : index
    %c0_0 = arith.constant 0 : index
    %c0_1 = arith.constant 0 : index
    %1 = vector.load %arg3[%c0, %c0_0, %c0_1] : memref<1x4x2304xf32, #tpu.memory_space<vmem>>, vector<1x4x2304xf32>
    tpu.vector_store %arg3[%c0, %c0_0, %c0_1], %0 {strides = array<i32>} : memref<1x4x2304xf32, #tpu.memory_space<vmem>>, vector<1x4x2304xf32>,
    %c0_2 = arith.constant 0 : index
    %c0_3 = arith.constant 0 : index
    %c0_4 = arith.constant 0 : index
    %2 = vector.load %arg2[%c0_2, %c0_3, %c0_4] : memref<1x4x256xf32, #tpu.memory_space<vmem>>, vector<1x4x14xf32>
    %3 = vector.shape_cast %2 : vector<1x4x14xf32> to vector<4x14xf32>
    %c0_5 = arith.constant 0 : index
    %c0_6 = arith.constant 0 : index
    %c34 = arith.constant 34 : index
    %4 = vector.load %arg3[%c0_5, %c0_6, %c34] : memref<1x4x2304xf32, #tpu.memory_space<vmem>>, vector<1x4x14xf32>
    %5 = vector.shape_cast %4 : vector<1x4x14xf32> to vector<4x14xf32>
    %6 = vector.shape_cast %3 : vector<4x14xf32> to vector<1x4x14xf32>
    tpu.vector_store %arg3[%c0_5, %c0_6, %c34], %6 {strides = array<i32>} : memref<1x4x2304xf32, #tpu.memory_space<vmem>>, vector<1x4x14xf32>,
    %c0_7 = arith.constant 0 : index
    %c0_8 = arith.constant 0 : index
    %c16 = arith.constant 16 : index
    %7 = vector.load %arg2[%c0_7, %c0_8, %c16] : memref<1x4x256xf32, #tpu.memory_space<vmem>>, vector<1x4x14xf32>
    %8 = vector.shape_cast %7 : vector<1x4x14xf32> to vector<4x14xf32>
    %c0_9 = arith.constant 0 : index
    %c0_10 = arith.constant 0 : index
    %c50 = arith.constant 50 : index
    %9 = vector.load %arg3[%c0_9, %c0_10, %c50] : memref<1x4x2304xf32, #tpu.memory_space<vmem>>, vector<1x4x14xf32>
    %10 = vector.shape_cast %9 : vector<1x4x14xf32> to vector<4x14xf32>
    %11 = vector.shape_cast %8 : vector<4x14xf32> to vector<1x4x14xf32>
    tpu.vector_store %arg3[%c0_9, %c0_10, %c50], %11 {strides = array<i32>} : memref<1x4x2304xf32, #tpu.memory_space<vmem>>, vector<1x4x14xf32>,
    %c0_11 = arith.constant 0 : index
    %c0_12 = arith.constant 0 : index
    %c32 = arith.constant 32 : index
    %12 = vector.load %arg2[%c0_11, %c0_12, %c32] : memref<1x4x256xf32, #tpu.memory_space<vmem>>, vector<1x4x14xf32>
    %13 = vector.shape_cast %12 : vector<1x4x14xf32> to vector<4x14xf32>
    %c0_13 = arith.constant 0 : index
    %c0_14 = arith.constant 0 : index
    %c66 = arith.constant 66 : index
    %14 = vector.load %arg3[%c0_13, %c0_14, %c66] : memref<1x4x2304xf32, #tpu.memory_space<vmem>>, vector<1x4x14xf32>
    %15 = vector.shape_cast %14 : vector<1x4x14xf32> to vector<4x14xf32>
    %16 = vector.shape_cast %13 : vector<4x14xf32> to vector<1x4x14xf32>
    tpu.vector_store %arg3[%c0_13, %c0_14, %c66], %16 {strides = array<i32>} : memref<1x4x2304xf32, #tpu.memory_space<vmem>>, vector<1x4x14xf32>,
    %c0_15 = arith.constant 0 : index
    %c0_16 = arith.constant 0 : index
    %c48 = arith.constant 48 : index
    %17 = vector.load %arg2[%c0_15, %c0_16, %c48] : memref<1x4x256xf32, #tpu.memory_space<vmem>>, vector<1x4x14xf32>
    %18 = vector.shape_cast %17 : vector<1x4x14xf32> to vector<4x14xf32>
    %c0_17 = arith.constant 0 : index
    %c0_18 = arith.constant 0 : index
    %c82 = arith.constant 82 : index
    %19 = vector.load %arg3[%c0_17, %c0_18, %c82] : memref<1x4x2304xf32, #tpu.memory_space<vmem>>, vector<1x4x14xf32>
    %20 = vector.shape_cast %19 : vector<1x4x14xf32> to vector<4x14xf32>
    %21 = vector.shape_cast %18 : vector<4x14xf32> to vector<1x4x14xf32>
    tpu.vector_store %arg3[%c0_17, %c0_18, %c82], %21 {strides = array<i32>} : memref<1x4x2304xf32, #tpu.memory_space<vmem>>, vector<1x4x14xf32>,
    %c0_19 = arith.constant 0 : index
    %c0_20 = arith.constant 0 : index
    %c64 = arith.constant 64 : index
    %22 = vector.load %arg2[%c0_19, %c0_20, %c64] : memref<1x4x256xf32, #tpu.memory_space<vmem>>, vector<1x4x14xf32>
    %23 = vector.shape_cast %22 : vector<1x4x14xf32> to vector<4x14xf32>
    %c0_21 = arith.constant 0 : index
    %c0_22 = arith.constant 0 : index
    %c98 = arith.constant 98 : index
    %24 = vector.load %arg3[%c0_21, %c0_22, %c98] : memref<1x4x2304xf32, #tpu.memory_space<vmem>>, vector<1x4x14xf32>
    %25 = vector.shape_cast %24 : vector<1x4x14xf32> to vector<4x14xf32>
    %26 = vector.shape_cast %23 : vector<4x14xf32> to vector<1x4x14xf32>
    tpu.vector_store %arg3[%c0_21, %c0_22, %c98], %26 {strides = array<i32>} : memref<1x4x2304xf32, #tpu.memory_space<vmem>>, vector<1x4x14xf32>,
    %c0_23 = arith.constant 0 : index
    %c0_24 = arith.constant 0 : index
    %c80 = arith.constant 80 : index
    %27 = vector.load %arg2[%c0_23, %c0_24, %c80] : memref<1x4x256xf32, #tpu.memory_space<vmem>>, vector<1x4x14xf32>
    %28 = vector.shape_cast %27 : vector<1x4x14xf32> to vector<4x14xf32>
    %c0_25 = arith.constant 0 : index
    %c0_26 = arith.constant 0 : index
    %c114 = arith.constant 114 : index
    %29 = vector.load %arg3[%c0_25, %c0_26, %c114] : memref<1x4x2304xf32, #tpu.memory_space<vmem>>, vector<1x4x14xf32>
    %30 = vector.shape_cast %29 : vector<1x4x14xf32> to vector<4x14xf32>
    %31 = vector.shape_cast %28 : vector<4x14xf32> to vector<1x4x14xf32>
    tpu.vector_store %arg3[%c0_25, %c0_26, %c114], %31 {strides = array<i32>} : memref<1x4x2304xf32, #tpu.memory_space<vmem>>, vector<1x4x14xf32>,
    %c0_27 = arith.constant 0 : index
    %c0_28 = arith.constant 0 : index
    %c96 = arith.constant 96 : index
    %32 = vector.load %arg2[%c0_27, %c0_28, %c96] : memref<1x4x256xf32, #tpu.memory_space<vmem>>, vector<1x4x14xf32>
    %33 = vector.shape_cast %32 : vector<1x4x14xf32> to vector<4x14xf32>
    %c0_29 = arith.constant 0 : index
    %c0_30 = arith.constant 0 : index
    %c130 = arith.constant 130 : index
    %34 = vector.load %arg3[%c0_29, %c0_30, %c130] : memref<1x4x2304xf32, #tpu.memory_space<vmem>>, vector<1x4x14xf32>
    %35 = vector.shape_cast %34 : vector<1x4x14xf32> to vector<4x14xf32>
    %36 = vector.shape_cast %33 : vector<4x14xf32> to vector<1x4x14xf32>
    tpu.vector_store %arg3[%c0_29, %c0_30, %c130], %36 {strides = array<i32>} : memref<1x4x2304xf32, #tpu.memory_space<vmem>>, vector<1x4x14xf32>,
    %c0_31 = arith.constant 0 : index
    %c0_32 = arith.constant 0 : index
    %c112 = arith.constant 112 : index
    %37 = vector.load %arg2[%c0_31, %c0_32, %c112] : memref<1x4x256xf32, #tpu.memory_space<vmem>>, vector<1x4x14xf32>
    %38 = vector.shape_cast %37 : vector<1x4x14xf32> to vector<4x14xf32>
    %c0_33 = arith.constant 0 : index
    %c0_34 = arith.constant 0 : index
    %c146 = arith.constant 146 : index
    %39 = vector.load %arg3[%c0_33, %c0_34, %c146] : memref<1x4x2304xf32, #tpu.memory_space<vmem>>, vector<1x4x14xf32>
    %40 = vector.shape_cast %39 : vector<1x4x14xf32> to vector<4x14xf32>
    %41 = vector.shape_cast %38 : vector<4x14xf32> to vector<1x4x14xf32>
    tpu.vector_store %arg3[%c0_33, %c0_34, %c146], %41 {strides = array<i32>} : memref<1x4x2304xf32, #tpu.memory_space<vmem>>, vector<1x4x14xf32>,
    %c0_35 = arith.constant 0 : index
    %c0_36 = arith.constant 0 : index
    %c128 = arith.constant 128 : index
    %42 = vector.load %arg2[%c0_35, %c0_36, %c128] : memref<1x4x256xf32, #tpu.memory_space<vmem>>, vector<1x4x14xf32>
    %43 = vector.shape_cast %42 : vector<1x4x14xf32> to vector<4x14xf32>
    %c0_37 = arith.constant 0 : index
    %c0_38 = arith.constant 0 : index
    %c162 = arith.constant 162 : index
    %44 = vector.load %arg3[%c0_37, %c0_38, %c162] : memref<1x4x2304xf32, #tpu.memory_space<vmem>>, vector<1x4x14xf32>
    %45 = vector.shape_cast %44 : vector<1x4x14xf32> to vector<4x14xf32>
    %46 = vector.shape_cast %43 : vector<4x14xf32> to vector<1x4x14xf32>
    tpu.vector_store %arg3[%c0_37, %c0_38, %c162], %46 {strides = array<i32>} : memref<1x4x2304xf32, #tpu.memory_space<vmem>>, vector<1x4x14xf32>,
    %c0_39 = arith.constant 0 : index
    %c0_40 = arith.constant 0 : index
    %c144 = arith.constant 144 : index
    %47 = vector.load %arg2[%c0_39, %c0_40, %c144] : memref<1x4x256xf32, #tpu.memory_space<vmem>>, vector<1x4x14xf32>
    %48 = vector.shape_cast %47 : vector<1x4x14xf32> to vector<4x14xf32>
    %c0_41 = arith.constant 0 : index
    %c0_42 = arith.constant 0 : index
    %c178 = arith.constant 178 : index
    %49 = vector.load %arg3[%c0_41, %c0_42, %c178] : memref<1x4x2304xf32, #tpu.memory_space<vmem>>, vector<1x4x14xf32>
    %50 = vector.shape_cast %49 : vector<1x4x14xf32> to vector<4x14xf32>
    %51 = vector.shape_cast %48 : vector<4x14xf32> to vector<1x4x14xf32>
    tpu.vector_store %arg3[%c0_41, %c0_42, %c178], %51 {strides = array<i32>} : memref<1x4x2304xf32, #tpu.memory_space<vmem>>, vector<1x4x14xf32>,
    %c0_43 = arith.constant 0 : index
    %c0_44 = arith.constant 0 : index
    %c160 = arith.constant 160 : index
    %52 = vector.load %arg2[%c0_43, %c0_44, %c160] : memref<1x4x256xf32, #tpu.memory_space<vmem>>, vector<1x4x14xf32>
    %53 = vector.shape_cast %52 : vector<1x4x14xf32> to vector<4x14xf32>
    %c0_45 = arith.constant 0 : index
    %c0_46 = arith.constant 0 : index
    %c194 = arith.constant 194 : index
    %54 = vector.load %arg3[%c0_45, %c0_46, %c194] : memref<1x4x2304xf32, #tpu.memory_space<vmem>>, vector<1x4x14xf32>
    %55 = vector.shape_cast %54 : vector<1x4x14xf32> to vector<4x14xf32>
    %56 = vector.shape_cast %53 : vector<4x14xf32> to vector<1x4x14xf32>
    tpu.vector_store %arg3[%c0_45, %c0_46, %c194], %56 {strides = array<i32>} : memref<1x4x2304xf32, #tpu.memory_space<vmem>>, vector<1x4x14xf32>,
    %c0_47 = arith.constant 0 : index
    %c0_48 = arith.constant 0 : index
    %c176 = arith.constant 176 : index
    %57 = vector.load %arg2[%c0_47, %c0_48, %c176] : memref<1x4x256xf32, #tpu.memory_space<vmem>>, vector<1x4x14xf32>
    %58 = vector.shape_cast %57 : vector<1x4x14xf32> to vector<4x14xf32>
    %c0_49 = arith.constant 0 : index
    %c0_50 = arith.constant 0 : index
    %c210 = arith.constant 210 : index
    %59 = vector.load %arg3[%c0_49, %c0_50, %c210] : memref<1x4x2304xf32, #tpu.memory_space<vmem>>, vector<1x4x14xf32>
    %60 = vector.shape_cast %59 : vector<1x4x14xf32> to vector<4x14xf32>
    %61 = vector.shape_cast %58 : vector<4x14xf32> to vector<1x4x14xf32>
    tpu.vector_store %arg3[%c0_49, %c0_50, %c210], %61 {strides = array<i32>} : memref<1x4x2304xf32, #tpu.memory_space<vmem>>, vector<1x4x14xf32>,
    %c0_51 = arith.constant 0 : index
    %c0_52 = arith.constant 0 : index
    %c192 = arith.constant 192 : index
    %62 = vector.load %arg2[%c0_51, %c0_52, %c192] : memref<1x4x256xf32, #tpu.memory_space<vmem>>, vector<1x4x14xf32>
    %63 = vector.shape_cast %62 : vector<1x4x14xf32> to vector<4x14xf32>
    %c0_53 = arith.constant 0 : index
    %c0_54 = arith.constant 0 : index
    %c226 = arith.constant 226 : index
    %64 = vector.load %arg3[%c0_53, %c0_54, %c226] : memref<1x4x2304xf32, #tpu.memory_space<vmem>>, vector<1x4x14xf32>
    %65 = vector.shape_cast %64 : vector<1x4x14xf32> to vector<4x14xf32>
    %66 = vector.shape_cast %63 : vector<4x14xf32> to vector<1x4x14xf32>
    tpu.vector_store %arg3[%c0_53, %c0_54, %c226], %66 {strides = array<i32>} : memref<1x4x2304xf32, #tpu.memory_space<vmem>>, vector<1x4x14xf32>,
    %c0_55 = arith.constant 0 : index
    %c0_56 = arith.constant 0 : index
    %c208 = arith.constant 208 : index
    %67 = vector.load %arg2[%c0_55, %c0_56, %c208] : memref<1x4x256xf32, #tpu.memory_space<vmem>>, vector<1x4x14xf32>
    %68 = vector.shape_cast %67 : vector<1x4x14xf32> to vector<4x14xf32>
    %c0_57 = arith.constant 0 : index
    %c0_58 = arith.constant 0 : index
    %c242 = arith.constant 242 : index
    %69 = vector.load %arg3[%c0_57, %c0_58, %c242] : memref<1x4x2304xf32, #tpu.memory_space<vmem>>, vector<1x4x14xf32>
    %70 = vector.shape_cast %69 : vector<1x4x14xf32> to vector<4x14xf32>
    %71 = vector.shape_cast %68 : vector<4x14xf32> to vector<1x4x14xf32>
    tpu.vector_store %arg3[%c0_57, %c0_58, %c242], %71 {strides = array<i32>} : memref<1x4x2304xf32, #tpu.memory_space<vmem>>, vector<1x4x14xf32>,
    %c0_59 = arith.constant 0 : index
    %c0_60 = arith.constant 0 : index
    %c0_61 = arith.constant 0 : index
    %72 = vector.load %arg2[%c0_59, %c0_60, %c0_61] : memref<1x4x256xf32, #tpu.memory_space<vmem>>, vector<1x4x16xf32>
    %73 = vector.shape_cast %72 : vector<1x4x16xf32> to vector<4x16xf32>
    %c0_62 = arith.constant 0 : index
    %c0_63 = arith.constant 0 : index
    %c288 = arith.constant 288 : index
    %74 = vector.load %arg3[%c0_62, %c0_63, %c288] : memref<1x4x2304xf32, #tpu.memory_space<vmem>>, vector<1x4x16xf32>
    %75 = vector.shape_cast %74 : vector<1x4x16xf32> to vector<4x16xf32>
    %76 = vector.shape_cast %73 : vector<4x16xf32> to vector<1x4x16xf32>
    tpu.vector_store %arg3[%c0_62, %c0_63, %c288], %76 {strides = array<i32>} : memref<1x4x2304xf32, #tpu.memory_space<vmem>>, vector<1x4x16xf32>,
    %c0_64 = arith.constant 0 : index
    %c0_65 = arith.constant 0 : index
    %c16_66 = arith.constant 16 : index
    %77 = vector.load %arg2[%c0_64, %c0_65, %c16_66] : memref<1x4x256xf32, #tpu.memory_space<vmem>>, vector<1x4x16xf32>
    %78 = vector.shape_cast %77 : vector<1x4x16xf32> to vector<4x16xf32>
    %c0_67 = arith.constant 0 : index
    %c0_68 = arith.constant 0 : index
    %c304 = arith.constant 304 : index
    %79 = vector.load %arg3[%c0_67, %c0_68, %c304] : memref<1x4x2304xf32, #tpu.memory_space<vmem>>, vector<1x4x16xf32>
    %80 = vector.shape_cast %79 : vector<1x4x16xf32> to vector<4x16xf32>
    %81 = vector.shape_cast %78 : vector<4x16xf32> to vector<1x4x16xf32>
    tpu.vector_store %arg3[%c0_67, %c0_68, %c304], %81 {strides = array<i32>} : memref<1x4x2304xf32, #tpu.memory_space<vmem>>, vector<1x4x16xf32>,
    %c0_69 = arith.constant 0 : index
    %c0_70 = arith.constant 0 : index
    %c32_71 = arith.constant 32 : index
    %82 = vector.load %arg2[%c0_69, %c0_70, %c32_71] : memref<1x4x256xf32, #tpu.memory_space<vmem>>, vector<1x4x16xf32>
    %83 = vector.shape_cast %82 : vector<1x4x16xf32> to vector<4x16xf32>
    %c0_72 = arith.constant 0 : index
    %c0_73 = arith.constant 0 : index
    %c320 = arith.constant 320 : index
    %84 = vector.load %arg3[%c0_72, %c0_73, %c320] : memref<1x4x2304xf32, #tpu.memory_space<vmem>>, vector<1x4x16xf32>
    %85 = vector.shape_cast %84 : vector<1x4x16xf32> to vector<4x16xf32>
    %86 = vector.shape_cast %83 : vector<4x16xf32> to vector<1x4x16xf32>
    tpu.vector_store %arg3[%c0_72, %c0_73, %c320], %86 {strides = array<i32>} : memref<1x4x2304xf32, #tpu.memory_space<vmem>>, vector<1x4x16xf32>,
    %c0_74 = arith.constant 0 : index
    %c0_75 = arith.constant 0 : index
    %c48_76 = arith.constant 48 : index
    %87 = vector.load %arg2[%c0_74, %c0_75, %c48_76] : memref<1x4x256xf32, #tpu.memory_space<vmem>>, vector<1x4x16xf32>
    %88 = vector.shape_cast %87 : vector<1x4x16xf32> to vector<4x16xf32>
    %c0_77 = arith.constant 0 : index
    %c0_78 = arith.constant 0 : index
    %c336 = arith.constant 336 : index
    %89 = vector.load %arg3[%c0_77, %c0_78, %c336] : memref<1x4x2304xf32, #tpu.memory_space<vmem>>, vector<1x4x16xf32>
    %90 = vector.shape_cast %89 : vector<1x4x16xf32> to vector<4x16xf32>
    %91 = vector.shape_cast %88 : vector<4x16xf32> to vector<1x4x16xf32>
    tpu.vector_store %arg3[%c0_77, %c0_78, %c336], %91 {strides = array<i32>} : memref<1x4x2304xf32, #tpu.memory_space<vmem>>, vector<1x4x16xf32>,
    %c0_79 = arith.constant 0 : index
    %c0_80 = arith.constant 0 : index
    %c64_81 = arith.constant 64 : index
    %92 = vector.load %arg2[%c0_79, %c0_80, %c64_81] : memref<1x4x256xf32, #tpu.memory_space<vmem>>, vector<1x4x16xf32>
    %93 = vector.shape_cast %92 : vector<1x4x16xf32> to vector<4x16xf32>
    %c0_82 = arith.constant 0 : index
    %c0_83 = arith.constant 0 : index
    %c352 = arith.constant 352 : index
    %94 = vector.load %arg3[%c0_82, %c0_83, %c352] : memref<1x4x2304xf32, #tpu.memory_space<vmem>>, vector<1x4x16xf32>
    %95 = vector.shape_cast %94 : vector<1x4x16xf32> to vector<4x16xf32>
    %96 = vector.shape_cast %93 : vector<4x16xf32> to vector<1x4x16xf32>
    tpu.vector_store %arg3[%c0_82, %c0_83, %c352], %96 {strides = array<i32>} : memref<1x4x2304xf32, #tpu.memory_space<vmem>>, vector<1x4x16xf32>,
    %c0_84 = arith.constant 0 : index
    %c0_85 = arith.constant 0 : index
    %c80_86 = arith.constant 80 : index
    %97 = vector.load %arg2[%c0_84, %c0_85, %c80_86] : memref<1x4x256xf32, #tpu.memory_space<vmem>>, vector<1x4x16xf32>
    %98 = vector.shape_cast %97 : vector<1x4x16xf32> to vector<4x16xf32>
    %c0_87 = arith.constant 0 : index
    %c0_88 = arith.constant 0 : index
    %c368 = arith.constant 368 : index
    %99 = vector.load %arg3[%c0_87, %c0_88, %c368] : memref<1x4x2304xf32, #tpu.memory_space<vmem>>, vector<1x4x16xf32>
    %100 = vector.shape_cast %99 : vector<1x4x16xf32> to vector<4x16xf32>
    %101 = vector.shape_cast %98 : vector<4x16xf32> to vector<1x4x16xf32>
    tpu.vector_store %arg3[%c0_87, %c0_88, %c368], %101 {strides = array<i32>} : memref<1x4x2304xf32, #tpu.memory_space<vmem>>, vector<1x4x16xf32>,
    %c0_89 = arith.constant 0 : index
    %c0_90 = arith.constant 0 : index
    %c96_91 = arith.constant 96 : index
    %102 = vector.load %arg2[%c0_89, %c0_90, %c96_91] : memref<1x4x256xf32, #tpu.memory_space<vmem>>, vector<1x4x16xf32>
    %103 = vector.shape_cast %102 : vector<1x4x16xf32> to vector<4x16xf32>
    %c0_92 = arith.constant 0 : index
    %c0_93 = arith.constant 0 : index
    %c384 = arith.constant 384 : index
    %104 = vector.load %arg3[%c0_92, %c0_93, %c384] : memref<1x4x2304xf32, #tpu.memory_space<vmem>>, vector<1x4x16xf32>
    %105 = vector.shape_cast %104 : vector<1x4x16xf32> to vector<4x16xf32>
    %106 = vector.shape_cast %103 : vector<4x16xf32> to vector<1x4x16xf32>
    tpu.vector_store %arg3[%c0_92, %c0_93, %c384], %106 {strides = array<i32>} : memref<1x4x2304xf32, #tpu.memory_space<vmem>>, vector<1x4x16xf32>,
    %c0_94 = arith.constant 0 : index
    %c0_95 = arith.constant 0 : index
    %c112_96 = arith.constant 112 : index
    %107 = vector.load %arg2[%c0_94, %c0_95, %c112_96] : memref<1x4x256xf32, #tpu.memory_space<vmem>>, vector<1x4x16xf32>
    %108 = vector.shape_cast %107 : vector<1x4x16xf32> to vector<4x16xf32>
    %c0_97 = arith.constant 0 : index
    %c0_98 = arith.constant 0 : index
    %c400 = arith.constant 400 : index
    %109 = vector.load %arg3[%c0_97, %c0_98, %c400] : memref<1x4x2304xf32, #tpu.memory_space<vmem>>, vector<1x4x16xf32>
    %110 = vector.shape_cast %109 : vector<1x4x16xf32> to vector<4x16xf32>
    %111 = vector.shape_cast %108 : vector<4x16xf32> to vector<1x4x16xf32>
    tpu.vector_store %arg3[%c0_97, %c0_98, %c400], %111 {strides = array<i32>} : memref<1x4x2304xf32, #tpu.memory_space<vmem>>, vector<1x4x16xf32>,
    %c0_99 = arith.constant 0 : index
    %c0_100 = arith.constant 0 : index
    %c128_101 = arith.constant 128 : index
    %112 = vector.load %arg2[%c0_99, %c0_100, %c128_101] : memref<1x4x256xf32, #tpu.memory_space<vmem>>, vector<1x4x16xf32>
    %113 = vector.shape_cast %112 : vector<1x4x16xf32> to vector<4x16xf32>
    %c0_102 = arith.constant 0 : index
    %c0_103 = arith.constant 0 : index
    %c416 = arith.constant 416 : index
    %114 = vector.load %arg3[%c0_102, %c0_103, %c416] : memref<1x4x2304xf32, #tpu.memory_space<vmem>>, vector<1x4x16xf32>
    %115 = vector.shape_cast %114 : vector<1x4x16xf32> to vector<4x16xf32>
    %116 = vector.shape_cast %113 : vector<4x16xf32> to vector<1x4x16xf32>
    tpu.vector_store %arg3[%c0_102, %c0_103, %c416], %116 {strides = array<i32>} : memref<1x4x2304xf32, #tpu.memory_space<vmem>>, vector<1x4x16xf32>,
    %c0_104 = arith.constant 0 : index
    %c0_105 = arith.constant 0 : index
    %c144_106 = arith.constant 144 : index
    %117 = vector.load %arg2[%c0_104, %c0_105, %c144_106] : memref<1x4x256xf32, #tpu.memory_space<vmem>>, vector<1x4x16xf32>
    %118 = vector.shape_cast %117 : vector<1x4x16xf32> to vector<4x16xf32>
    %c0_107 = arith.constant 0 : index
    %c0_108 = arith.constant 0 : index
    %c432 = arith.constant 432 : index
    %119 = vector.load %arg3[%c0_107, %c0_108, %c432] : memref<1x4x2304xf32, #tpu.memory_space<vmem>>, vector<1x4x16xf32>
    %120 = vector.shape_cast %119 : vector<1x4x16xf32> to vector<4x16xf32>
    %121 = vector.shape_cast %118 : vector<4x16xf32> to vector<1x4x16xf32>
    tpu.vector_store %arg3[%c0_107, %c0_108, %c432], %121 {strides = array<i32>} : memref<1x4x2304xf32, #tpu.memory_space<vmem>>, vector<1x4x16xf32>,
    %c0_109 = arith.constant 0 : index
    %c0_110 = arith.constant 0 : index
    %c160_111 = arith.constant 160 : index
    %122 = vector.load %arg2[%c0_109, %c0_110, %c160_111] : memref<1x4x256xf32, #tpu.memory_space<vmem>>, vector<1x4x16xf32>
    %123 = vector.shape_cast %122 : vector<1x4x16xf32> to vector<4x16xf32>
    %c0_112 = arith.constant 0 : index
    %c0_113 = arith.constant 0 : index
    %c448 = arith.constant 448 : index
    %124 = vector.load %arg3[%c0_112, %c0_113, %c448] : memref<1x4x2304xf32, #tpu.memory_space<vmem>>, vector<1x4x16xf32>
    %125 = vector.shape_cast %124 : vector<1x4x16xf32> to vector<4x16xf32>
    %126 = vector.shape_cast %123 : vector<4x16xf32> to vector<1x4x16xf32>
    tpu.vector_store %arg3[%c0_112, %c0_113, %c448], %126 {strides = array<i32>} : memref<1x4x2304xf32, #tpu.memory_space<vmem>>, vector<1x4x16xf32>,
    %c0_114 = arith.constant 0 : index
    %c0_115 = arith.constant 0 : index
    %c176_116 = arith.constant 176 : index
    %127 = vector.load %arg2[%c0_114, %c0_115, %c176_116] : memref<1x4x256xf32, #tpu.memory_space<vmem>>, vector<1x4x16xf32>
    %128 = vector.shape_cast %127 : vector<1x4x16xf32> to vector<4x16xf32>
    %c0_117 = arith.constant 0 : index
    %c0_118 = arith.constant 0 : index
    %c464 = arith.constant 464 : index
    %129 = vector.load %arg3[%c0_117, %c0_118, %c464] : memref<1x4x2304xf32, #tpu.memory_space<vmem>>, vector<1x4x16xf32>
    %130 = vector.shape_cast %129 : vector<1x4x16xf32> to vector<4x16xf32>
    %131 = vector.shape_cast %128 : vector<4x16xf32> to vector<1x4x16xf32>
    tpu.vector_store %arg3[%c0_117, %c0_118, %c464], %131 {strides = array<i32>} : memref<1x4x2304xf32, #tpu.memory_space<vmem>>, vector<1x4x16xf32>,
    %c0_119 = arith.constant 0 : index
    %c0_120 = arith.constant 0 : index
    %c192_121 = arith.constant 192 : index
    %132 = vector.load %arg2[%c0_119, %c0_120, %c192_121] : memref<1x4x256xf32, #tpu.memory_space<vmem>>, vector<1x4x16xf32>
    %133 = vector.shape_cast %132 : vector<1x4x16xf32> to vector<4x16xf32>
    %c0_122 = arith.constant 0 : index
    %c0_123 = arith.constant 0 : index
    %c480 = arith.constant 480 : index
    %134 = vector.load %arg3[%c0_122, %c0_123, %c480] : memref<1x4x2304xf32, #tpu.memory_space<vmem>>, vector<1x4x16xf32>
    %135 = vector.shape_cast %134 : vector<1x4x16xf32> to vector<4x16xf32>
    %136 = vector.shape_cast %133 : vector<4x16xf32> to vector<1x4x16xf32>
    tpu.vector_store %arg3[%c0_122, %c0_123, %c480], %136 {strides = array<i32>} : memref<1x4x2304xf32, #tpu.memory_space<vmem>>, vector<1x4x16xf32>,
    %c0_124 = arith.constant 0 : index
    %c0_125 = arith.constant 0 : index
    %c208_126 = arith.constant 208 : index
    %137 = vector.load %arg2[%c0_124, %c0_125, %c208_126] : memref<1x4x256xf32, #tpu.memory_space<vmem>>, vector<1x4x16xf32>
    %138 = vector.shape_cast %137 : vector<1x4x16xf32> to vector<4x16xf32>
    %c0_127 = arith.constant 0 : index
    %c0_128 = arith.constant 0 : index
    %c496 = arith.constant 496 : index
    %139 = vector.load %arg3[%c0_127, %c0_128, %c496] : memref<1x4x2304xf32, #tpu.memory_space<vmem>>, vector<1x4x16xf32>
    %140 = vector.shape_cast %139 : vector<1x4x16xf32> to vector<4x16xf32>
    %141 = vector.shape_cast %138 : vector<4x16xf32> to vector<1x4x16xf32>
    tpu.vector_store %arg3[%c0_127, %c0_128, %c496], %141 {strides = array<i32>} : memref<1x4x2304xf32, #tpu.memory_space<vmem>>, vector<1x4x16xf32>,
    %c0_129 = arith.constant 0 : index
    %c0_130 = arith.constant 0 : index
    %c2 = arith.constant 2 : index
    %142 = vector.load %arg2[%c0_129, %c0_130, %c2] : memref<1x4x256xf32, #tpu.memory_space<vmem>>, vector<1x4x14xf32>
    %143 = vector.shape_cast %142 : vector<1x4x14xf32> to vector<4x14xf32>
    %c0_131 = arith.constant 0 : index
    %c0_132 = arith.constant 0 : index
    %c544 = arith.constant 544 : index
    %144 = vector.load %arg3[%c0_131, %c0_132, %c544] : memref<1x4x2304xf32, #tpu.memory_space<vmem>>, vector<1x4x14xf32>
    %145 = vector.shape_cast %144 : vector<1x4x14xf32> to vector<4x14xf32>
    %146 = vector.shape_cast %143 : vector<4x14xf32> to vector<1x4x14xf32>
    tpu.vector_store %arg3[%c0_131, %c0_132, %c544], %146 {strides = array<i32>} : memref<1x4x2304xf32, #tpu.memory_space<vmem>>, vector<1x4x14xf32>,
    %c0_133 = arith.constant 0 : index
    %c0_134 = arith.constant 0 : index
    %c18 = arith.constant 18 : index
    %147 = vector.load %arg2[%c0_133, %c0_134, %c18] : memref<1x4x256xf32, #tpu.memory_space<vmem>>, vector<1x4x14xf32>
    %148 = vector.shape_cast %147 : vector<1x4x14xf32> to vector<4x14xf32>
    %c0_135 = arith.constant 0 : index
    %c0_136 = arith.constant 0 : index
    %c560 = arith.constant 560 : index
    %149 = vector.load %arg3[%c0_135, %c0_136, %c560] : memref<1x4x2304xf32, #tpu.memory_space<vmem>>, vector<1x4x14xf32>
    %150 = vector.shape_cast %149 : vector<1x4x14xf32> to vector<4x14xf32>
    %151 = vector.shape_cast %148 : vector<4x14xf32> to vector<1x4x14xf32>
    tpu.vector_store %arg3[%c0_135, %c0_136, %c560], %151 {strides = array<i32>} : memref<1x4x2304xf32, #tpu.memory_space<vmem>>, vector<1x4x14xf32>,
    %c0_137 = arith.constant 0 : index
    %c0_138 = arith.constant 0 : index
    %c34_139 = arith.constant 34 : index
    %152 = vector.load %arg2[%c0_137, %c0_138, %c34_139] : memref<1x4x256xf32, #tpu.memory_space<vmem>>, vector<1x4x14xf32>
    %153 = vector.shape_cast %152 : vector<1x4x14xf32> to vector<4x14xf32>
    %c0_140 = arith.constant 0 : index
    %c0_141 = arith.constant 0 : index
    %c576 = arith.constant 576 : index
    %154 = vector.load %arg3[%c0_140, %c0_141, %c576] : memref<1x4x2304xf32, #tpu.memory_space<vmem>>, vector<1x4x14xf32>
    %155 = vector.shape_cast %154 : vector<1x4x14xf32> to vector<4x14xf32>
    %156 = vector.shape_cast %153 : vector<4x14xf32> to vector<1x4x14xf32>
    tpu.vector_store %arg3[%c0_140, %c0_141, %c576], %156 {strides = array<i32>} : memref<1x4x2304xf32, #tpu.memory_space<vmem>>, vector<1x4x14xf32>,
    %c0_142 = arith.constant 0 : index
    %c0_143 = arith.constant 0 : index
    %c50_144 = arith.constant 50 : index
    %157 = vector.load %arg2[%c0_142, %c0_143, %c50_144] : memref<1x4x256xf32, #tpu.memory_space<vmem>>, vector<1x4x14xf32>
    %158 = vector.shape_cast %157 : vector<1x4x14xf32> to vector<4x14xf32>
    %c0_145 = arith.constant 0 : index
    %c0_146 = arith.constant 0 : index
    %c592 = arith.constant 592 : index
    %159 = vector.load %arg3[%c0_145, %c0_146, %c592] : memref<1x4x2304xf32, #tpu.memory_space<vmem>>, vector<1x4x14xf32>
    %160 = vector.shape_cast %159 : vector<1x4x14xf32> to vector<4x14xf32>
    %161 = vector.shape_cast %158 : vector<4x14xf32> to vector<1x4x14xf32>
    tpu.vector_store %arg3[%c0_145, %c0_146, %c592], %161 {strides = array<i32>} : memref<1x4x2304xf32, #tpu.memory_space<vmem>>, vector<1x4x14xf32>,
    %c0_147 = arith.constant 0 : index
    %c0_148 = arith.constant 0 : index
    %c66_149 = arith.constant 66 : index
    %162 = vector.load %arg2[%c0_147, %c0_148, %c66_149] : memref<1x4x256xf32, #tpu.memory_space<vmem>>, vector<1x4x14xf32>
    %163 = vector.shape_cast %162 : vector<1x4x14xf32> to vector<4x14xf32>
    %c0_150 = arith.constant 0 : index
    %c0_151 = arith.constant 0 : index
    %c608 = arith.constant 608 : index
    %164 = vector.load %arg3[%c0_150, %c0_151, %c608] : memref<1x4x2304xf32, #tpu.memory_space<vmem>>, vector<1x4x14xf32>
    %165 = vector.shape_cast %164 : vector<1x4x14xf32> to vector<4x14xf32>
    %166 = vector.shape_cast %163 : vector<4x14xf32> to vector<1x4x14xf32>
    tpu.vector_store %arg3[%c0_150, %c0_151, %c608], %166 {strides = array<i32>} : memref<1x4x2304xf32, #tpu.memory_space<vmem>>, vector<1x4x14xf32>,
    %c0_152 = arith.constant 0 : index
    %c0_153 = arith.constant 0 : index
    %c82_154 = arith.constant 82 : index
    %167 = vector.load %arg2[%c0_152, %c0_153, %c82_154] : memref<1x4x256xf32, #tpu.memory_space<vmem>>, vector<1x4x14xf32>
    %168 = vector.shape_cast %167 : vector<1x4x14xf32> to vector<4x14xf32>
    %c0_155 = arith.constant 0 : index
    %c0_156 = arith.constant 0 : index
    %c624 = arith.constant 624 : index
    %169 = vector.load %arg3[%c0_155, %c0_156, %c624] : memref<1x4x2304xf32, #tpu.memory_space<vmem>>, vector<1x4x14xf32>
    %170 = vector.shape_cast %169 : vector<1x4x14xf32> to vector<4x14xf32>
    %171 = vector.shape_cast %168 : vector<4x14xf32> to vector<1x4x14xf32>
    tpu.vector_store %arg3[%c0_155, %c0_156, %c624], %171 {strides = array<i32>} : memref<1x4x2304xf32, #tpu.memory_space<vmem>>, vector<1x4x14xf32>,
    %c0_157 = arith.constant 0 : index
    %c0_158 = arith.constant 0 : index
    %c98_159 = arith.constant 98 : index
    %172 = vector.load %arg2[%c0_157, %c0_158, %c98_159] : memref<1x4x256xf32, #tpu.memory_space<vmem>>, vector<1x4x14xf32>
    %173 = vector.shape_cast %172 : vector<1x4x14xf32> to vector<4x14xf32>
    %c0_160 = arith.constant 0 : index
    %c0_161 = arith.constant 0 : index
    %c640 = arith.constant 640 : index
    %174 = vector.load %arg3[%c0_160, %c0_161, %c640] : memref<1x4x2304xf32, #tpu.memory_space<vmem>>, vector<1x4x14xf32>
    %175 = vector.shape_cast %174 : vector<1x4x14xf32> to vector<4x14xf32>
    %176 = vector.shape_cast %173 : vector<4x14xf32> to vector<1x4x14xf32>
    tpu.vector_store %arg3[%c0_160, %c0_161, %c640], %176 {strides = array<i32>} : memref<1x4x2304xf32, #tpu.memory_space<vmem>>, vector<1x4x14xf32>,
    %c0_162 = arith.constant 0 : index
    %c0_163 = arith.constant 0 : index
    %c114_164 = arith.constant 114 : index
    %177 = vector.load %arg2[%c0_162, %c0_163, %c114_164] : memref<1x4x256xf32, #tpu.memory_space<vmem>>, vector<1x4x14xf32>
    %178 = vector.shape_cast %177 : vector<1x4x14xf32> to vector<4x14xf32>
    %c0_165 = arith.constant 0 : index
    %c0_166 = arith.constant 0 : index
    %c656 = arith.constant 656 : index
    %179 = vector.load %arg3[%c0_165, %c0_166, %c656] : memref<1x4x2304xf32, #tpu.memory_space<vmem>>, vector<1x4x14xf32>
    %180 = vector.shape_cast %179 : vector<1x4x14xf32> to vector<4x14xf32>
    %181 = vector.shape_cast %178 : vector<4x14xf32> to vector<1x4x14xf32>
    tpu.vector_store %arg3[%c0_165, %c0_166, %c656], %181 {strides = array<i32>} : memref<1x4x2304xf32, #tpu.memory_space<vmem>>, vector<1x4x14xf32>,
    %c0_167 = arith.constant 0 : index
    %c0_168 = arith.constant 0 : index
    %c130_169 = arith.constant 130 : index
    %182 = vector.load %arg2[%c0_167, %c0_168, %c130_169] : memref<1x4x256xf32, #tpu.memory_space<vmem>>, vector<1x4x14xf32>
    %183 = vector.shape_cast %182 : vector<1x4x14xf32> to vector<4x14xf32>
    %c0_170 = arith.constant 0 : index
    %c0_171 = arith.constant 0 : index
    %c672 = arith.constant 672 : index
    %184 = vector.load %arg3[%c0_170, %c0_171, %c672] : memref<1x4x2304xf32, #tpu.memory_space<vmem>>, vector<1x4x14xf32>
    %185 = vector.shape_cast %184 : vector<1x4x14xf32> to vector<4x14xf32>
    %186 = vector.shape_cast %183 : vector<4x14xf32> to vector<1x4x14xf32>
    tpu.vector_store %arg3[%c0_170, %c0_171, %c672], %186 {strides = array<i32>} : memref<1x4x2304xf32, #tpu.memory_space<vmem>>, vector<1x4x14xf32>,
    %c0_172 = arith.constant 0 : index
    %c0_173 = arith.constant 0 : index
    %c146_174 = arith.constant 146 : index
    %187 = vector.load %arg2[%c0_172, %c0_173, %c146_174] : memref<1x4x256xf32, #tpu.memory_space<vmem>>, vector<1x4x14xf32>
    %188 = vector.shape_cast %187 : vector<1x4x14xf32> to vector<4x14xf32>
    %c0_175 = arith.constant 0 : index
    %c0_176 = arith.constant 0 : index
    %c688 = arith.constant 688 : index
    %189 = vector.load %arg3[%c0_175, %c0_176, %c688] : memref<1x4x2304xf32, #tpu.memory_space<vmem>>, vector<1x4x14xf32>
    %190 = vector.shape_cast %189 : vector<1x4x14xf32> to vector<4x14xf32>
    %191 = vector.shape_cast %188 : vector<4x14xf32> to vector<1x4x14xf32>
    tpu.vector_store %arg3[%c0_175, %c0_176, %c688], %191 {strides = array<i32>} : memref<1x4x2304xf32, #tpu.memory_space<vmem>>, vector<1x4x14xf32>,
    %c0_177 = arith.constant 0 : index
    %c0_178 = arith.constant 0 : index
    %c162_179 = arith.constant 162 : index
    %192 = vector.load %arg2[%c0_177, %c0_178, %c162_179] : memref<1x4x256xf32, #tpu.memory_space<vmem>>, vector<1x4x14xf32>
    %193 = vector.shape_cast %192 : vector<1x4x14xf32> to vector<4x14xf32>
    %c0_180 = arith.constant 0 : index
    %c0_181 = arith.constant 0 : index
    %c704 = arith.constant 704 : index
    %194 = vector.load %arg3[%c0_180, %c0_181, %c704] : memref<1x4x2304xf32, #tpu.memory_space<vmem>>, vector<1x4x14xf32>
    %195 = vector.shape_cast %194 : vector<1x4x14xf32> to vector<4x14xf32>
    %196 = vector.shape_cast %193 : vector<4x14xf32> to vector<1x4x14xf32>
    tpu.vector_store %arg3[%c0_180, %c0_181, %c704], %196 {strides = array<i32>} : memref<1x4x2304xf32, #tpu.memory_space<vmem>>, vector<1x4x14xf32>,
    %c0_182 = arith.constant 0 : index
    %c0_183 = arith.constant 0 : index
    %c178_184 = arith.constant 178 : index
    %197 = vector.load %arg2[%c0_182, %c0_183, %c178_184] : memref<1x4x256xf32, #tpu.memory_space<vmem>>, vector<1x4x14xf32>
    %198 = vector.shape_cast %197 : vector<1x4x14xf32> to vector<4x14xf32>
    %c0_185 = arith.constant 0 : index
    %c0_186 = arith.constant 0 : index
    %c720 = arith.constant 720 : index
    %199 = vector.load %arg3[%c0_185, %c0_186, %c720] : memref<1x4x2304xf32, #tpu.memory_space<vmem>>, vector<1x4x14xf32>
    %200 = vector.shape_cast %199 : vector<1x4x14xf32> to vector<4x14xf32>
    %201 = vector.shape_cast %198 : vector<4x14xf32> to vector<1x4x14xf32>
    tpu.vector_store %arg3[%c0_185, %c0_186, %c720], %201 {strides = array<i32>} : memref<1x4x2304xf32, #tpu.memory_space<vmem>>, vector<1x4x14xf32>,
    %c0_187 = arith.constant 0 : index
    %c0_188 = arith.constant 0 : index
    %c194_189 = arith.constant 194 : index
    %202 = vector.load %arg2[%c0_187, %c0_188, %c194_189] : memref<1x4x256xf32, #tpu.memory_space<vmem>>, vector<1x4x14xf32>
    %203 = vector.shape_cast %202 : vector<1x4x14xf32> to vector<4x14xf32>
    %c0_190 = arith.constant 0 : index
    %c0_191 = arith.constant 0 : index
    %c736 = arith.constant 736 : index
    %204 = vector.load %arg3[%c0_190, %c0_191, %c736] : memref<1x4x2304xf32, #tpu.memory_space<vmem>>, vector<1x4x14xf32>
    %205 = vector.shape_cast %204 : vector<1x4x14xf32> to vector<4x14xf32>
    %206 = vector.shape_cast %203 : vector<4x14xf32> to vector<1x4x14xf32>
    tpu.vector_store %arg3[%c0_190, %c0_191, %c736], %206 {strides = array<i32>} : memref<1x4x2304xf32, #tpu.memory_space<vmem>>, vector<1x4x14xf32>,
    %c0_192 = arith.constant 0 : index
    %c0_193 = arith.constant 0 : index
    %c210_194 = arith.constant 210 : index
    %207 = vector.load %arg2[%c0_192, %c0_193, %c210_194] : memref<1x4x256xf32, #tpu.memory_space<vmem>>, vector<1x4x14xf32>
    %208 = vector.shape_cast %207 : vector<1x4x14xf32> to vector<4x14xf32>
    %c0_195 = arith.constant 0 : index
    %c0_196 = arith.constant 0 : index
    %c752 = arith.constant 752 : index
    %209 = vector.load %arg3[%c0_195, %c0_196, %c752] : memref<1x4x2304xf32, #tpu.memory_space<vmem>>, vector<1x4x14xf32>
    %210 = vector.shape_cast %209 : vector<1x4x14xf32> to vector<4x14xf32>
    %211 = vector.shape_cast %208 : vector<4x14xf32> to vector<1x4x14xf32>
    tpu.vector_store %arg3[%c0_195, %c0_196, %c752], %211 {strides = array<i32>} : memref<1x4x2304xf32, #tpu.memory_space<vmem>>, vector<1x4x14xf32>,
    %c0_197 = arith.constant 0 : index
    %c0_198 = arith.constant 0 : index
    %c0_199 = arith.constant 0 : index
    %212 = vector.load %arg2[%c0_197, %c0_198, %c0_199] : memref<1x4x256xf32, #tpu.memory_space<vmem>>, vector<1x4x14xf32>
    %213 = vector.shape_cast %212 : vector<1x4x14xf32> to vector<4x14xf32>
    %c0_200 = arith.constant 0 : index
    %c0_201 = arith.constant 0 : index
    %c770 = arith.constant 770 : index
    %214 = vector.load %arg3[%c0_200, %c0_201, %c770] : memref<1x4x2304xf32, #tpu.memory_space<vmem>>, vector<1x4x14xf32>
    %215 = vector.shape_cast %214 : vector<1x4x14xf32> to vector<4x14xf32>
    %216 = vector.shape_cast %213 : vector<4x14xf32> to vector<1x4x14xf32>
    tpu.vector_store %arg3[%c0_200, %c0_201, %c770], %216 {strides = array<i32>} : memref<1x4x2304xf32, #tpu.memory_space<vmem>>, vector<1x4x14xf32>,
    %c0_202 = arith.constant 0 : index
    %c0_203 = arith.constant 0 : index
    %c16_204 = arith.constant 16 : index
    %217 = vector.load %arg2[%c0_202, %c0_203, %c16_204] : memref<1x4x256xf32, #tpu.memory_space<vmem>>, vector<1x4x14xf32>
    %218 = vector.shape_cast %217 : vector<1x4x14xf32> to vector<4x14xf32>
    %c0_205 = arith.constant 0 : index
    %c0_206 = arith.constant 0 : index
    %c786 = arith.constant 786 : index
    %219 = vector.load %arg3[%c0_205, %c0_206, %c786] : memref<1x4x2304xf32, #tpu.memory_space<vmem>>, vector<1x4x14xf32>
    %220 = vector.shape_cast %219 : vector<1x4x14xf32> to vector<4x14xf32>
    %221 = vector.shape_cast %218 : vector<4x14xf32> to vector<1x4x14xf32>
    tpu.vector_store %arg3[%c0_205, %c0_206, %c786], %221 {strides = array<i32>} : memref<1x4x2304xf32, #tpu.memory_space<vmem>>, vector<1x4x14xf32>,
    %c0_207 = arith.constant 0 : index
    %c0_208 = arith.constant 0 : index
    %c32_209 = arith.constant 32 : index
    %222 = vector.load %arg2[%c0_207, %c0_208, %c32_209] : memref<1x4x256xf32, #tpu.memory_space<vmem>>, vector<1x4x14xf32>
    %223 = vector.shape_cast %222 : vector<1x4x14xf32> to vector<4x14xf32>
    %c0_210 = arith.constant 0 : index
    %c0_211 = arith.constant 0 : index
    %c802 = arith.constant 802 : index
    %224 = vector.load %arg3[%c0_210, %c0_211, %c802] : memref<1x4x2304xf32, #tpu.memory_space<vmem>>, vector<1x4x14xf32>
    %225 = vector.shape_cast %224 : vector<1x4x14xf32> to vector<4x14xf32>
    %226 = vector.shape_cast %223 : vector<4x14xf32> to vector<1x4x14xf32>
    tpu.vector_store %arg3[%c0_210, %c0_211, %c802], %226 {strides = array<i32>} : memref<1x4x2304xf32, #tpu.memory_space<vmem>>, vector<1x4x14xf32>,
    %c0_212 = arith.constant 0 : index
    %c0_213 = arith.constant 0 : index
    %c48_214 = arith.constant 48 : index
    %227 = vector.load %arg2[%c0_212, %c0_213, %c48_214] : memref<1x4x256xf32, #tpu.memory_space<vmem>>, vector<1x4x14xf32>
    %228 = vector.shape_cast %227 : vector<1x4x14xf32> to vector<4x14xf32>
    %c0_215 = arith.constant 0 : index
    %c0_216 = arith.constant 0 : index
    %c818 = arith.constant 818 : index
    %229 = vector.load %arg3[%c0_215, %c0_216, %c818] : memref<1x4x2304xf32, #tpu.memory_space<vmem>>, vector<1x4x14xf32>
    %230 = vector.shape_cast %229 : vector<1x4x14xf32> to vector<4x14xf32>
    %231 = vector.shape_cast %228 : vector<4x14xf32> to vector<1x4x14xf32>
    tpu.vector_store %arg3[%c0_215, %c0_216, %c818], %231 {strides = array<i32>} : memref<1x4x2304xf32, #tpu.memory_space<vmem>>, vector<1x4x14xf32>,
    %c0_217 = arith.constant 0 : index
    %c0_218 = arith.constant 0 : index
    %c64_219 = arith.constant 64 : index
    %232 = vector.load %arg2[%c0_217, %c0_218, %c64_219] : memref<1x4x256xf32, #tpu.memory_space<vmem>>, vector<1x4x14xf32>
    %233 = vector.shape_cast %232 : vector<1x4x14xf32> to vector<4x14xf32>
    %c0_220 = arith.constant 0 : index
    %c0_221 = arith.constant 0 : index
    %c834 = arith.constant 834 : index
    %234 = vector.load %arg3[%c0_220, %c0_221, %c834] : memref<1x4x2304xf32, #tpu.memory_space<vmem>>, vector<1x4x14xf32>
    %235 = vector.shape_cast %234 : vector<1x4x14xf32> to vector<4x14xf32>
    %236 = vector.shape_cast %233 : vector<4x14xf32> to vector<1x4x14xf32>
    tpu.vector_store %arg3[%c0_220, %c0_221, %c834], %236 {strides = array<i32>} : memref<1x4x2304xf32, #tpu.memory_space<vmem>>, vector<1x4x14xf32>,
    %c0_222 = arith.constant 0 : index
    %c0_223 = arith.constant 0 : index
    %c80_224 = arith.constant 80 : index
    %237 = vector.load %arg2[%c0_222, %c0_223, %c80_224] : memref<1x4x256xf32, #tpu.memory_space<vmem>>, vector<1x4x14xf32>
    %238 = vector.shape_cast %237 : vector<1x4x14xf32> to vector<4x14xf32>
    %c0_225 = arith.constant 0 : index
    %c0_226 = arith.constant 0 : index
    %c850 = arith.constant 850 : index
    %239 = vector.load %arg3[%c0_225, %c0_226, %c850] : memref<1x4x2304xf32, #tpu.memory_space<vmem>>, vector<1x4x14xf32>
    %240 = vector.shape_cast %239 : vector<1x4x14xf32> to vector<4x14xf32>
    %241 = vector.shape_cast %238 : vector<4x14xf32> to vector<1x4x14xf32>
    tpu.vector_store %arg3[%c0_225, %c0_226, %c850], %241 {strides = array<i32>} : memref<1x4x2304xf32, #tpu.memory_space<vmem>>, vector<1x4x14xf32>,
    %c0_227 = arith.constant 0 : index
    %c0_228 = arith.constant 0 : index
    %c96_229 = arith.constant 96 : index
    %242 = vector.load %arg2[%c0_227, %c0_228, %c96_229] : memref<1x4x256xf32, #tpu.memory_space<vmem>>, vector<1x4x14xf32>
    %243 = vector.shape_cast %242 : vector<1x4x14xf32> to vector<4x14xf32>
    %c0_230 = arith.constant 0 : index
    %c0_231 = arith.constant 0 : index
    %c866 = arith.constant 866 : index
    %244 = vector.load %arg3[%c0_230, %c0_231, %c866] : memref<1x4x2304xf32, #tpu.memory_space<vmem>>, vector<1x4x14xf32>
    %245 = vector.shape_cast %244 : vector<1x4x14xf32> to vector<4x14xf32>
    %246 = vector.shape_cast %243 : vector<4x14xf32> to vector<1x4x14xf32>
    tpu.vector_store %arg3[%c0_230, %c0_231, %c866], %246 {strides = array<i32>} : memref<1x4x2304xf32, #tpu.memory_space<vmem>>, vector<1x4x14xf32>,
    %c0_232 = arith.constant 0 : index
    %c0_233 = arith.constant 0 : index
    %c112_234 = arith.constant 112 : index
    %247 = vector.load %arg2[%c0_232, %c0_233, %c112_234] : memref<1x4x256xf32, #tpu.memory_space<vmem>>, vector<1x4x14xf32>
    %248 = vector.shape_cast %247 : vector<1x4x14xf32> to vector<4x14xf32>
    %c0_235 = arith.constant 0 : index
    %c0_236 = arith.constant 0 : index
    %c882 = arith.constant 882 : index
    %249 = vector.load %arg3[%c0_235, %c0_236, %c882] : memref<1x4x2304xf32, #tpu.memory_space<vmem>>, vector<1x4x14xf32>
    %250 = vector.shape_cast %249 : vector<1x4x14xf32> to vector<4x14xf32>
    %251 = vector.shape_cast %248 : vector<4x14xf32> to vector<1x4x14xf32>
    tpu.vector_store %arg3[%c0_235, %c0_236, %c882], %251 {strides = array<i32>} : memref<1x4x2304xf32, #tpu.memory_space<vmem>>, vector<1x4x14xf32>,
    %c0_237 = arith.constant 0 : index
    %c0_238 = arith.constant 0 : index
    %c128_239 = arith.constant 128 : index
    %252 = vector.load %arg2[%c0_237, %c0_238, %c128_239] : memref<1x4x256xf32, #tpu.memory_space<vmem>>, vector<1x4x14xf32>
    %253 = vector.shape_cast %252 : vector<1x4x14xf32> to vector<4x14xf32>
    %c0_240 = arith.constant 0 : index
    %c0_241 = arith.constant 0 : index
    %c898 = arith.constant 898 : index
    %254 = vector.load %arg3[%c0_240, %c0_241, %c898] : memref<1x4x2304xf32, #tpu.memory_space<vmem>>, vector<1x4x14xf32>
    %255 = vector.shape_cast %254 : vector<1x4x14xf32> to vector<4x14xf32>
    %256 = vector.shape_cast %253 : vector<4x14xf32> to vector<1x4x14xf32>
    tpu.vector_store %arg3[%c0_240, %c0_241, %c898], %256 {strides = array<i32>} : memref<1x4x2304xf32, #tpu.memory_space<vmem>>, vector<1x4x14xf32>,
    %c0_242 = arith.constant 0 : index
    %c0_243 = arith.constant 0 : index
    %c144_244 = arith.constant 144 : index
    %257 = vector.load %arg2[%c0_242, %c0_243, %c144_244] : memref<1x4x256xf32, #tpu.memory_space<vmem>>, vector<1x4x14xf32>
    %258 = vector.shape_cast %257 : vector<1x4x14xf32> to vector<4x14xf32>
    %c0_245 = arith.constant 0 : index
    %c0_246 = arith.constant 0 : index
    %c914 = arith.constant 914 : index
    %259 = vector.load %arg3[%c0_245, %c0_246, %c914] : memref<1x4x2304xf32, #tpu.memory_space<vmem>>, vector<1x4x14xf32>
    %260 = vector.shape_cast %259 : vector<1x4x14xf32> to vector<4x14xf32>
    %261 = vector.shape_cast %258 : vector<4x14xf32> to vector<1x4x14xf32>
    tpu.vector_store %arg3[%c0_245, %c0_246, %c914], %261 {strides = array<i32>} : memref<1x4x2304xf32, #tpu.memory_space<vmem>>, vector<1x4x14xf32>,
    %c0_247 = arith.constant 0 : index
    %c0_248 = arith.constant 0 : index
    %c160_249 = arith.constant 160 : index
    %262 = vector.load %arg2[%c0_247, %c0_248, %c160_249] : memref<1x4x256xf32, #tpu.memory_space<vmem>>, vector<1x4x14xf32>
    %263 = vector.shape_cast %262 : vector<1x4x14xf32> to vector<4x14xf32>
    %c0_250 = arith.constant 0 : index
    %c0_251 = arith.constant 0 : index
    %c930 = arith.constant 930 : index
    %264 = vector.load %arg3[%c0_250, %c0_251, %c930] : memref<1x4x2304xf32, #tpu.memory_space<vmem>>, vector<1x4x14xf32>
    %265 = vector.shape_cast %264 : vector<1x4x14xf32> to vector<4x14xf32>
    %266 = vector.shape_cast %263 : vector<4x14xf32> to vector<1x4x14xf32>
    tpu.vector_store %arg3[%c0_250, %c0_251, %c930], %266 {strides = array<i32>} : memref<1x4x2304xf32, #tpu.memory_space<vmem>>, vector<1x4x14xf32>,
    %c0_252 = arith.constant 0 : index
    %c0_253 = arith.constant 0 : index
    %c176_254 = arith.constant 176 : index
    %267 = vector.load %arg2[%c0_252, %c0_253, %c176_254] : memref<1x4x256xf32, #tpu.memory_space<vmem>>, vector<1x4x14xf32>
    %268 = vector.shape_cast %267 : vector<1x4x14xf32> to vector<4x14xf32>
    %c0_255 = arith.constant 0 : index
    %c0_256 = arith.constant 0 : index
    %c946 = arith.constant 946 : index
    %269 = vector.load %arg3[%c0_255, %c0_256, %c946] : memref<1x4x2304xf32, #tpu.memory_space<vmem>>, vector<1x4x14xf32>
    %270 = vector.shape_cast %269 : vector<1x4x14xf32> to vector<4x14xf32>
    %271 = vector.shape_cast %268 : vector<4x14xf32> to vector<1x4x14xf32>
    tpu.vector_store %arg3[%c0_255, %c0_256, %c946], %271 {strides = array<i32>} : memref<1x4x2304xf32, #tpu.memory_space<vmem>>, vector<1x4x14xf32>,
    %c0_257 = arith.constant 0 : index
    %c0_258 = arith.constant 0 : index
    %c192_259 = arith.constant 192 : index
    %272 = vector.load %arg2[%c0_257, %c0_258, %c192_259] : memref<1x4x256xf32, #tpu.memory_space<vmem>>, vector<1x4x14xf32>
    %273 = vector.shape_cast %272 : vector<1x4x14xf32> to vector<4x14xf32>
    %c0_260 = arith.constant 0 : index
    %c0_261 = arith.constant 0 : index
    %c962 = arith.constant 962 : index
    %274 = vector.load %arg3[%c0_260, %c0_261, %c962] : memref<1x4x2304xf32, #tpu.memory_space<vmem>>, vector<1x4x14xf32>
    %275 = vector.shape_cast %274 : vector<1x4x14xf32> to vector<4x14xf32>
    %276 = vector.shape_cast %273 : vector<4x14xf32> to vector<1x4x14xf32>
    tpu.vector_store %arg3[%c0_260, %c0_261, %c962], %276 {strides = array<i32>} : memref<1x4x2304xf32, #tpu.memory_space<vmem>>, vector<1x4x14xf32>,
    %c0_262 = arith.constant 0 : index
    %c0_263 = arith.constant 0 : index
    %c208_264 = arith.constant 208 : index
    %277 = vector.load %arg2[%c0_262, %c0_263, %c208_264] : memref<1x4x256xf32, #tpu.memory_space<vmem>>, vector<1x4x14xf32>
    %278 = vector.shape_cast %277 : vector<1x4x14xf32> to vector<4x14xf32>
    %c0_265 = arith.constant 0 : index
    %c0_266 = arith.constant 0 : index
    %c978 = arith.constant 978 : index
    %279 = vector.load %arg3[%c0_265, %c0_266, %c978] : memref<1x4x2304xf32, #tpu.memory_space<vmem>>, vector<1x4x14xf32>
    %280 = vector.shape_cast %279 : vector<1x4x14xf32> to vector<4x14xf32>
    %281 = vector.shape_cast %278 : vector<4x14xf32> to vector<1x4x14xf32>
    tpu.vector_store %arg3[%c0_265, %c0_266, %c978], %281 {strides = array<i32>} : memref<1x4x2304xf32, #tpu.memory_space<vmem>>, vector<1x4x14xf32>,
    %c0_267 = arith.constant 0 : index
    %c0_268 = arith.constant 0 : index
    %c224 = arith.constant 224 : index
    %282 = vector.load %arg2[%c0_267, %c0_268, %c224] : memref<1x4x256xf32, #tpu.memory_space<vmem>>, vector<1x4x14xf32>
    %283 = vector.shape_cast %282 : vector<1x4x14xf32> to vector<4x14xf32>
    %c0_269 = arith.constant 0 : index
    %c0_270 = arith.constant 0 : index
    %c994 = arith.constant 994 : index
    %284 = vector.load %arg3[%c0_269, %c0_270, %c994] : memref<1x4x2304xf32, #tpu.memory_space<vmem>>, vector<1x4x14xf32>
    %285 = vector.shape_cast %284 : vector<1x4x14xf32> to vector<4x14xf32>
    %286 = vector.shape_cast %283 : vector<4x14xf32> to vector<1x4x14xf32>
    tpu.vector_store %arg3[%c0_269, %c0_270, %c994], %286 {strides = array<i32>} : memref<1x4x2304xf32, #tpu.memory_space<vmem>>, vector<1x4x14xf32>,
    %c0_271 = arith.constant 0 : index
    %c0_272 = arith.constant 0 : index
    %c240 = arith.constant 240 : index
    %287 = vector.load %arg2[%c0_271, %c0_272, %c240] : memref<1x4x256xf32, #tpu.memory_space<vmem>>, vector<1x4x14xf32>
    %288 = vector.shape_cast %287 : vector<1x4x14xf32> to vector<4x14xf32>
    %c0_273 = arith.constant 0 : index
    %c0_274 = arith.constant 0 : index
    %c1010 = arith.constant 1010 : index
    %289 = vector.load %arg3[%c0_273, %c0_274, %c1010] : memref<1x4x2304xf32, #tpu.memory_space<vmem>>, vector<1x4x14xf32>
    %290 = vector.shape_cast %289 : vector<1x4x14xf32> to vector<4x14xf32>
    %291 = vector.shape_cast %288 : vector<4x14xf32> to vector<1x4x14xf32>
    tpu.vector_store %arg3[%c0_273, %c0_274, %c1010], %291 {strides = array<i32>} : memref<1x4x2304xf32, #tpu.memory_space<vmem>>, vector<1x4x14xf32>,
    %c0_275 = arith.constant 0 : index
    %c0_276 = arith.constant 0 : index
    %c0_277 = arith.constant 0 : index
    %292 = vector.load %arg2[%c0_275, %c0_276, %c0_277] : memref<1x4x256xf32, #tpu.memory_space<vmem>>, vector<1x4x16xf32>
    %293 = vector.shape_cast %292 : vector<1x4x16xf32> to vector<4x16xf32>
    %c0_278 = arith.constant 0 : index
    %c0_279 = arith.constant 0 : index
    %c1024 = arith.constant 1024 : index
    %294 = vector.load %arg3[%c0_278, %c0_279, %c1024] : memref<1x4x2304xf32, #tpu.memory_space<vmem>>, vector<1x4x16xf32>
    %295 = vector.shape_cast %294 : vector<1x4x16xf32> to vector<4x16xf32>
    %296 = vector.shape_cast %293 : vector<4x16xf32> to vector<1x4x16xf32>
    tpu.vector_store %arg3[%c0_278, %c0_279, %c1024], %296 {strides = array<i32>} : memref<1x4x2304xf32, #tpu.memory_space<vmem>>, vector<1x4x16xf32>,
    %c0_280 = arith.constant 0 : index
    %c0_281 = arith.constant 0 : index
    %c16_282 = arith.constant 16 : index
    %297 = vector.load %arg2[%c0_280, %c0_281, %c16_282] : memref<1x4x256xf32, #tpu.memory_space<vmem>>, vector<1x4x16xf32>
    %298 = vector.shape_cast %297 : vector<1x4x16xf32> to vector<4x16xf32>
    %c0_283 = arith.constant 0 : index
    %c0_284 = arith.constant 0 : index
    %c1040 = arith.constant 1040 : index
    %299 = vector.load %arg3[%c0_283, %c0_284, %c1040] : memref<1x4x2304xf32, #tpu.memory_space<vmem>>, vector<1x4x16xf32>
    %300 = vector.shape_cast %299 : vector<1x4x16xf32> to vector<4x16xf32>
    %301 = vector.shape_cast %298 : vector<4x16xf32> to vector<1x4x16xf32>
    tpu.vector_store %arg3[%c0_283, %c0_284, %c1040], %301 {strides = array<i32>} : memref<1x4x2304xf32, #tpu.memory_space<vmem>>, vector<1x4x16xf32>,
    %c0_285 = arith.constant 0 : index
    %c0_286 = arith.constant 0 : index
    %c32_287 = arith.constant 32 : index
    %302 = vector.load %arg2[%c0_285, %c0_286, %c32_287] : memref<1x4x256xf32, #tpu.memory_space<vmem>>, vector<1x4x16xf32>
    %303 = vector.shape_cast %302 : vector<1x4x16xf32> to vector<4x16xf32>
    %c0_288 = arith.constant 0 : index
    %c0_289 = arith.constant 0 : index
    %c1056 = arith.constant 1056 : index
    %304 = vector.load %arg3[%c0_288, %c0_289, %c1056] : memref<1x4x2304xf32, #tpu.memory_space<vmem>>, vector<1x4x16xf32>
    %305 = vector.shape_cast %304 : vector<1x4x16xf32> to vector<4x16xf32>
    %306 = vector.shape_cast %303 : vector<4x16xf32> to vector<1x4x16xf32>
    tpu.vector_store %arg3[%c0_288, %c0_289, %c1056], %306 {strides = array<i32>} : memref<1x4x2304xf32, #tpu.memory_space<vmem>>, vector<1x4x16xf32>,
    %c0_290 = arith.constant 0 : index
    %c0_291 = arith.constant 0 : index
    %c48_292 = arith.constant 48 : index
    %307 = vector.load %arg2[%c0_290, %c0_291, %c48_292] : memref<1x4x256xf32, #tpu.memory_space<vmem>>, vector<1x4x16xf32>
    %308 = vector.shape_cast %307 : vector<1x4x16xf32> to vector<4x16xf32>
    %c0_293 = arith.constant 0 : index
    %c0_294 = arith.constant 0 : index
    %c1072 = arith.constant 1072 : index
    %309 = vector.load %arg3[%c0_293, %c0_294, %c1072] : memref<1x4x2304xf32, #tpu.memory_space<vmem>>, vector<1x4x16xf32>
    %310 = vector.shape_cast %309 : vector<1x4x16xf32> to vector<4x16xf32>
    %311 = vector.shape_cast %308 : vector<4x16xf32> to vector<1x4x16xf32>
    tpu.vector_store %arg3[%c0_293, %c0_294, %c1072], %311 {strides = array<i32>} : memref<1x4x2304xf32, #tpu.memory_space<vmem>>, vector<1x4x16xf32>,
    %c0_295 = arith.constant 0 : index
    %c0_296 = arith.constant 0 : index
    %c64_297 = arith.constant 64 : index
    %312 = vector.load %arg2[%c0_295, %c0_296, %c64_297] : memref<1x4x256xf32, #tpu.memory_space<vmem>>, vector<1x4x16xf32>
    %313 = vector.shape_cast %312 : vector<1x4x16xf32> to vector<4x16xf32>
    %c0_298 = arith.constant 0 : index
    %c0_299 = arith.constant 0 : index
    %c1088 = arith.constant 1088 : index
    %314 = vector.load %arg3[%c0_298, %c0_299, %c1088] : memref<1x4x2304xf32, #tpu.memory_space<vmem>>, vector<1x4x16xf32>
    %315 = vector.shape_cast %314 : vector<1x4x16xf32> to vector<4x16xf32>
    %316 = vector.shape_cast %313 : vector<4x16xf32> to vector<1x4x16xf32>
    tpu.vector_store %arg3[%c0_298, %c0_299, %c1088], %316 {strides = array<i32>} : memref<1x4x2304xf32, #tpu.memory_space<vmem>>, vector<1x4x16xf32>,
    %c0_300 = arith.constant 0 : index
    %c0_301 = arith.constant 0 : index
    %c80_302 = arith.constant 80 : index
    %317 = vector.load %arg2[%c0_300, %c0_301, %c80_302] : memref<1x4x256xf32, #tpu.memory_space<vmem>>, vector<1x4x16xf32>
    %318 = vector.shape_cast %317 : vector<1x4x16xf32> to vector<4x16xf32>
    %c0_303 = arith.constant 0 : index
    %c0_304 = arith.constant 0 : index
    %c1104 = arith.constant 1104 : index
    %319 = vector.load %arg3[%c0_303, %c0_304, %c1104] : memref<1x4x2304xf32, #tpu.memory_space<vmem>>, vector<1x4x16xf32>
    %320 = vector.shape_cast %319 : vector<1x4x16xf32> to vector<4x16xf32>
    %321 = vector.shape_cast %318 : vector<4x16xf32> to vector<1x4x16xf32>
    tpu.vector_store %arg3[%c0_303, %c0_304, %c1104], %321 {strides = array<i32>} : memref<1x4x2304xf32, #tpu.memory_space<vmem>>, vector<1x4x16xf32>,
    %c0_305 = arith.constant 0 : index
    %c0_306 = arith.constant 0 : index
    %c96_307 = arith.constant 96 : index
    %322 = vector.load %arg2[%c0_305, %c0_306, %c96_307] : memref<1x4x256xf32, #tpu.memory_space<vmem>>, vector<1x4x16xf32>
    %323 = vector.shape_cast %322 : vector<1x4x16xf32> to vector<4x16xf32>
    %c0_308 = arith.constant 0 : index
    %c0_309 = arith.constant 0 : index
    %c1120 = arith.constant 1120 : index
    %324 = vector.load %arg3[%c0_308, %c0_309, %c1120] : memref<1x4x2304xf32, #tpu.memory_space<vmem>>, vector<1x4x16xf32>
    %325 = vector.shape_cast %324 : vector<1x4x16xf32> to vector<4x16xf32>
    %326 = vector.shape_cast %323 : vector<4x16xf32> to vector<1x4x16xf32>
    tpu.vector_store %arg3[%c0_308, %c0_309, %c1120], %326 {strides = array<i32>} : memref<1x4x2304xf32, #tpu.memory_space<vmem>>, vector<1x4x16xf32>,
    %c0_310 = arith.constant 0 : index
    %c0_311 = arith.constant 0 : index
    %c112_312 = arith.constant 112 : index
    %327 = vector.load %arg2[%c0_310, %c0_311, %c112_312] : memref<1x4x256xf32, #tpu.memory_space<vmem>>, vector<1x4x16xf32>
    %328 = vector.shape_cast %327 : vector<1x4x16xf32> to vector<4x16xf32>
    %c0_313 = arith.constant 0 : index
    %c0_314 = arith.constant 0 : index
    %c1136 = arith.constant 1136 : index
    %329 = vector.load %arg3[%c0_313, %c0_314, %c1136] : memref<1x4x2304xf32, #tpu.memory_space<vmem>>, vector<1x4x16xf32>
    %330 = vector.shape_cast %329 : vector<1x4x16xf32> to vector<4x16xf32>
    %331 = vector.shape_cast %328 : vector<4x16xf32> to vector<1x4x16xf32>
    tpu.vector_store %arg3[%c0_313, %c0_314, %c1136], %331 {strides = array<i32>} : memref<1x4x2304xf32, #tpu.memory_space<vmem>>, vector<1x4x16xf32>,
    %c0_315 = arith.constant 0 : index
    %c0_316 = arith.constant 0 : index
    %c128_317 = arith.constant 128 : index
    %332 = vector.load %arg2[%c0_315, %c0_316, %c128_317] : memref<1x4x256xf32, #tpu.memory_space<vmem>>, vector<1x4x16xf32>
    %333 = vector.shape_cast %332 : vector<1x4x16xf32> to vector<4x16xf32>
    %c0_318 = arith.constant 0 : index
    %c0_319 = arith.constant 0 : index
    %c1152 = arith.constant 1152 : index
    %334 = vector.load %arg3[%c0_318, %c0_319, %c1152] : memref<1x4x2304xf32, #tpu.memory_space<vmem>>, vector<1x4x16xf32>
    %335 = vector.shape_cast %334 : vector<1x4x16xf32> to vector<4x16xf32>
    %336 = vector.shape_cast %333 : vector<4x16xf32> to vector<1x4x16xf32>
    tpu.vector_store %arg3[%c0_318, %c0_319, %c1152], %336 {strides = array<i32>} : memref<1x4x2304xf32, #tpu.memory_space<vmem>>, vector<1x4x16xf32>,
    %c0_320 = arith.constant 0 : index
    %c0_321 = arith.constant 0 : index
    %c144_322 = arith.constant 144 : index
    %337 = vector.load %arg2[%c0_320, %c0_321, %c144_322] : memref<1x4x256xf32, #tpu.memory_space<vmem>>, vector<1x4x16xf32>
    %338 = vector.shape_cast %337 : vector<1x4x16xf32> to vector<4x16xf32>
    %c0_323 = arith.constant 0 : index
    %c0_324 = arith.constant 0 : index
    %c1168 = arith.constant 1168 : index
    %339 = vector.load %arg3[%c0_323, %c0_324, %c1168] : memref<1x4x2304xf32, #tpu.memory_space<vmem>>, vector<1x4x16xf32>
    %340 = vector.shape_cast %339 : vector<1x4x16xf32> to vector<4x16xf32>
    %341 = vector.shape_cast %338 : vector<4x16xf32> to vector<1x4x16xf32>
    tpu.vector_store %arg3[%c0_323, %c0_324, %c1168], %341 {strides = array<i32>} : memref<1x4x2304xf32, #tpu.memory_space<vmem>>, vector<1x4x16xf32>,
    %c0_325 = arith.constant 0 : index
    %c0_326 = arith.constant 0 : index
    %c160_327 = arith.constant 160 : index
    %342 = vector.load %arg2[%c0_325, %c0_326, %c160_327] : memref<1x4x256xf32, #tpu.memory_space<vmem>>, vector<1x4x16xf32>
    %343 = vector.shape_cast %342 : vector<1x4x16xf32> to vector<4x16xf32>
    %c0_328 = arith.constant 0 : index
    %c0_329 = arith.constant 0 : index
    %c1184 = arith.constant 1184 : index
    %344 = vector.load %arg3[%c0_328, %c0_329, %c1184] : memref<1x4x2304xf32, #tpu.memory_space<vmem>>, vector<1x4x16xf32>
    %345 = vector.shape_cast %344 : vector<1x4x16xf32> to vector<4x16xf32>
    %346 = vector.shape_cast %343 : vector<4x16xf32> to vector<1x4x16xf32>
    tpu.vector_store %arg3[%c0_328, %c0_329, %c1184], %346 {strides = array<i32>} : memref<1x4x2304xf32, #tpu.memory_space<vmem>>, vector<1x4x16xf32>,
    %c0_330 = arith.constant 0 : index
    %c0_331 = arith.constant 0 : index
    %c176_332 = arith.constant 176 : index
    %347 = vector.load %arg2[%c0_330, %c0_331, %c176_332] : memref<1x4x256xf32, #tpu.memory_space<vmem>>, vector<1x4x16xf32>
    %348 = vector.shape_cast %347 : vector<1x4x16xf32> to vector<4x16xf32>
    %c0_333 = arith.constant 0 : index
    %c0_334 = arith.constant 0 : index
    %c1200 = arith.constant 1200 : index
    %349 = vector.load %arg3[%c0_333, %c0_334, %c1200] : memref<1x4x2304xf32, #tpu.memory_space<vmem>>, vector<1x4x16xf32>
    %350 = vector.shape_cast %349 : vector<1x4x16xf32> to vector<4x16xf32>
    %351 = vector.shape_cast %348 : vector<4x16xf32> to vector<1x4x16xf32>
    tpu.vector_store %arg3[%c0_333, %c0_334, %c1200], %351 {strides = array<i32>} : memref<1x4x2304xf32, #tpu.memory_space<vmem>>, vector<1x4x16xf32>,
    %c0_335 = arith.constant 0 : index
    %c0_336 = arith.constant 0 : index
    %c192_337 = arith.constant 192 : index
    %352 = vector.load %arg2[%c0_335, %c0_336, %c192_337] : memref<1x4x256xf32, #tpu.memory_space<vmem>>, vector<1x4x16xf32>
    %353 = vector.shape_cast %352 : vector<1x4x16xf32> to vector<4x16xf32>
    %c0_338 = arith.constant 0 : index
    %c0_339 = arith.constant 0 : index
    %c1216 = arith.constant 1216 : index
    %354 = vector.load %arg3[%c0_338, %c0_339, %c1216] : memref<1x4x2304xf32, #tpu.memory_space<vmem>>, vector<1x4x16xf32>
    %355 = vector.shape_cast %354 : vector<1x4x16xf32> to vector<4x16xf32>
    %356 = vector.shape_cast %353 : vector<4x16xf32> to vector<1x4x16xf32>
    tpu.vector_store %arg3[%c0_338, %c0_339, %c1216], %356 {strides = array<i32>} : memref<1x4x2304xf32, #tpu.memory_space<vmem>>, vector<1x4x16xf32>,
    %c0_340 = arith.constant 0 : index
    %c0_341 = arith.constant 0 : index
    %c208_342 = arith.constant 208 : index
    %357 = vector.load %arg2[%c0_340, %c0_341, %c208_342] : memref<1x4x256xf32, #tpu.memory_space<vmem>>, vector<1x4x16xf32>
    %358 = vector.shape_cast %357 : vector<1x4x16xf32> to vector<4x16xf32>
    %c0_343 = arith.constant 0 : index
    %c0_344 = arith.constant 0 : index
    %c1232 = arith.constant 1232 : index
    %359 = vector.load %arg3[%c0_343, %c0_344, %c1232] : memref<1x4x2304xf32, #tpu.memory_space<vmem>>, vector<1x4x16xf32>
    %360 = vector.shape_cast %359 : vector<1x4x16xf32> to vector<4x16xf32>
    %361 = vector.shape_cast %358 : vector<4x16xf32> to vector<1x4x16xf32>
    tpu.vector_store %arg3[%c0_343, %c0_344, %c1232], %361 {strides = array<i32>} : memref<1x4x2304xf32, #tpu.memory_space<vmem>>, vector<1x4x16xf32>,
    %c0_345 = arith.constant 0 : index
    %c0_346 = arith.constant 0 : index
    %c224_347 = arith.constant 224 : index
    %362 = vector.load %arg2[%c0_345, %c0_346, %c224_347] : memref<1x4x256xf32, #tpu.memory_space<vmem>>, vector<1x4x16xf32>
    %363 = vector.shape_cast %362 : vector<1x4x16xf32> to vector<4x16xf32>
    %c0_348 = arith.constant 0 : index
    %c0_349 = arith.constant 0 : index
    %c1248 = arith.constant 1248 : index
    %364 = vector.load %arg3[%c0_348, %c0_349, %c1248] : memref<1x4x2304xf32, #tpu.memory_space<vmem>>, vector<1x4x16xf32>
    %365 = vector.shape_cast %364 : vector<1x4x16xf32> to vector<4x16xf32>
    %366 = vector.shape_cast %363 : vector<4x16xf32> to vector<1x4x16xf32>
    tpu.vector_store %arg3[%c0_348, %c0_349, %c1248], %366 {strides = array<i32>} : memref<1x4x2304xf32, #tpu.memory_space<vmem>>, vector<1x4x16xf32>,
    %c0_350 = arith.constant 0 : index
    %c0_351 = arith.constant 0 : index
    %c240_352 = arith.constant 240 : index
    %367 = vector.load %arg2[%c0_350, %c0_351, %c240_352] : memref<1x4x256xf32, #tpu.memory_space<vmem>>, vector<1x4x16xf32>
    %368 = vector.shape_cast %367 : vector<1x4x16xf32> to vector<4x16xf32>
    %c0_353 = arith.constant 0 : index
    %c0_354 = arith.constant 0 : index
    %c1264 = arith.constant 1264 : index
    %369 = vector.load %arg3[%c0_353, %c0_354, %c1264] : memref<1x4x2304xf32, #tpu.memory_space<vmem>>, vector<1x4x16xf32>
    %370 = vector.shape_cast %369 : vector<1x4x16xf32> to vector<4x16xf32>
    %371 = vector.shape_cast %368 : vector<4x16xf32> to vector<1x4x16xf32>
    tpu.vector_store %arg3[%c0_353, %c0_354, %c1264], %371 {strides = array<i32>} : memref<1x4x2304xf32, #tpu.memory_space<vmem>>, vector<1x4x16xf32>,
    %c0_355 = arith.constant 0 : index
    %c0_356 = arith.constant 0 : index
    %c2_357 = arith.constant 2 : index
    %372 = vector.load %arg2[%c0_355, %c0_356, %c2_357] : memref<1x4x256xf32, #tpu.memory_space<vmem>>, vector<1x4x14xf32>
    %373 = vector.shape_cast %372 : vector<1x4x14xf32> to vector<4x14xf32>
    %c0_358 = arith.constant 0 : index
    %c0_359 = arith.constant 0 : index
    %c1280 = arith.constant 1280 : index
    %374 = vector.load %arg3[%c0_358, %c0_359, %c1280] : memref<1x4x2304xf32, #tpu.memory_space<vmem>>, vector<1x4x14xf32>
    %375 = vector.shape_cast %374 : vector<1x4x14xf32> to vector<4x14xf32>
    %376 = vector.shape_cast %373 : vector<4x14xf32> to vector<1x4x14xf32>
    tpu.vector_store %arg3[%c0_358, %c0_359, %c1280], %376 {strides = array<i32>} : memref<1x4x2304xf32, #tpu.memory_space<vmem>>, vector<1x4x14xf32>,
    %c0_360 = arith.constant 0 : index
    %c0_361 = arith.constant 0 : index
    %c18_362 = arith.constant 18 : index
    %377 = vector.load %arg2[%c0_360, %c0_361, %c18_362] : memref<1x4x256xf32, #tpu.memory_space<vmem>>, vector<1x4x14xf32>
    %378 = vector.shape_cast %377 : vector<1x4x14xf32> to vector<4x14xf32>
    %c0_363 = arith.constant 0 : index
    %c0_364 = arith.constant 0 : index
    %c1296 = arith.constant 1296 : index
    %379 = vector.load %arg3[%c0_363, %c0_364, %c1296] : memref<1x4x2304xf32, #tpu.memory_space<vmem>>, vector<1x4x14xf32>
    %380 = vector.shape_cast %379 : vector<1x4x14xf32> to vector<4x14xf32>
    %381 = vector.shape_cast %378 : vector<4x14xf32> to vector<1x4x14xf32>
    tpu.vector_store %arg3[%c0_363, %c0_364, %c1296], %381 {strides = array<i32>} : memref<1x4x2304xf32, #tpu.memory_space<vmem>>, vector<1x4x14xf32>,
    %c0_365 = arith.constant 0 : index
    %c0_366 = arith.constant 0 : index
    %c34_367 = arith.constant 34 : index
    %382 = vector.load %arg2[%c0_365, %c0_366, %c34_367] : memref<1x4x256xf32, #tpu.memory_space<vmem>>, vector<1x4x14xf32>
    %383 = vector.shape_cast %382 : vector<1x4x14xf32> to vector<4x14xf32>
    %c0_368 = arith.constant 0 : index
    %c0_369 = arith.constant 0 : index
    %c1312 = arith.constant 1312 : index
    %384 = vector.load %arg3[%c0_368, %c0_369, %c1312] : memref<1x4x2304xf32, #tpu.memory_space<vmem>>, vector<1x4x14xf32>
    %385 = vector.shape_cast %384 : vector<1x4x14xf32> to vector<4x14xf32>
    %386 = vector.shape_cast %383 : vector<4x14xf32> to vector<1x4x14xf32>
    tpu.vector_store %arg3[%c0_368, %c0_369, %c1312], %386 {strides = array<i32>} : memref<1x4x2304xf32, #tpu.memory_space<vmem>>, vector<1x4x14xf32>,
    %c0_370 = arith.constant 0 : index
    %c0_371 = arith.constant 0 : index
    %c50_372 = arith.constant 50 : index
    %387 = vector.load %arg2[%c0_370, %c0_371, %c50_372] : memref<1x4x256xf32, #tpu.memory_space<vmem>>, vector<1x4x14xf32>
    %388 = vector.shape_cast %387 : vector<1x4x14xf32> to vector<4x14xf32>
    %c0_373 = arith.constant 0 : index
    %c0_374 = arith.constant 0 : index
    %c1328 = arith.constant 1328 : index
    %389 = vector.load %arg3[%c0_373, %c0_374, %c1328] : memref<1x4x2304xf32, #tpu.memory_space<vmem>>, vector<1x4x14xf32>
    %390 = vector.shape_cast %389 : vector<1x4x14xf32> to vector<4x14xf32>
    %391 = vector.shape_cast %388 : vector<4x14xf32> to vector<1x4x14xf32>
    tpu.vector_store %arg3[%c0_373, %c0_374, %c1328], %391 {strides = array<i32>} : memref<1x4x2304xf32, #tpu.memory_space<vmem>>, vector<1x4x14xf32>,
    %c0_375 = arith.constant 0 : index
    %c0_376 = arith.constant 0 : index
    %c66_377 = arith.constant 66 : index
    %392 = vector.load %arg2[%c0_375, %c0_376, %c66_377] : memref<1x4x256xf32, #tpu.memory_space<vmem>>, vector<1x4x14xf32>
    %393 = vector.shape_cast %392 : vector<1x4x14xf32> to vector<4x14xf32>
    %c0_378 = arith.constant 0 : index
    %c0_379 = arith.constant 0 : index
    %c1344 = arith.constant 1344 : index
    %394 = vector.load %arg3[%c0_378, %c0_379, %c1344] : memref<1x4x2304xf32, #tpu.memory_space<vmem>>, vector<1x4x14xf32>
    %395 = vector.shape_cast %394 : vector<1x4x14xf32> to vector<4x14xf32>
    %396 = vector.shape_cast %393 : vector<4x14xf32> to vector<1x4x14xf32>
    tpu.vector_store %arg3[%c0_378, %c0_379, %c1344], %396 {strides = array<i32>} : memref<1x4x2304xf32, #tpu.memory_space<vmem>>, vector<1x4x14xf32>,
    %c0_380 = arith.constant 0 : index
    %c0_381 = arith.constant 0 : index
    %c82_382 = arith.constant 82 : index
    %397 = vector.load %arg2[%c0_380, %c0_381, %c82_382] : memref<1x4x256xf32, #tpu.memory_space<vmem>>, vector<1x4x14xf32>
    %398 = vector.shape_cast %397 : vector<1x4x14xf32> to vector<4x14xf32>
    %c0_383 = arith.constant 0 : index
    %c0_384 = arith.constant 0 : index
    %c1360 = arith.constant 1360 : index
    %399 = vector.load %arg3[%c0_383, %c0_384, %c1360] : memref<1x4x2304xf32, #tpu.memory_space<vmem>>, vector<1x4x14xf32>
    %400 = vector.shape_cast %399 : vector<1x4x14xf32> to vector<4x14xf32>
    %401 = vector.shape_cast %398 : vector<4x14xf32> to vector<1x4x14xf32>
    tpu.vector_store %arg3[%c0_383, %c0_384, %c1360], %401 {strides = array<i32>} : memref<1x4x2304xf32, #tpu.memory_space<vmem>>, vector<1x4x14xf32>,
    %c0_385 = arith.constant 0 : index
    %c0_386 = arith.constant 0 : index
    %c98_387 = arith.constant 98 : index
    %402 = vector.load %arg2[%c0_385, %c0_386, %c98_387] : memref<1x4x256xf32, #tpu.memory_space<vmem>>, vector<1x4x14xf32>
    %403 = vector.shape_cast %402 : vector<1x4x14xf32> to vector<4x14xf32>
    %c0_388 = arith.constant 0 : index
    %c0_389 = arith.constant 0 : index
    %c1376 = arith.constant 1376 : index
    %404 = vector.load %arg3[%c0_388, %c0_389, %c1376] : memref<1x4x2304xf32, #tpu.memory_space<vmem>>, vector<1x4x14xf32>
    %405 = vector.shape_cast %404 : vector<1x4x14xf32> to vector<4x14xf32>
    %406 = vector.shape_cast %403 : vector<4x14xf32> to vector<1x4x14xf32>
    tpu.vector_store %arg3[%c0_388, %c0_389, %c1376], %406 {strides = array<i32>} : memref<1x4x2304xf32, #tpu.memory_space<vmem>>, vector<1x4x14xf32>,
    %c0_390 = arith.constant 0 : index
    %c0_391 = arith.constant 0 : index
    %c114_392 = arith.constant 114 : index
    %407 = vector.load %arg2[%c0_390, %c0_391, %c114_392] : memref<1x4x256xf32, #tpu.memory_space<vmem>>, vector<1x4x14xf32>
    %408 = vector.shape_cast %407 : vector<1x4x14xf32> to vector<4x14xf32>
    %c0_393 = arith.constant 0 : index
    %c0_394 = arith.constant 0 : index
    %c1392 = arith.constant 1392 : index
    %409 = vector.load %arg3[%c0_393, %c0_394, %c1392] : memref<1x4x2304xf32, #tpu.memory_space<vmem>>, vector<1x4x14xf32>
    %410 = vector.shape_cast %409 : vector<1x4x14xf32> to vector<4x14xf32>
    %411 = vector.shape_cast %408 : vector<4x14xf32> to vector<1x4x14xf32>
    tpu.vector_store %arg3[%c0_393, %c0_394, %c1392], %411 {strides = array<i32>} : memref<1x4x2304xf32, #tpu.memory_space<vmem>>, vector<1x4x14xf32>,
    %c0_395 = arith.constant 0 : index
    %c0_396 = arith.constant 0 : index
    %c130_397 = arith.constant 130 : index
    %412 = vector.load %arg2[%c0_395, %c0_396, %c130_397] : memref<1x4x256xf32, #tpu.memory_space<vmem>>, vector<1x4x14xf32>
    %413 = vector.shape_cast %412 : vector<1x4x14xf32> to vector<4x14xf32>
    %c0_398 = arith.constant 0 : index
    %c0_399 = arith.constant 0 : index
    %c1408 = arith.constant 1408 : index
    %414 = vector.load %arg3[%c0_398, %c0_399, %c1408] : memref<1x4x2304xf32, #tpu.memory_space<vmem>>, vector<1x4x14xf32>
    %415 = vector.shape_cast %414 : vector<1x4x14xf32> to vector<4x14xf32>
    %416 = vector.shape_cast %413 : vector<4x14xf32> to vector<1x4x14xf32>
    tpu.vector_store %arg3[%c0_398, %c0_399, %c1408], %416 {strides = array<i32>} : memref<1x4x2304xf32, #tpu.memory_space<vmem>>, vector<1x4x14xf32>,
    %c0_400 = arith.constant 0 : index
    %c0_401 = arith.constant 0 : index
    %c146_402 = arith.constant 146 : index
    %417 = vector.load %arg2[%c0_400, %c0_401, %c146_402] : memref<1x4x256xf32, #tpu.memory_space<vmem>>, vector<1x4x14xf32>
    %418 = vector.shape_cast %417 : vector<1x4x14xf32> to vector<4x14xf32>
    %c0_403 = arith.constant 0 : index
    %c0_404 = arith.constant 0 : index
    %c1424 = arith.constant 1424 : index
    %419 = vector.load %arg3[%c0_403, %c0_404, %c1424] : memref<1x4x2304xf32, #tpu.memory_space<vmem>>, vector<1x4x14xf32>
    %420 = vector.shape_cast %419 : vector<1x4x14xf32> to vector<4x14xf32>
    %421 = vector.shape_cast %418 : vector<4x14xf32> to vector<1x4x14xf32>
    tpu.vector_store %arg3[%c0_403, %c0_404, %c1424], %421 {strides = array<i32>} : memref<1x4x2304xf32, #tpu.memory_space<vmem>>, vector<1x4x14xf32>,
    %c0_405 = arith.constant 0 : index
    %c0_406 = arith.constant 0 : index
    %c162_407 = arith.constant 162 : index
    %422 = vector.load %arg2[%c0_405, %c0_406, %c162_407] : memref<1x4x256xf32, #tpu.memory_space<vmem>>, vector<1x4x14xf32>
    %423 = vector.shape_cast %422 : vector<1x4x14xf32> to vector<4x14xf32>
    %c0_408 = arith.constant 0 : index
    %c0_409 = arith.constant 0 : index
    %c1440 = arith.constant 1440 : index
    %424 = vector.load %arg3[%c0_408, %c0_409, %c1440] : memref<1x4x2304xf32, #tpu.memory_space<vmem>>, vector<1x4x14xf32>
    %425 = vector.shape_cast %424 : vector<1x4x14xf32> to vector<4x14xf32>
    %426 = vector.shape_cast %423 : vector<4x14xf32> to vector<1x4x14xf32>
    tpu.vector_store %arg3[%c0_408, %c0_409, %c1440], %426 {strides = array<i32>} : memref<1x4x2304xf32, #tpu.memory_space<vmem>>, vector<1x4x14xf32>,
    %c0_410 = arith.constant 0 : index
    %c0_411 = arith.constant 0 : index
    %c178_412 = arith.constant 178 : index
    %427 = vector.load %arg2[%c0_410, %c0_411, %c178_412] : memref<1x4x256xf32, #tpu.memory_space<vmem>>, vector<1x4x14xf32>
    %428 = vector.shape_cast %427 : vector<1x4x14xf32> to vector<4x14xf32>
    %c0_413 = arith.constant 0 : index
    %c0_414 = arith.constant 0 : index
    %c1456 = arith.constant 1456 : index
    %429 = vector.load %arg3[%c0_413, %c0_414, %c1456] : memref<1x4x2304xf32, #tpu.memory_space<vmem>>, vector<1x4x14xf32>
    %430 = vector.shape_cast %429 : vector<1x4x14xf32> to vector<4x14xf32>
    %431 = vector.shape_cast %428 : vector<4x14xf32> to vector<1x4x14xf32>
    tpu.vector_store %arg3[%c0_413, %c0_414, %c1456], %431 {strides = array<i32>} : memref<1x4x2304xf32, #tpu.memory_space<vmem>>, vector<1x4x14xf32>,
    %c0_415 = arith.constant 0 : index
    %c0_416 = arith.constant 0 : index
    %c194_417 = arith.constant 194 : index
    %432 = vector.load %arg2[%c0_415, %c0_416, %c194_417] : memref<1x4x256xf32, #tpu.memory_space<vmem>>, vector<1x4x14xf32>
    %433 = vector.shape_cast %432 : vector<1x4x14xf32> to vector<4x14xf32>
    %c0_418 = arith.constant 0 : index
    %c0_419 = arith.constant 0 : index
    %c1472 = arith.constant 1472 : index
    %434 = vector.load %arg3[%c0_418, %c0_419, %c1472] : memref<1x4x2304xf32, #tpu.memory_space<vmem>>, vector<1x4x14xf32>
    %435 = vector.shape_cast %434 : vector<1x4x14xf32> to vector<4x14xf32>
    %436 = vector.shape_cast %433 : vector<4x14xf32> to vector<1x4x14xf32>
    tpu.vector_store %arg3[%c0_418, %c0_419, %c1472], %436 {strides = array<i32>} : memref<1x4x2304xf32, #tpu.memory_space<vmem>>, vector<1x4x14xf32>,
    %c0_420 = arith.constant 0 : index
    %c0_421 = arith.constant 0 : index
    %c210_422 = arith.constant 210 : index
    %437 = vector.load %arg2[%c0_420, %c0_421, %c210_422] : memref<1x4x256xf32, #tpu.memory_space<vmem>>, vector<1x4x14xf32>
    %438 = vector.shape_cast %437 : vector<1x4x14xf32> to vector<4x14xf32>
    %c0_423 = arith.constant 0 : index
    %c0_424 = arith.constant 0 : index
    %c1488 = arith.constant 1488 : index
    %439 = vector.load %arg3[%c0_423, %c0_424, %c1488] : memref<1x4x2304xf32, #tpu.memory_space<vmem>>, vector<1x4x14xf32>
    %440 = vector.shape_cast %439 : vector<1x4x14xf32> to vector<4x14xf32>
    %441 = vector.shape_cast %438 : vector<4x14xf32> to vector<1x4x14xf32>
    tpu.vector_store %arg3[%c0_423, %c0_424, %c1488], %441 {strides = array<i32>} : memref<1x4x2304xf32, #tpu.memory_space<vmem>>, vector<1x4x14xf32>,
    %c0_425 = arith.constant 0 : index
    %c0_426 = arith.constant 0 : index
    %c226_427 = arith.constant 226 : index
    %442 = vector.load %arg2[%c0_425, %c0_426, %c226_427] : memref<1x4x256xf32, #tpu.memory_space<vmem>>, vector<1x4x14xf32>
    %443 = vector.shape_cast %442 : vector<1x4x14xf32> to vector<4x14xf32>
    %c0_428 = arith.constant 0 : index
    %c0_429 = arith.constant 0 : index
    %c1504 = arith.constant 1504 : index
    %444 = vector.load %arg3[%c0_428, %c0_429, %c1504] : memref<1x4x2304xf32, #tpu.memory_space<vmem>>, vector<1x4x14xf32>
    %445 = vector.shape_cast %444 : vector<1x4x14xf32> to vector<4x14xf32>
    %446 = vector.shape_cast %443 : vector<4x14xf32> to vector<1x4x14xf32>
    tpu.vector_store %arg3[%c0_428, %c0_429, %c1504], %446 {strides = array<i32>} : memref<1x4x2304xf32, #tpu.memory_space<vmem>>, vector<1x4x14xf32>,
    %c0_430 = arith.constant 0 : index
    %c0_431 = arith.constant 0 : index
    %c242_432 = arith.constant 242 : index
    %447 = vector.load %arg2[%c0_430, %c0_431, %c242_432] : memref<1x4x256xf32, #tpu.memory_space<vmem>>, vector<1x4x14xf32>
    %448 = vector.shape_cast %447 : vector<1x4x14xf32> to vector<4x14xf32>
    %c0_433 = arith.constant 0 : index
    %c0_434 = arith.constant 0 : index
    %c1520 = arith.constant 1520 : index
    %449 = vector.load %arg3[%c0_433, %c0_434, %c1520] : memref<1x4x2304xf32, #tpu.memory_space<vmem>>, vector<1x4x14xf32>
    %450 = vector.shape_cast %449 : vector<1x4x14xf32> to vector<4x14xf32>
    %451 = vector.shape_cast %448 : vector<4x14xf32> to vector<1x4x14xf32>
    tpu.vector_store %arg3[%c0_433, %c0_434, %c1520], %451 {strides = array<i32>} : memref<1x4x2304xf32, #tpu.memory_space<vmem>>, vector<1x4x14xf32>,
    %c0_435 = arith.constant 0 : index
    %c0_436 = arith.constant 0 : index
    %c32_437 = arith.constant 32 : index
    %452 = vector.load %arg2[%c0_435, %c0_436, %c32_437] : memref<1x4x256xf32, #tpu.memory_space<vmem>>, vector<1x4x14xf32>
    %453 = vector.shape_cast %452 : vector<1x4x14xf32> to vector<4x14xf32>
    %c0_438 = arith.constant 0 : index
    %c0_439 = arith.constant 0 : index
    %c1538 = arith.constant 1538 : index
    %454 = vector.load %arg3[%c0_438, %c0_439, %c1538] : memref<1x4x2304xf32, #tpu.memory_space<vmem>>, vector<1x4x14xf32>
    %455 = vector.shape_cast %454 : vector<1x4x14xf32> to vector<4x14xf32>
    %456 = vector.shape_cast %453 : vector<4x14xf32> to vector<1x4x14xf32>
    tpu.vector_store %arg3[%c0_438, %c0_439, %c1538], %456 {strides = array<i32>} : memref<1x4x2304xf32, #tpu.memory_space<vmem>>, vector<1x4x14xf32>,
    %c0_440 = arith.constant 0 : index
    %c0_441 = arith.constant 0 : index
    %c48_442 = arith.constant 48 : index
    %457 = vector.load %arg2[%c0_440, %c0_441, %c48_442] : memref<1x4x256xf32, #tpu.memory_space<vmem>>, vector<1x4x14xf32>
    %458 = vector.shape_cast %457 : vector<1x4x14xf32> to vector<4x14xf32>
    %c0_443 = arith.constant 0 : index
    %c0_444 = arith.constant 0 : index
    %c1554 = arith.constant 1554 : index
    %459 = vector.load %arg3[%c0_443, %c0_444, %c1554] : memref<1x4x2304xf32, #tpu.memory_space<vmem>>, vector<1x4x14xf32>
    %460 = vector.shape_cast %459 : vector<1x4x14xf32> to vector<4x14xf32>
    %461 = vector.shape_cast %458 : vector<4x14xf32> to vector<1x4x14xf32>
    tpu.vector_store %arg3[%c0_443, %c0_444, %c1554], %461 {strides = array<i32>} : memref<1x4x2304xf32, #tpu.memory_space<vmem>>, vector<1x4x14xf32>,
    %c0_445 = arith.constant 0 : index
    %c0_446 = arith.constant 0 : index
    %c64_447 = arith.constant 64 : index
    %462 = vector.load %arg2[%c0_445, %c0_446, %c64_447] : memref<1x4x256xf32, #tpu.memory_space<vmem>>, vector<1x4x14xf32>
    %463 = vector.shape_cast %462 : vector<1x4x14xf32> to vector<4x14xf32>
    %c0_448 = arith.constant 0 : index
    %c0_449 = arith.constant 0 : index
    %c1570 = arith.constant 1570 : index
    %464 = vector.load %arg3[%c0_448, %c0_449, %c1570] : memref<1x4x2304xf32, #tpu.memory_space<vmem>>, vector<1x4x14xf32>
    %465 = vector.shape_cast %464 : vector<1x4x14xf32> to vector<4x14xf32>
    %466 = vector.shape_cast %463 : vector<4x14xf32> to vector<1x4x14xf32>
    tpu.vector_store %arg3[%c0_448, %c0_449, %c1570], %466 {strides = array<i32>} : memref<1x4x2304xf32, #tpu.memory_space<vmem>>, vector<1x4x14xf32>,
    %c0_450 = arith.constant 0 : index
    %c0_451 = arith.constant 0 : index
    %c80_452 = arith.constant 80 : index
    %467 = vector.load %arg2[%c0_450, %c0_451, %c80_452] : memref<1x4x256xf32, #tpu.memory_space<vmem>>, vector<1x4x14xf32>
    %468 = vector.shape_cast %467 : vector<1x4x14xf32> to vector<4x14xf32>
    %c0_453 = arith.constant 0 : index
    %c0_454 = arith.constant 0 : index
    %c1586 = arith.constant 1586 : index
    %469 = vector.load %arg3[%c0_453, %c0_454, %c1586] : memref<1x4x2304xf32, #tpu.memory_space<vmem>>, vector<1x4x14xf32>
    %470 = vector.shape_cast %469 : vector<1x4x14xf32> to vector<4x14xf32>
    %471 = vector.shape_cast %468 : vector<4x14xf32> to vector<1x4x14xf32>
    tpu.vector_store %arg3[%c0_453, %c0_454, %c1586], %471 {strides = array<i32>} : memref<1x4x2304xf32, #tpu.memory_space<vmem>>, vector<1x4x14xf32>,
    %c0_455 = arith.constant 0 : index
    %c0_456 = arith.constant 0 : index
    %c96_457 = arith.constant 96 : index
    %472 = vector.load %arg2[%c0_455, %c0_456, %c96_457] : memref<1x4x256xf32, #tpu.memory_space<vmem>>, vector<1x4x14xf32>
    %473 = vector.shape_cast %472 : vector<1x4x14xf32> to vector<4x14xf32>
    %c0_458 = arith.constant 0 : index
    %c0_459 = arith.constant 0 : index
    %c1602 = arith.constant 1602 : index
    %474 = vector.load %arg3[%c0_458, %c0_459, %c1602] : memref<1x4x2304xf32, #tpu.memory_space<vmem>>, vector<1x4x14xf32>
    %475 = vector.shape_cast %474 : vector<1x4x14xf32> to vector<4x14xf32>
    %476 = vector.shape_cast %473 : vector<4x14xf32> to vector<1x4x14xf32>
    tpu.vector_store %arg3[%c0_458, %c0_459, %c1602], %476 {strides = array<i32>} : memref<1x4x2304xf32, #tpu.memory_space<vmem>>, vector<1x4x14xf32>,
    %c0_460 = arith.constant 0 : index
    %c0_461 = arith.constant 0 : index
    %c112_462 = arith.constant 112 : index
    %477 = vector.load %arg2[%c0_460, %c0_461, %c112_462] : memref<1x4x256xf32, #tpu.memory_space<vmem>>, vector<1x4x14xf32>
    %478 = vector.shape_cast %477 : vector<1x4x14xf32> to vector<4x14xf32>
    %c0_463 = arith.constant 0 : index
    %c0_464 = arith.constant 0 : index
    %c1618 = arith.constant 1618 : index
    %479 = vector.load %arg3[%c0_463, %c0_464, %c1618] : memref<1x4x2304xf32, #tpu.memory_space<vmem>>, vector<1x4x14xf32>
    %480 = vector.shape_cast %479 : vector<1x4x14xf32> to vector<4x14xf32>
    %481 = vector.shape_cast %478 : vector<4x14xf32> to vector<1x4x14xf32>
    tpu.vector_store %arg3[%c0_463, %c0_464, %c1618], %481 {strides = array<i32>} : memref<1x4x2304xf32, #tpu.memory_space<vmem>>, vector<1x4x14xf32>,
    %c0_465 = arith.constant 0 : index
    %c0_466 = arith.constant 0 : index
    %c128_467 = arith.constant 128 : index
    %482 = vector.load %arg2[%c0_465, %c0_466, %c128_467] : memref<1x4x256xf32, #tpu.memory_space<vmem>>, vector<1x4x14xf32>
    %483 = vector.shape_cast %482 : vector<1x4x14xf32> to vector<4x14xf32>
    %c0_468 = arith.constant 0 : index
    %c0_469 = arith.constant 0 : index
    %c1634 = arith.constant 1634 : index
    %484 = vector.load %arg3[%c0_468, %c0_469, %c1634] : memref<1x4x2304xf32, #tpu.memory_space<vmem>>, vector<1x4x14xf32>
    %485 = vector.shape_cast %484 : vector<1x4x14xf32> to vector<4x14xf32>
    %486 = vector.shape_cast %483 : vector<4x14xf32> to vector<1x4x14xf32>
    tpu.vector_store %arg3[%c0_468, %c0_469, %c1634], %486 {strides = array<i32>} : memref<1x4x2304xf32, #tpu.memory_space<vmem>>, vector<1x4x14xf32>,
    %c0_470 = arith.constant 0 : index
    %c0_471 = arith.constant 0 : index
    %c144_472 = arith.constant 144 : index
    %487 = vector.load %arg2[%c0_470, %c0_471, %c144_472] : memref<1x4x256xf32, #tpu.memory_space<vmem>>, vector<1x4x14xf32>
    %488 = vector.shape_cast %487 : vector<1x4x14xf32> to vector<4x14xf32>
    %c0_473 = arith.constant 0 : index
    %c0_474 = arith.constant 0 : index
    %c1650 = arith.constant 1650 : index
    %489 = vector.load %arg3[%c0_473, %c0_474, %c1650] : memref<1x4x2304xf32, #tpu.memory_space<vmem>>, vector<1x4x14xf32>
    %490 = vector.shape_cast %489 : vector<1x4x14xf32> to vector<4x14xf32>
    %491 = vector.shape_cast %488 : vector<4x14xf32> to vector<1x4x14xf32>
    tpu.vector_store %arg3[%c0_473, %c0_474, %c1650], %491 {strides = array<i32>} : memref<1x4x2304xf32, #tpu.memory_space<vmem>>, vector<1x4x14xf32>,
    %c0_475 = arith.constant 0 : index
    %c0_476 = arith.constant 0 : index
    %c160_477 = arith.constant 160 : index
    %492 = vector.load %arg2[%c0_475, %c0_476, %c160_477] : memref<1x4x256xf32, #tpu.memory_space<vmem>>, vector<1x4x14xf32>
    %493 = vector.shape_cast %492 : vector<1x4x14xf32> to vector<4x14xf32>
    %c0_478 = arith.constant 0 : index
    %c0_479 = arith.constant 0 : index
    %c1666 = arith.constant 1666 : index
    %494 = vector.load %arg3[%c0_478, %c0_479, %c1666] : memref<1x4x2304xf32, #tpu.memory_space<vmem>>, vector<1x4x14xf32>
    %495 = vector.shape_cast %494 : vector<1x4x14xf32> to vector<4x14xf32>
    %496 = vector.shape_cast %493 : vector<4x14xf32> to vector<1x4x14xf32>
    tpu.vector_store %arg3[%c0_478, %c0_479, %c1666], %496 {strides = array<i32>} : memref<1x4x2304xf32, #tpu.memory_space<vmem>>, vector<1x4x14xf32>,
    %c0_480 = arith.constant 0 : index
    %c0_481 = arith.constant 0 : index
    %c176_482 = arith.constant 176 : index
    %497 = vector.load %arg2[%c0_480, %c0_481, %c176_482] : memref<1x4x256xf32, #tpu.memory_space<vmem>>, vector<1x4x14xf32>
    %498 = vector.shape_cast %497 : vector<1x4x14xf32> to vector<4x14xf32>
    %c0_483 = arith.constant 0 : index
    %c0_484 = arith.constant 0 : index
    %c1682 = arith.constant 1682 : index
    %499 = vector.load %arg3[%c0_483, %c0_484, %c1682] : memref<1x4x2304xf32, #tpu.memory_space<vmem>>, vector<1x4x14xf32>
    %500 = vector.shape_cast %499 : vector<1x4x14xf32> to vector<4x14xf32>
    %501 = vector.shape_cast %498 : vector<4x14xf32> to vector<1x4x14xf32>
    tpu.vector_store %arg3[%c0_483, %c0_484, %c1682], %501 {strides = array<i32>} : memref<1x4x2304xf32, #tpu.memory_space<vmem>>, vector<1x4x14xf32>,
    %c0_485 = arith.constant 0 : index
    %c0_486 = arith.constant 0 : index
    %c192_487 = arith.constant 192 : index
    %502 = vector.load %arg2[%c0_485, %c0_486, %c192_487] : memref<1x4x256xf32, #tpu.memory_space<vmem>>, vector<1x4x14xf32>
    %503 = vector.shape_cast %502 : vector<1x4x14xf32> to vector<4x14xf32>
    %c0_488 = arith.constant 0 : index
    %c0_489 = arith.constant 0 : index
    %c1698 = arith.constant 1698 : index
    %504 = vector.load %arg3[%c0_488, %c0_489, %c1698] : memref<1x4x2304xf32, #tpu.memory_space<vmem>>, vector<1x4x14xf32>
    %505 = vector.shape_cast %504 : vector<1x4x14xf32> to vector<4x14xf32>
    %506 = vector.shape_cast %503 : vector<4x14xf32> to vector<1x4x14xf32>
    tpu.vector_store %arg3[%c0_488, %c0_489, %c1698], %506 {strides = array<i32>} : memref<1x4x2304xf32, #tpu.memory_space<vmem>>, vector<1x4x14xf32>,
    %c0_490 = arith.constant 0 : index
    %c0_491 = arith.constant 0 : index
    %c208_492 = arith.constant 208 : index
    %507 = vector.load %arg2[%c0_490, %c0_491, %c208_492] : memref<1x4x256xf32, #tpu.memory_space<vmem>>, vector<1x4x14xf32>
    %508 = vector.shape_cast %507 : vector<1x4x14xf32> to vector<4x14xf32>
    %c0_493 = arith.constant 0 : index
    %c0_494 = arith.constant 0 : index
    %c1714 = arith.constant 1714 : index
    %509 = vector.load %arg3[%c0_493, %c0_494, %c1714] : memref<1x4x2304xf32, #tpu.memory_space<vmem>>, vector<1x4x14xf32>
    %510 = vector.shape_cast %509 : vector<1x4x14xf32> to vector<4x14xf32>
    %511 = vector.shape_cast %508 : vector<4x14xf32> to vector<1x4x14xf32>
    tpu.vector_store %arg3[%c0_493, %c0_494, %c1714], %511 {strides = array<i32>} : memref<1x4x2304xf32, #tpu.memory_space<vmem>>, vector<1x4x14xf32>,
    %c0_495 = arith.constant 0 : index
    %c0_496 = arith.constant 0 : index
    %c224_497 = arith.constant 224 : index
    %512 = vector.load %arg2[%c0_495, %c0_496, %c224_497] : memref<1x4x256xf32, #tpu.memory_space<vmem>>, vector<1x4x14xf32>
    %513 = vector.shape_cast %512 : vector<1x4x14xf32> to vector<4x14xf32>
    %c0_498 = arith.constant 0 : index
    %c0_499 = arith.constant 0 : index
    %c1730 = arith.constant 1730 : index
    %514 = vector.load %arg3[%c0_498, %c0_499, %c1730] : memref<1x4x2304xf32, #tpu.memory_space<vmem>>, vector<1x4x14xf32>
    %515 = vector.shape_cast %514 : vector<1x4x14xf32> to vector<4x14xf32>
    %516 = vector.shape_cast %513 : vector<4x14xf32> to vector<1x4x14xf32>
    tpu.vector_store %arg3[%c0_498, %c0_499, %c1730], %516 {strides = array<i32>} : memref<1x4x2304xf32, #tpu.memory_space<vmem>>, vector<1x4x14xf32>,
    %c0_500 = arith.constant 0 : index
    %c0_501 = arith.constant 0 : index
    %c240_502 = arith.constant 240 : index
    %517 = vector.load %arg2[%c0_500, %c0_501, %c240_502] : memref<1x4x256xf32, #tpu.memory_space<vmem>>, vector<1x4x14xf32>
    %518 = vector.shape_cast %517 : vector<1x4x14xf32> to vector<4x14xf32>
    %c0_503 = arith.constant 0 : index
    %c0_504 = arith.constant 0 : index
    %c1746 = arith.constant 1746 : index
    %519 = vector.load %arg3[%c0_503, %c0_504, %c1746] : memref<1x4x2304xf32, #tpu.memory_space<vmem>>, vector<1x4x14xf32>
    %520 = vector.shape_cast %519 : vector<1x4x14xf32> to vector<4x14xf32>
    %521 = vector.shape_cast %518 : vector<4x14xf32> to vector<1x4x14xf32>
    tpu.vector_store %arg3[%c0_503, %c0_504, %c1746], %521 {strides = array<i32>} : memref<1x4x2304xf32, #tpu.memory_space<vmem>>, vector<1x4x14xf32>,
    %c0_505 = arith.constant 0 : index
    %c0_506 = arith.constant 0 : index
    %c32_507 = arith.constant 32 : index
    %522 = vector.load %arg2[%c0_505, %c0_506, %c32_507] : memref<1x4x256xf32, #tpu.memory_space<vmem>>, vector<1x4x16xf32>
    %523 = vector.shape_cast %522 : vector<1x4x16xf32> to vector<4x16xf32>
    %c0_508 = arith.constant 0 : index
    %c0_509 = arith.constant 0 : index
    %c1792 = arith.constant 1792 : index
    %524 = vector.load %arg3[%c0_508, %c0_509, %c1792] : memref<1x4x2304xf32, #tpu.memory_space<vmem>>, vector<1x4x16xf32>
    %525 = vector.shape_cast %524 : vector<1x4x16xf32> to vector<4x16xf32>
    %526 = vector.shape_cast %523 : vector<4x16xf32> to vector<1x4x16xf32>
    tpu.vector_store %arg3[%c0_508, %c0_509, %c1792], %526 {strides = array<i32>} : memref<1x4x2304xf32, #tpu.memory_space<vmem>>, vector<1x4x16xf32>,
    %c0_510 = arith.constant 0 : index
    %c0_511 = arith.constant 0 : index
    %c48_512 = arith.constant 48 : index
    %527 = vector.load %arg2[%c0_510, %c0_511, %c48_512] : memref<1x4x256xf32, #tpu.memory_space<vmem>>, vector<1x4x16xf32>
    %528 = vector.shape_cast %527 : vector<1x4x16xf32> to vector<4x16xf32>
    %c0_513 = arith.constant 0 : index
    %c0_514 = arith.constant 0 : index
    %c1808 = arith.constant 1808 : index
    %529 = vector.load %arg3[%c0_513, %c0_514, %c1808] : memref<1x4x2304xf32, #tpu.memory_space<vmem>>, vector<1x4x16xf32>
    %530 = vector.shape_cast %529 : vector<1x4x16xf32> to vector<4x16xf32>
    %531 = vector.shape_cast %528 : vector<4x16xf32> to vector<1x4x16xf32>
    tpu.vector_store %arg3[%c0_513, %c0_514, %c1808], %531 {strides = array<i32>} : memref<1x4x2304xf32, #tpu.memory_space<vmem>>, vector<1x4x16xf32>,
    %c0_515 = arith.constant 0 : index
    %c0_516 = arith.constant 0 : index
    %c64_517 = arith.constant 64 : index
    %532 = vector.load %arg2[%c0_515, %c0_516, %c64_517] : memref<1x4x256xf32, #tpu.memory_space<vmem>>, vector<1x4x16xf32>
    %533 = vector.shape_cast %532 : vector<1x4x16xf32> to vector<4x16xf32>
    %c0_518 = arith.constant 0 : index
    %c0_519 = arith.constant 0 : index
    %c1824 = arith.constant 1824 : index
    %534 = vector.load %arg3[%c0_518, %c0_519, %c1824] : memref<1x4x2304xf32, #tpu.memory_space<vmem>>, vector<1x4x16xf32>
    %535 = vector.shape_cast %534 : vector<1x4x16xf32> to vector<4x16xf32>
    %536 = vector.shape_cast %533 : vector<4x16xf32> to vector<1x4x16xf32>
    tpu.vector_store %arg3[%c0_518, %c0_519, %c1824], %536 {strides = array<i32>} : memref<1x4x2304xf32, #tpu.memory_space<vmem>>, vector<1x4x16xf32>,
    %c0_520 = arith.constant 0 : index
    %c0_521 = arith.constant 0 : index
    %c80_522 = arith.constant 80 : index
    %537 = vector.load %arg2[%c0_520, %c0_521, %c80_522] : memref<1x4x256xf32, #tpu.memory_space<vmem>>, vector<1x4x16xf32>
    %538 = vector.shape_cast %537 : vector<1x4x16xf32> to vector<4x16xf32>
    %c0_523 = arith.constant 0 : index
    %c0_524 = arith.constant 0 : index
    %c1840 = arith.constant 1840 : index
    %539 = vector.load %arg3[%c0_523, %c0_524, %c1840] : memref<1x4x2304xf32, #tpu.memory_space<vmem>>, vector<1x4x16xf32>
    %540 = vector.shape_cast %539 : vector<1x4x16xf32> to vector<4x16xf32>
    %541 = vector.shape_cast %538 : vector<4x16xf32> to vector<1x4x16xf32>
    tpu.vector_store %arg3[%c0_523, %c0_524, %c1840], %541 {strides = array<i32>} : memref<1x4x2304xf32, #tpu.memory_space<vmem>>, vector<1x4x16xf32>,
    %c0_525 = arith.constant 0 : index
    %c0_526 = arith.constant 0 : index
    %c96_527 = arith.constant 96 : index
    %542 = vector.load %arg2[%c0_525, %c0_526, %c96_527] : memref<1x4x256xf32, #tpu.memory_space<vmem>>, vector<1x4x16xf32>
    %543 = vector.shape_cast %542 : vector<1x4x16xf32> to vector<4x16xf32>
    %c0_528 = arith.constant 0 : index
    %c0_529 = arith.constant 0 : index
    %c1856 = arith.constant 1856 : index
    %544 = vector.load %arg3[%c0_528, %c0_529, %c1856] : memref<1x4x2304xf32, #tpu.memory_space<vmem>>, vector<1x4x16xf32>
    %545 = vector.shape_cast %544 : vector<1x4x16xf32> to vector<4x16xf32>
    %546 = vector.shape_cast %543 : vector<4x16xf32> to vector<1x4x16xf32>
    tpu.vector_store %arg3[%c0_528, %c0_529, %c1856], %546 {strides = array<i32>} : memref<1x4x2304xf32, #tpu.memory_space<vmem>>, vector<1x4x16xf32>,
    %c0_530 = arith.constant 0 : index
    %c0_531 = arith.constant 0 : index
    %c112_532 = arith.constant 112 : index
    %547 = vector.load %arg2[%c0_530, %c0_531, %c112_532] : memref<1x4x256xf32, #tpu.memory_space<vmem>>, vector<1x4x16xf32>
    %548 = vector.shape_cast %547 : vector<1x4x16xf32> to vector<4x16xf32>
    %c0_533 = arith.constant 0 : index
    %c0_534 = arith.constant 0 : index
    %c1872 = arith.constant 1872 : index
    %549 = vector.load %arg3[%c0_533, %c0_534, %c1872] : memref<1x4x2304xf32, #tpu.memory_space<vmem>>, vector<1x4x16xf32>
    %550 = vector.shape_cast %549 : vector<1x4x16xf32> to vector<4x16xf32>
    %551 = vector.shape_cast %548 : vector<4x16xf32> to vector<1x4x16xf32>
    tpu.vector_store %arg3[%c0_533, %c0_534, %c1872], %551 {strides = array<i32>} : memref<1x4x2304xf32, #tpu.memory_space<vmem>>, vector<1x4x16xf32>,
    %c0_535 = arith.constant 0 : index
    %c0_536 = arith.constant 0 : index
    %c128_537 = arith.constant 128 : index
    %552 = vector.load %arg2[%c0_535, %c0_536, %c128_537] : memref<1x4x256xf32, #tpu.memory_space<vmem>>, vector<1x4x16xf32>
    %553 = vector.shape_cast %552 : vector<1x4x16xf32> to vector<4x16xf32>
    %c0_538 = arith.constant 0 : index
    %c0_539 = arith.constant 0 : index
    %c1888 = arith.constant 1888 : index
    %554 = vector.load %arg3[%c0_538, %c0_539, %c1888] : memref<1x4x2304xf32, #tpu.memory_space<vmem>>, vector<1x4x16xf32>
    %555 = vector.shape_cast %554 : vector<1x4x16xf32> to vector<4x16xf32>
    %556 = vector.shape_cast %553 : vector<4x16xf32> to vector<1x4x16xf32>
    tpu.vector_store %arg3[%c0_538, %c0_539, %c1888], %556 {strides = array<i32>} : memref<1x4x2304xf32, #tpu.memory_space<vmem>>, vector<1x4x16xf32>,
    %c0_540 = arith.constant 0 : index
    %c0_541 = arith.constant 0 : index
    %c144_542 = arith.constant 144 : index
    %557 = vector.load %arg2[%c0_540, %c0_541, %c144_542] : memref<1x4x256xf32, #tpu.memory_space<vmem>>, vector<1x4x16xf32>
    %558 = vector.shape_cast %557 : vector<1x4x16xf32> to vector<4x16xf32>
    %c0_543 = arith.constant 0 : index
    %c0_544 = arith.constant 0 : index
    %c1904 = arith.constant 1904 : index
    %559 = vector.load %arg3[%c0_543, %c0_544, %c1904] : memref<1x4x2304xf32, #tpu.memory_space<vmem>>, vector<1x4x16xf32>
    %560 = vector.shape_cast %559 : vector<1x4x16xf32> to vector<4x16xf32>
    %561 = vector.shape_cast %558 : vector<4x16xf32> to vector<1x4x16xf32>
    tpu.vector_store %arg3[%c0_543, %c0_544, %c1904], %561 {strides = array<i32>} : memref<1x4x2304xf32, #tpu.memory_space<vmem>>, vector<1x4x16xf32>,
    %c0_545 = arith.constant 0 : index
    %c0_546 = arith.constant 0 : index
    %c160_547 = arith.constant 160 : index
    %562 = vector.load %arg2[%c0_545, %c0_546, %c160_547] : memref<1x4x256xf32, #tpu.memory_space<vmem>>, vector<1x4x16xf32>
    %563 = vector.shape_cast %562 : vector<1x4x16xf32> to vector<4x16xf32>
    %c0_548 = arith.constant 0 : index
    %c0_549 = arith.constant 0 : index
    %c1920 = arith.constant 1920 : index
    %564 = vector.load %arg3[%c0_548, %c0_549, %c1920] : memref<1x4x2304xf32, #tpu.memory_space<vmem>>, vector<1x4x16xf32>
    %565 = vector.shape_cast %564 : vector<1x4x16xf32> to vector<4x16xf32>
    %566 = vector.shape_cast %563 : vector<4x16xf32> to vector<1x4x16xf32>
    tpu.vector_store %arg3[%c0_548, %c0_549, %c1920], %566 {strides = array<i32>} : memref<1x4x2304xf32, #tpu.memory_space<vmem>>, vector<1x4x16xf32>,
    %c0_550 = arith.constant 0 : index
    %c0_551 = arith.constant 0 : index
    %c176_552 = arith.constant 176 : index
    %567 = vector.load %arg2[%c0_550, %c0_551, %c176_552] : memref<1x4x256xf32, #tpu.memory_space<vmem>>, vector<1x4x16xf32>
    %568 = vector.shape_cast %567 : vector<1x4x16xf32> to vector<4x16xf32>
    %c0_553 = arith.constant 0 : index
    %c0_554 = arith.constant 0 : index
    %c1936 = arith.constant 1936 : index
    %569 = vector.load %arg3[%c0_553, %c0_554, %c1936] : memref<1x4x2304xf32, #tpu.memory_space<vmem>>, vector<1x4x16xf32>
    %570 = vector.shape_cast %569 : vector<1x4x16xf32> to vector<4x16xf32>
    %571 = vector.shape_cast %568 : vector<4x16xf32> to vector<1x4x16xf32>
    tpu.vector_store %arg3[%c0_553, %c0_554, %c1936], %571 {strides = array<i32>} : memref<1x4x2304xf32, #tpu.memory_space<vmem>>, vector<1x4x16xf32>,
    %c0_555 = arith.constant 0 : index
    %c0_556 = arith.constant 0 : index
    %c192_557 = arith.constant 192 : index
    %572 = vector.load %arg2[%c0_555, %c0_556, %c192_557] : memref<1x4x256xf32, #tpu.memory_space<vmem>>, vector<1x4x16xf32>
    %573 = vector.shape_cast %572 : vector<1x4x16xf32> to vector<4x16xf32>
    %c0_558 = arith.constant 0 : index
    %c0_559 = arith.constant 0 : index
    %c1952 = arith.constant 1952 : index
    %574 = vector.load %arg3[%c0_558, %c0_559, %c1952] : memref<1x4x2304xf32, #tpu.memory_space<vmem>>, vector<1x4x16xf32>
    %575 = vector.shape_cast %574 : vector<1x4x16xf32> to vector<4x16xf32>
    %576 = vector.shape_cast %573 : vector<4x16xf32> to vector<1x4x16xf32>
    tpu.vector_store %arg3[%c0_558, %c0_559, %c1952], %576 {strides = array<i32>} : memref<1x4x2304xf32, #tpu.memory_space<vmem>>, vector<1x4x16xf32>,
    %c0_560 = arith.constant 0 : index
    %c0_561 = arith.constant 0 : index
    %c208_562 = arith.constant 208 : index
    %577 = vector.load %arg2[%c0_560, %c0_561, %c208_562] : memref<1x4x256xf32, #tpu.memory_space<vmem>>, vector<1x4x16xf32>
    %578 = vector.shape_cast %577 : vector<1x4x16xf32> to vector<4x16xf32>
    %c0_563 = arith.constant 0 : index
    %c0_564 = arith.constant 0 : index
    %c1968 = arith.constant 1968 : index
    %579 = vector.load %arg3[%c0_563, %c0_564, %c1968] : memref<1x4x2304xf32, #tpu.memory_space<vmem>>, vector<1x4x16xf32>
    %580 = vector.shape_cast %579 : vector<1x4x16xf32> to vector<4x16xf32>
    %581 = vector.shape_cast %578 : vector<4x16xf32> to vector<1x4x16xf32>
    tpu.vector_store %arg3[%c0_563, %c0_564, %c1968], %581 {strides = array<i32>} : memref<1x4x2304xf32, #tpu.memory_space<vmem>>, vector<1x4x16xf32>,
    %c0_565 = arith.constant 0 : index
    %c0_566 = arith.constant 0 : index
    %c224_567 = arith.constant 224 : index
    %582 = vector.load %arg2[%c0_565, %c0_566, %c224_567] : memref<1x4x256xf32, #tpu.memory_space<vmem>>, vector<1x4x16xf32>
    %583 = vector.shape_cast %582 : vector<1x4x16xf32> to vector<4x16xf32>
    %c0_568 = arith.constant 0 : index
    %c0_569 = arith.constant 0 : index
    %c1984 = arith.constant 1984 : index
    %584 = vector.load %arg3[%c0_568, %c0_569, %c1984] : memref<1x4x2304xf32, #tpu.memory_space<vmem>>, vector<1x4x16xf32>
    %585 = vector.shape_cast %584 : vector<1x4x16xf32> to vector<4x16xf32>
    %586 = vector.shape_cast %583 : vector<4x16xf32> to vector<1x4x16xf32>
    tpu.vector_store %arg3[%c0_568, %c0_569, %c1984], %586 {strides = array<i32>} : memref<1x4x2304xf32, #tpu.memory_space<vmem>>, vector<1x4x16xf32>,
    %c0_570 = arith.constant 0 : index
    %c0_571 = arith.constant 0 : index
    %c240_572 = arith.constant 240 : index
    %587 = vector.load %arg2[%c0_570, %c0_571, %c240_572] : memref<1x4x256xf32, #tpu.memory_space<vmem>>, vector<1x4x16xf32>
    %588 = vector.shape_cast %587 : vector<1x4x16xf32> to vector<4x16xf32>
    %c0_573 = arith.constant 0 : index
    %c0_574 = arith.constant 0 : index
    %c2000 = arith.constant 2000 : index
    %589 = vector.load %arg3[%c0_573, %c0_574, %c2000] : memref<1x4x2304xf32, #tpu.memory_space<vmem>>, vector<1x4x16xf32>
    %590 = vector.shape_cast %589 : vector<1x4x16xf32> to vector<4x16xf32>
    %591 = vector.shape_cast %588 : vector<4x16xf32> to vector<1x4x16xf32>
    tpu.vector_store %arg3[%c0_573, %c0_574, %c2000], %591 {strides = array<i32>} : memref<1x4x2304xf32, #tpu.memory_space<vmem>>, vector<1x4x16xf32>,
    %c0_575 = arith.constant 0 : index
    %c0_576 = arith.constant 0 : index
    %c34_577 = arith.constant 34 : index
    %592 = vector.load %arg2[%c0_575, %c0_576, %c34_577] : memref<1x4x256xf32, #tpu.memory_space<vmem>>, vector<1x4x14xf32>
    %593 = vector.shape_cast %592 : vector<1x4x14xf32> to vector<4x14xf32>
    %c0_578 = arith.constant 0 : index
    %c0_579 = arith.constant 0 : index
    %c2048 = arith.constant 2048 : index
    %594 = vector.load %arg3[%c0_578, %c0_579, %c2048] : memref<1x4x2304xf32, #tpu.memory_space<vmem>>, vector<1x4x14xf32>
    %595 = vector.shape_cast %594 : vector<1x4x14xf32> to vector<4x14xf32>
    %596 = vector.shape_cast %593 : vector<4x14xf32> to vector<1x4x14xf32>
    tpu.vector_store %arg3[%c0_578, %c0_579, %c2048], %596 {strides = array<i32>} : memref<1x4x2304xf32, #tpu.memory_space<vmem>>, vector<1x4x14xf32>,
    %c0_580 = arith.constant 0 : index
    %c0_581 = arith.constant 0 : index
    %c50_582 = arith.constant 50 : index
    %597 = vector.load %arg2[%c0_580, %c0_581, %c50_582] : memref<1x4x256xf32, #tpu.memory_space<vmem>>, vector<1x4x14xf32>
    %598 = vector.shape_cast %597 : vector<1x4x14xf32> to vector<4x14xf32>
    %c0_583 = arith.constant 0 : index
    %c0_584 = arith.constant 0 : index
    %c2064 = arith.constant 2064 : index
    %599 = vector.load %arg3[%c0_583, %c0_584, %c2064] : memref<1x4x2304xf32, #tpu.memory_space<vmem>>, vector<1x4x14xf32>
    %600 = vector.shape_cast %599 : vector<1x4x14xf32> to vector<4x14xf32>
    %601 = vector.shape_cast %598 : vector<4x14xf32> to vector<1x4x14xf32>
    tpu.vector_store %arg3[%c0_583, %c0_584, %c2064], %601 {strides = array<i32>} : memref<1x4x2304xf32, #tpu.memory_space<vmem>>, vector<1x4x14xf32>,
    %c0_585 = arith.constant 0 : index
    %c0_586 = arith.constant 0 : index
    %c66_587 = arith.constant 66 : index
    %602 = vector.load %arg2[%c0_585, %c0_586, %c66_587] : memref<1x4x256xf32, #tpu.memory_space<vmem>>, vector<1x4x14xf32>
    %603 = vector.shape_cast %602 : vector<1x4x14xf32> to vector<4x14xf32>
    %c0_588 = arith.constant 0 : index
    %c0_589 = arith.constant 0 : index
    %c2080 = arith.constant 2080 : index
    %604 = vector.load %arg3[%c0_588, %c0_589, %c2080] : memref<1x4x2304xf32, #tpu.memory_space<vmem>>, vector<1x4x14xf32>
    %605 = vector.shape_cast %604 : vector<1x4x14xf32> to vector<4x14xf32>
    %606 = vector.shape_cast %603 : vector<4x14xf32> to vector<1x4x14xf32>
    tpu.vector_store %arg3[%c0_588, %c0_589, %c2080], %606 {strides = array<i32>} : memref<1x4x2304xf32, #tpu.memory_space<vmem>>, vector<1x4x14xf32>,
    %c0_590 = arith.constant 0 : index
    %c0_591 = arith.constant 0 : index
    %c82_592 = arith.constant 82 : index
    %607 = vector.load %arg2[%c0_590, %c0_591, %c82_592] : memref<1x4x256xf32, #tpu.memory_space<vmem>>, vector<1x4x14xf32>
    %608 = vector.shape_cast %607 : vector<1x4x14xf32> to vector<4x14xf32>
    %c0_593 = arith.constant 0 : index
    %c0_594 = arith.constant 0 : index
    %c2096 = arith.constant 2096 : index
    %609 = vector.load %arg3[%c0_593, %c0_594, %c2096] : memref<1x4x2304xf32, #tpu.memory_space<vmem>>, vector<1x4x14xf32>
    %610 = vector.shape_cast %609 : vector<1x4x14xf32> to vector<4x14xf32>
    %611 = vector.shape_cast %608 : vector<4x14xf32> to vector<1x4x14xf32>
    tpu.vector_store %arg3[%c0_593, %c0_594, %c2096], %611 {strides = array<i32>} : memref<1x4x2304xf32, #tpu.memory_space<vmem>>, vector<1x4x14xf32>,
    %c0_595 = arith.constant 0 : index
    %c0_596 = arith.constant 0 : index
    %c98_597 = arith.constant 98 : index
    %612 = vector.load %arg2[%c0_595, %c0_596, %c98_597] : memref<1x4x256xf32, #tpu.memory_space<vmem>>, vector<1x4x14xf32>
    %613 = vector.shape_cast %612 : vector<1x4x14xf32> to vector<4x14xf32>
    %c0_598 = arith.constant 0 : index
    %c0_599 = arith.constant 0 : index
    %c2112 = arith.constant 2112 : index
    %614 = vector.load %arg3[%c0_598, %c0_599, %c2112] : memref<1x4x2304xf32, #tpu.memory_space<vmem>>, vector<1x4x14xf32>
    %615 = vector.shape_cast %614 : vector<1x4x14xf32> to vector<4x14xf32>
    %616 = vector.shape_cast %613 : vector<4x14xf32> to vector<1x4x14xf32>
    tpu.vector_store %arg3[%c0_598, %c0_599, %c2112], %616 {strides = array<i32>} : memref<1x4x2304xf32, #tpu.memory_space<vmem>>, vector<1x4x14xf32>,
    %c0_600 = arith.constant 0 : index
    %c0_601 = arith.constant 0 : index
    %c114_602 = arith.constant 114 : index
    %617 = vector.load %arg2[%c0_600, %c0_601, %c114_602] : memref<1x4x256xf32, #tpu.memory_space<vmem>>, vector<1x4x14xf32>
    %618 = vector.shape_cast %617 : vector<1x4x14xf32> to vector<4x14xf32>
    %c0_603 = arith.constant 0 : index
    %c0_604 = arith.constant 0 : index
    %c2128 = arith.constant 2128 : index
    %619 = vector.load %arg3[%c0_603, %c0_604, %c2128] : memref<1x4x2304xf32, #tpu.memory_space<vmem>>, vector<1x4x14xf32>
    %620 = vector.shape_cast %619 : vector<1x4x14xf32> to vector<4x14xf32>
    %621 = vector.shape_cast %618 : vector<4x14xf32> to vector<1x4x14xf32>
    tpu.vector_store %arg3[%c0_603, %c0_604, %c2128], %621 {strides = array<i32>} : memref<1x4x2304xf32, #tpu.memory_space<vmem>>, vector<1x4x14xf32>,
    %c0_605 = arith.constant 0 : index
    %c0_606 = arith.constant 0 : index
    %c130_607 = arith.constant 130 : index
    %622 = vector.load %arg2[%c0_605, %c0_606, %c130_607] : memref<1x4x256xf32, #tpu.memory_space<vmem>>, vector<1x4x14xf32>
    %623 = vector.shape_cast %622 : vector<1x4x14xf32> to vector<4x14xf32>
    %c0_608 = arith.constant 0 : index
    %c0_609 = arith.constant 0 : index
    %c2144 = arith.constant 2144 : index
    %624 = vector.load %arg3[%c0_608, %c0_609, %c2144] : memref<1x4x2304xf32, #tpu.memory_space<vmem>>, vector<1x4x14xf32>
    %625 = vector.shape_cast %624 : vector<1x4x14xf32> to vector<4x14xf32>
    %626 = vector.shape_cast %623 : vector<4x14xf32> to vector<1x4x14xf32>
    tpu.vector_store %arg3[%c0_608, %c0_609, %c2144], %626 {strides = array<i32>} : memref<1x4x2304xf32, #tpu.memory_space<vmem>>, vector<1x4x14xf32>,
    %c0_610 = arith.constant 0 : index
    %c0_611 = arith.constant 0 : index
    %c146_612 = arith.constant 146 : index
    %627 = vector.load %arg2[%c0_610, %c0_611, %c146_612] : memref<1x4x256xf32, #tpu.memory_space<vmem>>, vector<1x4x14xf32>
    %628 = vector.shape_cast %627 : vector<1x4x14xf32> to vector<4x14xf32>
    %c0_613 = arith.constant 0 : index
    %c0_614 = arith.constant 0 : index
    %c2160 = arith.constant 2160 : index
    %629 = vector.load %arg3[%c0_613, %c0_614, %c2160] : memref<1x4x2304xf32, #tpu.memory_space<vmem>>, vector<1x4x14xf32>
    %630 = vector.shape_cast %629 : vector<1x4x14xf32> to vector<4x14xf32>
    %631 = vector.shape_cast %628 : vector<4x14xf32> to vector<1x4x14xf32>
    tpu.vector_store %arg3[%c0_613, %c0_614, %c2160], %631 {strides = array<i32>} : memref<1x4x2304xf32, #tpu.memory_space<vmem>>, vector<1x4x14xf32>,
    %c0_615 = arith.constant 0 : index
    %c0_616 = arith.constant 0 : index
    %c162_617 = arith.constant 162 : index
    %632 = vector.load %arg2[%c0_615, %c0_616, %c162_617] : memref<1x4x256xf32, #tpu.memory_space<vmem>>, vector<1x4x14xf32>
    %633 = vector.shape_cast %632 : vector<1x4x14xf32> to vector<4x14xf32>
    %c0_618 = arith.constant 0 : index
    %c0_619 = arith.constant 0 : index
    %c2176 = arith.constant 2176 : index
    %634 = vector.load %arg3[%c0_618, %c0_619, %c2176] : memref<1x4x2304xf32, #tpu.memory_space<vmem>>, vector<1x4x14xf32>
    %635 = vector.shape_cast %634 : vector<1x4x14xf32> to vector<4x14xf32>
    %636 = vector.shape_cast %633 : vector<4x14xf32> to vector<1x4x14xf32>
    tpu.vector_store %arg3[%c0_618, %c0_619, %c2176], %636 {strides = array<i32>} : memref<1x4x2304xf32, #tpu.memory_space<vmem>>, vector<1x4x14xf32>,
    %c0_620 = arith.constant 0 : index
    %c0_621 = arith.constant 0 : index
    %c178_622 = arith.constant 178 : index
    %637 = vector.load %arg2[%c0_620, %c0_621, %c178_622] : memref<1x4x256xf32, #tpu.memory_space<vmem>>, vector<1x4x14xf32>
    %638 = vector.shape_cast %637 : vector<1x4x14xf32> to vector<4x14xf32>
    %c0_623 = arith.constant 0 : index
    %c0_624 = arith.constant 0 : index
    %c2192 = arith.constant 2192 : index
    %639 = vector.load %arg3[%c0_623, %c0_624, %c2192] : memref<1x4x2304xf32, #tpu.memory_space<vmem>>, vector<1x4x14xf32>
    %640 = vector.shape_cast %639 : vector<1x4x14xf32> to vector<4x14xf32>
    %641 = vector.shape_cast %638 : vector<4x14xf32> to vector<1x4x14xf32>
    tpu.vector_store %arg3[%c0_623, %c0_624, %c2192], %641 {strides = array<i32>} : memref<1x4x2304xf32, #tpu.memory_space<vmem>>, vector<1x4x14xf32>,
    %c0_625 = arith.constant 0 : index
    %c0_626 = arith.constant 0 : index
    %c194_627 = arith.constant 194 : index
    %642 = vector.load %arg2[%c0_625, %c0_626, %c194_627] : memref<1x4x256xf32, #tpu.memory_space<vmem>>, vector<1x4x14xf32>
    %643 = vector.shape_cast %642 : vector<1x4x14xf32> to vector<4x14xf32>
    %c0_628 = arith.constant 0 : index
    %c0_629 = arith.constant 0 : index
    %c2208 = arith.constant 2208 : index
    %644 = vector.load %arg3[%c0_628, %c0_629, %c2208] : memref<1x4x2304xf32, #tpu.memory_space<vmem>>, vector<1x4x14xf32>
    %645 = vector.shape_cast %644 : vector<1x4x14xf32> to vector<4x14xf32>
    %646 = vector.shape_cast %643 : vector<4x14xf32> to vector<1x4x14xf32>
    tpu.vector_store %arg3[%c0_628, %c0_629, %c2208], %646 {strides = array<i32>} : memref<1x4x2304xf32, #tpu.memory_space<vmem>>, vector<1x4x14xf32>,
    %c0_630 = arith.constant 0 : index
    %c0_631 = arith.constant 0 : index
    %c210_632 = arith.constant 210 : index
    %647 = vector.load %arg2[%c0_630, %c0_631, %c210_632] : memref<1x4x256xf32, #tpu.memory_space<vmem>>, vector<1x4x14xf32>
    %648 = vector.shape_cast %647 : vector<1x4x14xf32> to vector<4x14xf32>
    %c0_633 = arith.constant 0 : index
    %c0_634 = arith.constant 0 : index
    %c2224 = arith.constant 2224 : index
    %649 = vector.load %arg3[%c0_633, %c0_634, %c2224] : memref<1x4x2304xf32, #tpu.memory_space<vmem>>, vector<1x4x14xf32>
    %650 = vector.shape_cast %649 : vector<1x4x14xf32> to vector<4x14xf32>
    %651 = vector.shape_cast %648 : vector<4x14xf32> to vector<1x4x14xf32>
    tpu.vector_store %arg3[%c0_633, %c0_634, %c2224], %651 {strides = array<i32>} : memref<1x4x2304xf32, #tpu.memory_space<vmem>>, vector<1x4x14xf32>,
    %c0_635 = arith.constant 0 : index
    %c0_636 = arith.constant 0 : index
    %c226_637 = arith.constant 226 : index
    %652 = vector.load %arg2[%c0_635, %c0_636, %c226_637] : memref<1x4x256xf32, #tpu.memory_space<vmem>>, vector<1x4x14xf32>
    %653 = vector.shape_cast %652 : vector<1x4x14xf32> to vector<4x14xf32>
    %c0_638 = arith.constant 0 : index
    %c0_639 = arith.constant 0 : index
    %c2240 = arith.constant 2240 : index
    %654 = vector.load %arg3[%c0_638, %c0_639, %c2240] : memref<1x4x2304xf32, #tpu.memory_space<vmem>>, vector<1x4x14xf32>
    %655 = vector.shape_cast %654 : vector<1x4x14xf32> to vector<4x14xf32>
    %656 = vector.shape_cast %653 : vector<4x14xf32> to vector<1x4x14xf32>
    tpu.vector_store %arg3[%c0_638, %c0_639, %c2240], %656 {strides = array<i32>} : memref<1x4x2304xf32, #tpu.memory_space<vmem>>, vector<1x4x14xf32>,
    %c0_640 = arith.constant 0 : index
    %c0_641 = arith.constant 0 : index
    %c242_642 = arith.constant 242 : index
    %657 = vector.load %arg2[%c0_640, %c0_641, %c242_642] : memref<1x4x256xf32, #tpu.memory_space<vmem>>, vector<1x4x14xf32>
    %658 = vector.shape_cast %657 : vector<1x4x14xf32> to vector<4x14xf32>
    %c0_643 = arith.constant 0 : index
    %c0_644 = arith.constant 0 : index
    %c2256 = arith.constant 2256 : index
    %659 = vector.load %arg3[%c0_643, %c0_644, %c2256] : memref<1x4x2304xf32, #tpu.memory_space<vmem>>, vector<1x4x14xf32>
    %660 = vector.shape_cast %659 : vector<1x4x14xf32> to vector<4x14xf32>
    %661 = vector.shape_cast %658 : vector<4x14xf32> to vector<1x4x14xf32>
    tpu.vector_store %arg3[%c0_643, %c0_644, %c2256], %661 {strides = array<i32>} : memref<1x4x2304xf32, #tpu.memory_space<vmem>>, vector<1x4x14xf32>,
    return
  }
  func.func @transform_0(%arg0: i32, %arg1: i32) -> (i32, i32, i32) {
    %c0_i32 = arith.constant 0 : i32
    %c0_i32_0 = arith.constant 0 : i32
    return %arg0, %arg1, %c0_i32 : i32, i32, i32
  }
  func.func @transform_1(%arg0: i32, %arg1: i32) -> (i32, i32, i32) {
    %c0_i32 = arith.constant 0 : i32
    %c0_i32_0 = arith.constant 0 : i32
    return %arg0, %arg1, %c0_i32 : i32, i32, i32
  }
}

</mosaic_0001>

<llo_original>
// kernel: tpu_custom_call.1
$region0: #{tpu_custom_call.1}
  #allocation0 [shape = 'u32[]', space=smem, size = 0x4, offset = 0x4, fixed_abs, tag = 'smem constant byte address 0x4 - core index']
  #allocation1 [shape = 'u32[144,128]{1,0:T(1,128)}', space=vmem, size = 0x12000, scoped, tag = 'internal scratch']
  %s0 = inlined_call_operand.hbm [shape: f32[2,4,256], index: 0, kind: input, shape index: {}]
  %s1 = inlined_call_operand.hbm [shape: f32[2,4,2304], index: 1, kind: output, shape index: {}]
  %s2 = sld [smem:[#allocation0]]
  $region41: #{tpu_custom_call.1} parent=0
    _
  %s4 = ssub.s32 1, %s2
  %s5 = scalar_select 0, %s4, %s2
  $region1: #{tpu_custom_call.1} parent=0
    #allocation2 [shape = 'u8[8192]{0}', space=vmem, size = 0x2000, scoped, tag = 'input window, operand 0']
    #allocation3 [shape = 's32[2]{0}', space=sflag, size = 0x8, scoped, tag = 'scoped memory for tpu_custom_call.1']
    #allocation4 [shape = 's32[2]{0}', space=sflag, size = 0x8, scoped, tag = 'scoped memory for tpu_custom_call.1']
    #allocation5 [shape = 'u8[73728]{0}', space=vmem, size = 0x12000, scoped, tag = 'output window, operand 0']
    %6 = vsyncpa [#allocation3], 0
    %s7 = scalar_lea.sflag [#allocation3], 1
    %8 = vsyncpa %s7, 0
    %9 = vsyncpa [#allocation4], 0
    %s10 = scalar_lea.sflag [#allocation4], 1
    %11 = vsyncpa %s10, 0
    loop: start=0, step=1, limit=4
    $region2: #{tpu_custom_call.1} parent=1 // loop_pre_header
      _
    $region3: #{tpu_custom_call.1} parent=1 // loop_header
      %s13 = sphi 0, %s17
      %p14 = scmp.ge.s32.totalorder %s13, 4
      %s20 = sphi 0, %s32
      %s21 = sphi 0, %s28
      %s22 = sphi 0, %s20
      %s23 = sphi 0, %s21
      %s24 = sphi 0, %s22
      %s25 = sphi 0, %s23
      %s37 = sphi 0, %s39
      %s40 = sphi 0, %s37
      %s41 = sphi 0, %s40
      %s57 = sphi 0, %s41
      %s65 = sphi 0, %s67
      %s68 = sphi 0, %s65
      %s69 = sphi 0, %s68
      %s85 = sphi 0, %s69
    $region4: #{tpu_custom_call.1} parent=1 // loop_header_branch
      %16 = sbr.rel (%p14) target = $region8
    $region5: #{tpu_custom_call.1} parent=1 // loop_body
      %s18 = ssub.s32 %s13, 1
      %s19 = ssub.s32 %s13, 2
      %s26 = sadd.s32 1, %s21
      %p27 = scmp.ge.s32.totalorder %s26, 1
      %s28 = scalar_select %p27, 0, %s26
      %s29 = sadd.s32 1, %s20
      %s30 = scalar_select %p27, %s29, %s20
      %p31 = scmp.ge.s32.totalorder %s30, 2
      %s32 = scalar_select %p31, 0, %s30
      %s33 = ssub.s32 %s20, %s32
      %s34 = ssub.s32 %s21, %s28
      %s35 = sor.u32 %s33, %s34
      %p36 = scmp.eq.s32.totalorder %s35, 0
      %s38 = sadd.s32 %s37, 1
      %s39 = scalar_select %p36, %s37, %s38
      %p42 = pneg %p36
      %p43 = scmp.eq.s32.totalorder %s13, 1
      %p44 = por %p42, %p43
      %p45 = scmp.ne.s32.totalorder %s37, %s40
      %p46 = scmp.eq.s32.totalorder %s13, 0
      %p47 = por %p45, %p46
      %p48 = scmp.ne.s32.totalorder %s37, %s40
      %p49 = scmp.eq.s32.totalorder %s18, 1
      %p50 = por %p48, %p49
      %p51 = scmp.ne.s32.totalorder %s40, %s41
      %p52 = scmp.eq.s32.totalorder %s18, 0
      %p53 = por %p51, %p52
      %p54 = scmp.ne.s32.totalorder %s40, %s41
      %p55 = scmp.eq.s32.totalorder %s19, 1
      %p56 = por %p54, %p55
      %p58 = scmp.ne.s32.totalorder %s41, %s57
      %p59 = scmp.eq.s32.totalorder %s19, 0
      %p60 = por %p58, %p59
      %s61 = ssub.s32 %s20, %s32
      %s62 = ssub.s32 %s21, %s28
      %s63 = sor.u32 %s61, %s62
      %p64 = scmp.eq.s32.totalorder %s63, 0
      %s66 = sadd.s32 %s65, 1
      %s67 = scalar_select %p64, %s65, %s66
      %p70 = pneg %p64
      %p71 = scmp.eq.s32.totalorder %s13, 1
      %p72 = por %p70, %p71
      %p73 = scmp.ne.s32.totalorder %s65, %s68
      %p74 = scmp.eq.s32.totalorder %s13, 0
      %p75 = por %p73, %p74
      %p76 = scmp.ne.s32.totalorder %s65, %s68
      %p77 = scmp.eq.s32.totalorder %s18, 1
      %p78 = por %p76, %p77
      %p79 = scmp.ne.s32.totalorder %s68, %s69
      %p80 = scmp.eq.s32.totalorder %s18, 0
      %p81 = por %p79, %p80
      %p82 = scmp.ne.s32.totalorder %s68, %s69
      %p83 = scmp.eq.s32.totalorder %s19, 1
      %p84 = por %p82, %p83
      %p86 = scmp.ne.s32.totalorder %s69, %s85
      %p87 = scmp.eq.s32.totalorder %s19, 0
      %p88 = por %p86, %p87
      %p89 = scmp.le.s32.totalorder 1, %s13
      %p90 = scmp.lt.s32.totalorder %s13, 3
      %p91 = pnand %p89, %p90
      %p92 = pneg %p91
      // Predicated region
      $region9: #{tpu_custom_call.1} parent=5 // pred_check
        _
      $region10: #{tpu_custom_call.1} parent=5 // pred_check_branch
        %94 = sbr.rel (%p91) target = $region12
      $region11: #{tpu_custom_call.1} parent=5 // pred_region
        %s95 = ssub.s32 %s13, 1
      $region12: #{tpu_custom_call.1} parent=5 // pred_fallthru
        _
      %p96 = scmp.lt.s32.totalorder %s13, 2
      // Predicated region
      $region13: #{tpu_custom_call.1} parent=5 // pred_check
        %p97 = pneg %p96
      $region14: #{tpu_custom_call.1} parent=5 // pred_check_branch
        %99 = sbr.rel (%p97) target = $region16
      $region15: #{tpu_custom_call.1} parent=5 // pred_region
        // Predicated region
        $region17: #{tpu_custom_call.1} parent=15 // pred_check
          %p100 = pneg %p47
        $region18: #{tpu_custom_call.1} parent=15 // pred_check_branch
          %102 = sbr.rel (%p100) target = $region20
        $region19: #{tpu_custom_call.1} parent=15 // pred_region
          %s103 = sand.u32 %s37, 1
          %s104 = scalar_lea.sflag [#allocation3], %s103
          %s105 = sand.u32 %s37, 1
          %s106 = smul.addr %s105, 8
          %s107 = scalar_lea.vmem [#allocation2], %s106
          %s109 = ssub.s32 128, 128
          %110 = vsyncadd %s104, %s109
          %s111 = smul.addr %s21, 2
          %s112 = smul.addr %s20, 2
          %s113 = sadd.s32 %s111, %s112
          %s114 = smul.addr %s113, 64
          %s115 = scalar_lea.hbm %s0, %s114
          %s117 = sshll.u32 %s107, 4
          %s118 = int_to_ptr.vmem [resolvable:$true] %s117
          %120 = dma.hbm_to_vmem [thread:$0]  %s115, 128, %s118, %s104
        $region20: #{tpu_custom_call.1} parent=15 // pred_fallthru
          _
      $region16: #{tpu_custom_call.1} parent=5 // pred_fallthru
        _
      %p121 = scmp.le.s32.totalorder 1, %s13
      %p122 = scmp.lt.s32.totalorder %s13, 3
      %p123 = pnand %p121, %p122
      %p124 = pneg %p123
      // Predicated region
      $region21: #{tpu_custom_call.1} parent=5 // pred_check
        _
      $region22: #{tpu_custom_call.1} parent=5 // pred_check_branch
        %126 = sbr.rel (%p123) target = $region24
      $region23: #{tpu_custom_call.1} parent=5 // pred_region
        %s127 = ssub.s32 %s13, 1
        %s128 = sand.u32 %s40, 1
        %s129 = scalar_lea.sflag [#allocation3], %s128
        %s130 = sand.u32 %s40, 1
        %s131 = smul.addr %s130, 8
        %s132 = scalar_lea.vmem [#allocation2], %s131
        // Predicated region
        $region25: #{tpu_custom_call.1} parent=23 // pred_check
          %p133 = pneg %p53
        $region26: #{tpu_custom_call.1} parent=23 // pred_check_branch
          %135 = sbr.rel (%p133) target = $region28
        $region27: #{tpu_custom_call.1} parent=23 // pred_region
          %136 = dma.done %s129, 128
        $region28: #{tpu_custom_call.1} parent=23 // pred_fallthru
          _
        %s137 = sand.u32 %s40, 1
        %s138 = scalar_lea.sflag [#allocation3], %s137
        %s139 = sand.u32 %s40, 1
        %s140 = smul.addr %s139, 8
        %s141 = scalar_lea.vmem [#allocation2], %s140
        %p142 = pneg %p53
        %p143 = pneg %p50
        %p144 = pneg %p81
        %p145 = pneg %p78
        %s146 = sand.u32 %s68, 1
        %s147 = scalar_lea.sflag [#allocation4], %s146
        %s148 = sand.u32 %s68, 1
        %s149 = smul.addr %s148, 72
        %s150 = scalar_lea.vmem [#allocation5], %s149
        %151 = vst [vmem:[%s150] sm:$0xff] 0.0
        %152 = vst [vmem:[%s150 + $0x8] sm:$0xff] 0.0
        %153 = vst [vmem:[%s150 + $0x10] sm:$0xff] 0.0
        %154 = vst [vmem:[%s150 + $0x18] sm:$0xff] 0.0
        %155 = vst [vmem:[%s150 + $0x20] sm:$0xff] 0.0
        %156 = vst [vmem:[%s150 + $0x28] sm:$0xff] 0.0
        %157 = vst [vmem:[%s150 + $0x30] sm:$0xff] 0.0
        %158 = vst [vmem:[%s150 + $0x38] sm:$0xff] 0.0
        %159 = vst [vmem:[%s150 + $0x40] sm:$0xff] 0.0
        %v160 = vld [vmem:[%s132] sm:$0xf]
        %162 = vrot.lane.b32.xlu0 %v160, 34
        %v163 = vpop.permute.xlu0 %162
        %vm165 = vcmask 388368
        %166 = vst.msk [vmem:[%s150] sm:$0xf] %vm165, %v163
        %v167 = vld [vmem:[%s132] sm:$0xf]
        %169 = vrot.lane.b32.xlu0 %v167, 34
        %v170 = vpop.permute.xlu0 %169
        %vm172 = vcmask 519568
        %173 = vst.msk [vmem:[%s150] sm:$0xf] %vm172, %v170
        %v174 = vld [vmem:[%s132] sm:$0xf]
        %176 = vrot.lane.b32.xlu0 %v174, 34
        %v177 = vpop.permute.xlu0 %176
        %vm179 = vcmask 650768
        %180 = vst.msk [vmem:[%s150] sm:$0xf] %vm179, %v177
        %v181 = vld [vmem:[%s132] sm:$0xf]
        %183 = vrot.lane.b32.xlu0 %v181, 34
        %v184 = vpop.permute.xlu0 %183
        %vm186 = vcmask 781968
        %187 = vst.msk [vmem:[%s150] sm:$0xf] %vm186, %v184
        %v188 = vld [vmem:[%s132] sm:$0xf]
        %190 = vrot.lane.b32.xlu0 %v188, 34
        %v191 = vpop.permute.xlu0 %190
        %vm193 = vcmask 913168
        %194 = vst.msk [vmem:[%s150] sm:$0xf] %vm193, %v191
        %v195 = vld [vmem:[%s132] sm:$0xf]
        %197 = vrot.lane.b32.xlu0 %v195, 34
        %v198 = vpop.permute.xlu0 %197
        %vm200 = vcmask 1044368
        %201 = vst.msk [vmem:[%s150] sm:$0xf] %vm200, %v198
        %v202 = vld [vmem:[%s132] sm:$0xf]
        %204 = vrot.lane.b32.xlu0 %v202, 34
        %v205 = vpop.permute.xlu0 %204
        %vm207 = vcmask 125968
        %208 = vst.msk [vmem:[%s150 + $0x4] sm:$0xf] %vm207, %v205
        %v209 = vld [vmem:[%s132] sm:$0xf]
        %211 = vrot.lane.b32.xlu0 %v209, 34
        %v212 = vpop.permute.xlu0 %211
        %vm214 = vcmask 257168
        %215 = vst.msk [vmem:[%s150 + $0x4] sm:$0xf] %vm214, %v212
        %v216 = vld [vmem:[%s132 + $0x4] sm:$0xf]
        %218 = vrot.lane.b32.xlu0 %v216, 34
        %v219 = vpop.permute.xlu0 %218
        %221 = vst.msk [vmem:[%s150 + $0x4] sm:$0xf] %vm165, %v219
        %v222 = vld [vmem:[%s132 + $0x4] sm:$0xf]
        %224 = vrot.lane.b32.xlu0 %v222, 34
        %v225 = vpop.permute.xlu0 %224
        %227 = vst.msk [vmem:[%s150 + $0x4] sm:$0xf] %vm172, %v225
        %v228 = vld [vmem:[%s132 + $0x4] sm:$0xf]
        %230 = vrot.lane.b32.xlu0 %v228, 34
        %v231 = vpop.permute.xlu0 %230
        %233 = vst.msk [vmem:[%s150 + $0x4] sm:$0xf] %vm179, %v231
        %v234 = vld [vmem:[%s132 + $0x4] sm:$0xf]
        %236 = vrot.lane.b32.xlu0 %v234, 34
        %v237 = vpop.permute.xlu0 %236
        %239 = vst.msk [vmem:[%s150 + $0x4] sm:$0xf] %vm186, %v237
        %v240 = vld [vmem:[%s132 + $0x4] sm:$0xf]
        %242 = vrot.lane.b32.xlu0 %v240, 34
        %v243 = vpop.permute.xlu0 %242
        %245 = vst.msk [vmem:[%s150 + $0x4] sm:$0xf] %vm193, %v243
        %v246 = vld [vmem:[%s132 + $0x4] sm:$0xf]
        %248 = vrot.lane.b32.xlu0 %v246, 34
        %v249 = vpop.permute.xlu0 %248
        %251 = vst.msk [vmem:[%s150 + $0x4] sm:$0xf] %vm200, %v249
        %v252 = vld [vmem:[%s132] sm:$0xf]
        %254 = vrot.lane.b32.xlu0 %v252, 32
        %v255 = vpop.permute.xlu0 %254
        %vm257 = vcmask 388352
        %258 = vst.msk [vmem:[%s150 + $0x8] sm:$0xf] %vm257, %v255
        %v259 = vld [vmem:[%s132] sm:$0xf]
        %261 = vrot.lane.b32.xlu0 %v259, 32
        %v262 = vpop.permute.xlu0 %261
        %vm264 = vcmask 519552
        %265 = vst.msk [vmem:[%s150 + $0x8] sm:$0xf] %vm264, %v262
        %v266 = vld [vmem:[%s132] sm:$0xf]
        %268 = vrot.lane.b32.xlu0 %v266, 32
        %v269 = vpop.permute.xlu0 %268
        %vm271 = vcmask 650752
        %272 = vst.msk [vmem:[%s150 + $0x8] sm:$0xf] %vm271, %v269
        %v273 = vld [vmem:[%s132] sm:$0xf]
        %275 = vrot.lane.b32.xlu0 %v273, 32
        %v276 = vpop.permute.xlu0 %275
        %vm278 = vcmask 781952
        %279 = vst.msk [vmem:[%s150 + $0x8] sm:$0xf] %vm278, %v276
        %v280 = vld [vmem:[%s132] sm:$0xf]
        %282 = vrot.lane.b32.xlu0 %v280, 32
        %v283 = vpop.permute.xlu0 %282
        %vm285 = vcmask 913152
        %286 = vst.msk [vmem:[%s150 + $0x8] sm:$0xf] %vm285, %v283
        %v287 = vld [vmem:[%s132] sm:$0xf]
        %289 = vrot.lane.b32.xlu0 %v287, 32
        %v290 = vpop.permute.xlu0 %289
        %vm292 = vcmask 1044352
        %293 = vst.msk [vmem:[%s150 + $0x8] sm:$0xf] %vm292, %v290
        %v294 = vld [vmem:[%s132] sm:$0xf]
        %296 = vrot.lane.b32.xlu0 %v294, 32
        %v297 = vpop.permute.xlu0 %296
        %vm299 = vcmask 125952
        %300 = vst.msk [vmem:[%s150 + $0xc] sm:$0xf] %vm299, %v297
        %v301 = vld [vmem:[%s132] sm:$0xf]
        %303 = vrot.lane.b32.xlu0 %v301, 32
        %v304 = vpop.permute.xlu0 %303
        %vm306 = vcmask 257152
        %307 = vst.msk [vmem:[%s150 + $0xc] sm:$0xf] %vm306, %v304
        %v308 = vld [vmem:[%s132 + $0x4] sm:$0xf]
        %310 = vrot.lane.b32.xlu0 %v308, 32
        %v311 = vpop.permute.xlu0 %310
        %313 = vst.msk [vmem:[%s150 + $0xc] sm:$0xf] %vm257, %v311
        %v314 = vld [vmem:[%s132 + $0x4] sm:$0xf]
        %316 = vrot.lane.b32.xlu0 %v314, 32
        %v317 = vpop.permute.xlu0 %316
        %319 = vst.msk [vmem:[%s150 + $0xc] sm:$0xf] %vm264, %v317
        %v320 = vld [vmem:[%s132 + $0x4] sm:$0xf]
        %322 = vrot.lane.b32.xlu0 %v320, 32
        %v323 = vpop.permute.xlu0 %322
        %325 = vst.msk [vmem:[%s150 + $0xc] sm:$0xf] %vm271, %v323
        %v326 = vld [vmem:[%s132 + $0x4] sm:$0xf]
        %328 = vrot.lane.b32.xlu0 %v326, 32
        %v329 = vpop.permute.xlu0 %328
        %331 = vst.msk [vmem:[%s150 + $0xc] sm:$0xf] %vm278, %v329
        %v332 = vld [vmem:[%s132 + $0x4] sm:$0xf]
        %334 = vrot.lane.b32.xlu0 %v332, 32
        %v335 = vpop.permute.xlu0 %334
        %337 = vst.msk [vmem:[%s150 + $0xc] sm:$0xf] %vm285, %v335
        %v338 = vld [vmem:[%s132 + $0x4] sm:$0xf]
        %340 = vrot.lane.b32.xlu0 %v338, 32
        %v341 = vpop.permute.xlu0 %340
        %343 = vst.msk [vmem:[%s150 + $0xc] sm:$0xf] %vm292, %v341
        %v344 = vld [vmem:[%s132] sm:$0xf]
        %346 = vrot.lane.b32.xlu0 %v344, 30
        %v347 = vpop.permute.xlu0 %346
        %vm349 = vcmask 371968
        %350 = vst.msk [vmem:[%s150 + $0x10] sm:$0xf] %vm349, %v347
        %v351 = vld [vmem:[%s132] sm:$0xf]
        %353 = vrot.lane.b32.xlu0 %v351, 30
        %v354 = vpop.permute.xlu0 %353
        %vm356 = vcmask 503168
        %357 = vst.msk [vmem:[%s150 + $0x10] sm:$0xf] %vm356, %v354
        %v358 = vld [vmem:[%s132] sm:$0xf]
        %360 = vrot.lane.b32.xlu0 %v358, 30
        %v361 = vpop.permute.xlu0 %360
        %vm363 = vcmask 634368
        %364 = vst.msk [vmem:[%s150 + $0x10] sm:$0xf] %vm363, %v361
        %v365 = vld [vmem:[%s132] sm:$0xf]
        %367 = vrot.lane.b32.xlu0 %v365, 30
        %v368 = vpop.permute.xlu0 %367
        %vm370 = vcmask 765568
        %371 = vst.msk [vmem:[%s150 + $0x10] sm:$0xf] %vm370, %v368
        %v372 = vld [vmem:[%s132] sm:$0xf]
        %374 = vrot.lane.b32.xlu0 %v372, 30
        %v375 = vpop.permute.xlu0 %374
        %vm377 = vcmask 896768
        %378 = vst.msk [vmem:[%s150 + $0x10] sm:$0xf] %vm377, %v375
        %v379 = vld [vmem:[%s132] sm:$0xf]
        %381 = vrot.lane.b32.xlu0 %v379, 30
        %v382 = vpop.permute.xlu0 %381
        %vm384 = vcmask 1027968
        %385 = vst.msk [vmem:[%s150 + $0x10] sm:$0xf] %vm384, %v382
        %v386 = vld [vmem:[%s132] sm:$0xf]
        %388 = vrot.lane.b32.xlu0 %v386, 30
        %v389 = vpop.permute.xlu0 %388
        %vm391 = vcmask 109568
        %392 = vst.msk [vmem:[%s150 + $0x14] sm:$0xf] %vm391, %v389
        %v393 = vld [vmem:[%s132] sm:$0xf]
        %395 = vrot.lane.b32.xlu0 %v393, 30
        %v396 = vpop.permute.xlu0 %395
        %vm398 = vcmask 240768
        %399 = vst.msk [vmem:[%s150 + $0x14] sm:$0xf] %vm398, %v396
        %v400 = vld [vmem:[%s132 + $0x4] sm:$0xf]
        %402 = vrot.lane.b32.xlu0 %v400, 30
        %v403 = vpop.permute.xlu0 %402
        %405 = vst.msk [vmem:[%s150 + $0x14] sm:$0xf] %vm349, %v403
        %v406 = vld [vmem:[%s132 + $0x4] sm:$0xf]
        %408 = vrot.lane.b32.xlu0 %v406, 30
        %v409 = vpop.permute.xlu0 %408
        %411 = vst.msk [vmem:[%s150 + $0x14] sm:$0xf] %vm356, %v409
        %v412 = vld [vmem:[%s132 + $0x4] sm:$0xf]
        %414 = vrot.lane.b32.xlu0 %v412, 30
        %v415 = vpop.permute.xlu0 %414
        %417 = vst.msk [vmem:[%s150 + $0x14] sm:$0xf] %vm363, %v415
        %v418 = vld [vmem:[%s132 + $0x4] sm:$0xf]
        %420 = vrot.lane.b32.xlu0 %v418, 30
        %v421 = vpop.permute.xlu0 %420
        %423 = vst.msk [vmem:[%s150 + $0x14] sm:$0xf] %vm370, %v421
        %v424 = vld [vmem:[%s132 + $0x4] sm:$0xf]
        %426 = vrot.lane.b32.xlu0 %v424, 30
        %v427 = vpop.permute.xlu0 %426
        %429 = vst.msk [vmem:[%s150 + $0x14] sm:$0xf] %vm377, %v427
        %v430 = vld [vmem:[%s132 + $0x4] sm:$0xf]
        %432 = vrot.lane.b32.xlu0 %v430, 30
        %v433 = vpop.permute.xlu0 %432
        %435 = vst.msk [vmem:[%s150 + $0x14] sm:$0xf] %vm384, %v433
        %v436 = vld [vmem:[%s132] sm:$0xf]
        %438 = vrot.lane.b32.xlu0 %v436, 2
        %v439 = vpop.permute.xlu0 %438
        %441 = vst.msk [vmem:[%s150 + $0x18] sm:$0xf] %vm207, %v439
        %v442 = vld [vmem:[%s132] sm:$0xf]
        %444 = vrot.lane.b32.xlu0 %v442, 2
        %v445 = vpop.permute.xlu0 %444
        %447 = vst.msk [vmem:[%s150 + $0x18] sm:$0xf] %vm214, %v445
        %v448 = vld [vmem:[%s132] sm:$0xf]
        %450 = vrot.lane.b32.xlu0 %v448, 2
        %v451 = vpop.permute.xlu0 %450
        %453 = vst.msk [vmem:[%s150 + $0x18] sm:$0xf] %vm165, %v451
        %v454 = vld [vmem:[%s132] sm:$0xf]
        %456 = vrot.lane.b32.xlu0 %v454, 2
        %v457 = vpop.permute.xlu0 %456
        %459 = vst.msk [vmem:[%s150 + $0x18] sm:$0xf] %vm172, %v457
        %v460 = vld [vmem:[%s132] sm:$0xf]
        %462 = vrot.lane.b32.xlu0 %v460, 2
        %v463 = vpop.permute.xlu0 %462
        %465 = vst.msk [vmem:[%s150 + $0x18] sm:$0xf] %vm179, %v463
        %v466 = vld [vmem:[%s132] sm:$0xf]
        %468 = vrot.lane.b32.xlu0 %v466, 2
        %v469 = vpop.permute.xlu0 %468
        %471 = vst.msk [vmem:[%s150 + $0x18] sm:$0xf] %vm186, %v469
        %v472 = vld [vmem:[%s132] sm:$0xf]
        %474 = vrot.lane.b32.xlu0 %v472, 2
        %v475 = vpop.permute.xlu0 %474
        %477 = vst.msk [vmem:[%s150 + $0x18] sm:$0xf] %vm193, %v475
        %v478 = vld [vmem:[%s132] sm:$0xf]
        %480 = vrot.lane.b32.xlu0 %v478, 2
        %v481 = vpop.permute.xlu0 %480
        %483 = vst.msk [vmem:[%s150 + $0x18] sm:$0xf] %vm200, %v481
        %v484 = vld [vmem:[%s132 + $0x4] sm:$0xf]
        %486 = vrot.lane.b32.xlu0 %v484, 2
        %v487 = vpop.permute.xlu0 %486
        %489 = vst.msk [vmem:[%s150 + $0x1c] sm:$0xf] %vm207, %v487
        %v490 = vld [vmem:[%s132 + $0x4] sm:$0xf]
        %492 = vrot.lane.b32.xlu0 %v490, 2
        %v493 = vpop.permute.xlu0 %492
        %495 = vst.msk [vmem:[%s150 + $0x1c] sm:$0xf] %vm214, %v493
        %v496 = vld [vmem:[%s132 + $0x4] sm:$0xf]
        %498 = vrot.lane.b32.xlu0 %v496, 2
        %v499 = vpop.permute.xlu0 %498
        %501 = vst.msk [vmem:[%s150 + $0x1c] sm:$0xf] %vm165, %v499
        %v502 = vld [vmem:[%s132 + $0x4] sm:$0xf]
        %504 = vrot.lane.b32.xlu0 %v502, 2
        %v505 = vpop.permute.xlu0 %504
        %507 = vst.msk [vmem:[%s150 + $0x1c] sm:$0xf] %vm172, %v505
        %v508 = vld [vmem:[%s132 + $0x4] sm:$0xf]
        %510 = vrot.lane.b32.xlu0 %v508, 2
        %v511 = vpop.permute.xlu0 %510
        %513 = vst.msk [vmem:[%s150 + $0x1c] sm:$0xf] %vm179, %v511
        %v514 = vld [vmem:[%s132 + $0x4] sm:$0xf]
        %516 = vrot.lane.b32.xlu0 %v514, 2
        %v517 = vpop.permute.xlu0 %516
        %519 = vst.msk [vmem:[%s150 + $0x1c] sm:$0xf] %vm186, %v517
        %v520 = vld [vmem:[%s132 + $0x4] sm:$0xf]
        %522 = vrot.lane.b32.xlu0 %v520, 2
        %v523 = vpop.permute.xlu0 %522
        %525 = vst.msk [vmem:[%s150 + $0x1c] sm:$0xf] %vm193, %v523
        %v526 = vld [vmem:[%s132 + $0x4] sm:$0xf]
        %528 = vrot.lane.b32.xlu0 %v526, 2
        %v529 = vpop.permute.xlu0 %528
        %531 = vst.msk [vmem:[%s150 + $0x1c] sm:$0xf] %vm200, %v529
        %v532 = vld [vmem:[%s132] sm:$0xf]
        %533 = vst.msk [vmem:[%s150 + $0x20] sm:$0xf] %vm299, %v532
        %v534 = vld [vmem:[%s132] sm:$0xf]
        %535 = vst.msk [vmem:[%s150 + $0x20] sm:$0xf] %vm306, %v534
        %v536 = vld [vmem:[%s132] sm:$0xf]
        %537 = vst.msk [vmem:[%s150 + $0x20] sm:$0xf] %vm257, %v536
        %v538 = vld [vmem:[%s132] sm:$0xf]
        %539 = vst.msk [vmem:[%s150 + $0x20] sm:$0xf] %vm264, %v538
        %v540 = vld [vmem:[%s132] sm:$0xf]
        %541 = vst.msk [vmem:[%s150 + $0x20] sm:$0xf] %vm271, %v540
        %v542 = vld [vmem:[%s132] sm:$0xf]
        %543 = vst.msk [vmem:[%s150 + $0x20] sm:$0xf] %vm278, %v542
        %v544 = vld [vmem:[%s132] sm:$0xf]
        %545 = vst.msk [vmem:[%s150 + $0x20] sm:$0xf] %vm285, %v544
        %v546 = vld [vmem:[%s132] sm:$0xf]
        %547 = vst.msk [vmem:[%s150 + $0x20] sm:$0xf] %vm292, %v546
        %v548 = vld [vmem:[%s132 + $0x4] sm:$0xf]
        %549 = vst.msk [vmem:[%s150 + $0x24] sm:$0xf] %vm299, %v548
        %v550 = vld [vmem:[%s132 + $0x4] sm:$0xf]
        %551 = vst.msk [vmem:[%s150 + $0x24] sm:$0xf] %vm306, %v550
        %v552 = vld [vmem:[%s132 + $0x4] sm:$0xf]
        %553 = vst.msk [vmem:[%s150 + $0x24] sm:$0xf] %vm257, %v552
        %v554 = vld [vmem:[%s132 + $0x4] sm:$0xf]
        %555 = vst.msk [vmem:[%s150 + $0x24] sm:$0xf] %vm264, %v554
        %v556 = vld [vmem:[%s132 + $0x4] sm:$0xf]
        %557 = vst.msk [vmem:[%s150 + $0x24] sm:$0xf] %vm271, %v556
        %v558 = vld [vmem:[%s132 + $0x4] sm:$0xf]
        %559 = vst.msk [vmem:[%s150 + $0x24] sm:$0xf] %vm278, %v558
        %v560 = vld [vmem:[%s132 + $0x4] sm:$0xf]
        %561 = vst.msk [vmem:[%s150 + $0x24] sm:$0xf] %vm285, %v560
        %v562 = vld [vmem:[%s132 + $0x4] sm:$0xf]
        %563 = vst.msk [vmem:[%s150 + $0x24] sm:$0xf] %vm292, %v562
        %v564 = vld [vmem:[%s132] sm:$0xf]
        %566 = vrot.lane.b32.xlu0 %v564, 126
        %v567 = vpop.permute.xlu0 %566
        %569 = vst.msk [vmem:[%s150 + $0x28] sm:$0xf] %vm391, %v567
        %v570 = vld [vmem:[%s132] sm:$0xf]
        %572 = vrot.lane.b32.xlu0 %v570, 126
        %v573 = vpop.permute.xlu0 %572
        %575 = vst.msk [vmem:[%s150 + $0x28] sm:$0xf] %vm398, %v573
        %v576 = vld [vmem:[%s132] sm:$0xf]
        %578 = vrot.lane.b32.xlu0 %v576, 126
        %v579 = vpop.permute.xlu0 %578
        %581 = vst.msk [vmem:[%s150 + $0x28] sm:$0xf] %vm349, %v579
        %v582 = vld [vmem:[%s132] sm:$0xf]
        %584 = vrot.lane.b32.xlu0 %v582, 126
        %v585 = vpop.permute.xlu0 %584
        %587 = vst.msk [vmem:[%s150 + $0x28] sm:$0xf] %vm356, %v585
        %v588 = vld [vmem:[%s132] sm:$0xf]
        %590 = vrot.lane.b32.xlu0 %v588, 126
        %v591 = vpop.permute.xlu0 %590
        %593 = vst.msk [vmem:[%s150 + $0x28] sm:$0xf] %vm363, %v591
        %v594 = vld [vmem:[%s132] sm:$0xf]
        %596 = vrot.lane.b32.xlu0 %v594, 126
        %v597 = vpop.permute.xlu0 %596
        %599 = vst.msk [vmem:[%s150 + $0x28] sm:$0xf] %vm370, %v597
        %v600 = vld [vmem:[%s132] sm:$0xf]
        %602 = vrot.lane.b32.xlu0 %v600, 126
        %v603 = vpop.permute.xlu0 %602
        %605 = vst.msk [vmem:[%s150 + $0x28] sm:$0xf] %vm377, %v603
        %v606 = vld [vmem:[%s132] sm:$0xf]
        %608 = vrot.lane.b32.xlu0 %v606, 126
        %v609 = vpop.permute.xlu0 %608
        %611 = vst.msk [vmem:[%s150 + $0x28] sm:$0xf] %vm384, %v609
        %v612 = vld [vmem:[%s132 + $0x4] sm:$0xf]
        %614 = vrot.lane.b32.xlu0 %v612, 126
        %v615 = vpop.permute.xlu0 %614
        %617 = vst.msk [vmem:[%s150 + $0x2c] sm:$0xf] %vm391, %v615
        %v618 = vld [vmem:[%s132 + $0x4] sm:$0xf]
        %620 = vrot.lane.b32.xlu0 %v618, 126
        %v621 = vpop.permute.xlu0 %620
        %623 = vst.msk [vmem:[%s150 + $0x2c] sm:$0xf] %vm398, %v621
        %v624 = vld [vmem:[%s132 + $0x4] sm:$0xf]
        %626 = vrot.lane.b32.xlu0 %v624, 126
        %v627 = vpop.permute.xlu0 %626
        %629 = vst.msk [vmem:[%s150 + $0x2c] sm:$0xf] %vm349, %v627
        %v630 = vld [vmem:[%s132 + $0x4] sm:$0xf]
        %632 = vrot.lane.b32.xlu0 %v630, 126
        %v633 = vpop.permute.xlu0 %632
        %635 = vst.msk [vmem:[%s150 + $0x2c] sm:$0xf] %vm356, %v633
        %v636 = vld [vmem:[%s132 + $0x4] sm:$0xf]
        %638 = vrot.lane.b32.xlu0 %v636, 126
        %v639 = vpop.permute.xlu0 %638
        %641 = vst.msk [vmem:[%s150 + $0x2c] sm:$0xf] %vm363, %v639
        %v642 = vld [vmem:[%s132 + $0x4] sm:$0xf]
        %644 = vrot.lane.b32.xlu0 %v642, 126
        %v645 = vpop.permute.xlu0 %644
        %647 = vst.msk [vmem:[%s150 + $0x2c] sm:$0xf] %vm370, %v645
        %v648 = vld [vmem:[%s132 + $0x4] sm:$0xf]
        %650 = vrot.lane.b32.xlu0 %v648, 126
        %v651 = vpop.permute.xlu0 %650
        %653 = vst.msk [vmem:[%s150 + $0x2c] sm:$0xf] %vm377, %v651
        %v654 = vld [vmem:[%s132 + $0x4] sm:$0xf]
        %656 = vrot.lane.b32.xlu0 %v654, 126
        %v657 = vpop.permute.xlu0 %656
        %659 = vst.msk [vmem:[%s150 + $0x2c] sm:$0xf] %vm384, %v657
        %v660 = vld [vmem:[%s132] sm:$0xf]
        %662 = vrot.lane.b32.xlu0 %v660, 98
        %v663 = vpop.permute.xlu0 %662
        %665 = vst.msk [vmem:[%s150 + $0x30] sm:$0xf] %vm207, %v663
        %v666 = vld [vmem:[%s132] sm:$0xf]
        %668 = vrot.lane.b32.xlu0 %v666, 98
        %v669 = vpop.permute.xlu0 %668
        %671 = vst.msk [vmem:[%s150 + $0x30] sm:$0xf] %vm214, %v669
        %v672 = vld [vmem:[%s132] sm:$0xf]
        %674 = vrot.lane.b32.xlu0 %v672, 98
        %v675 = vpop.permute.xlu0 %674
        %677 = vst.msk [vmem:[%s150 + $0x30] sm:$0xf] %vm165, %v675
        %v678 = vld [vmem:[%s132] sm:$0xf]
        %680 = vrot.lane.b32.xlu0 %v678, 98
        %v681 = vpop.permute.xlu0 %680
        %683 = vst.msk [vmem:[%s150 + $0x30] sm:$0xf] %vm172, %v681
        %v684 = vld [vmem:[%s132] sm:$0xf]
        %686 = vrot.lane.b32.xlu0 %v684, 98
        %v687 = vpop.permute.xlu0 %686
        %689 = vst.msk [vmem:[%s150 + $0x30] sm:$0xf] %vm179, %v687
        %v690 = vld [vmem:[%s132] sm:$0xf]
        %692 = vrot.lane.b32.xlu0 %v690, 98
        %v693 = vpop.permute.xlu0 %692
        %695 = vst.msk [vmem:[%s150 + $0x30] sm:$0xf] %vm186, %v693
        %v696 = vld [vmem:[%s132 + $0x4] sm:$0xf]
        %698 = vrot.lane.b32.xlu0 %v696, 98
        %v699 = vpop.permute.xlu0 %698
        %701 = vst.msk [vmem:[%s150 + $0x30] sm:$0xf] %vm193, %v699
        %v702 = vld [vmem:[%s132 + $0x4] sm:$0xf]
        %704 = vrot.lane.b32.xlu0 %v702, 98
        %v705 = vpop.permute.xlu0 %704
        %707 = vst.msk [vmem:[%s150 + $0x30] sm:$0xf] %vm200, %v705
        %v708 = vld [vmem:[%s132 + $0x4] sm:$0xf]
        %710 = vrot.lane.b32.xlu0 %v708, 98
        %v711 = vpop.permute.xlu0 %710
        %713 = vst.msk [vmem:[%s150 + $0x34] sm:$0xf] %vm207, %v711
        %v714 = vld [vmem:[%s132 + $0x4] sm:$0xf]
        %716 = vrot.lane.b32.xlu0 %v714, 98
        %v717 = vpop.permute.xlu0 %716
        %719 = vst.msk [vmem:[%s150 + $0x34] sm:$0xf] %vm214, %v717
        %v720 = vld [vmem:[%s132 + $0x4] sm:$0xf]
        %722 = vrot.lane.b32.xlu0 %v720, 98
        %v723 = vpop.permute.xlu0 %722
        %725 = vst.msk [vmem:[%s150 + $0x34] sm:$0xf] %vm165, %v723
        %v726 = vld [vmem:[%s132 + $0x4] sm:$0xf]
        %728 = vrot.lane.b32.xlu0 %v726, 98
        %v729 = vpop.permute.xlu0 %728
        %731 = vst.msk [vmem:[%s150 + $0x34] sm:$0xf] %vm172, %v729
        %v732 = vld [vmem:[%s132 + $0x4] sm:$0xf]
        %734 = vrot.lane.b32.xlu0 %v732, 98
        %v735 = vpop.permute.xlu0 %734
        %737 = vst.msk [vmem:[%s150 + $0x34] sm:$0xf] %vm179, %v735
        %v738 = vld [vmem:[%s132 + $0x4] sm:$0xf]
        %740 = vrot.lane.b32.xlu0 %v738, 98
        %v741 = vpop.permute.xlu0 %740
        %743 = vst.msk [vmem:[%s150 + $0x34] sm:$0xf] %vm186, %v741
        %v744 = vld [vmem:[%s132] sm:$0xf]
        %746 = vrot.lane.b32.xlu0 %v744, 96
        %v747 = vpop.permute.xlu0 %746
        %749 = vst.msk [vmem:[%s150 + $0x38] sm:$0xf] %vm299, %v747
        %v750 = vld [vmem:[%s132] sm:$0xf]
        %752 = vrot.lane.b32.xlu0 %v750, 96
        %v753 = vpop.permute.xlu0 %752
        %755 = vst.msk [vmem:[%s150 + $0x38] sm:$0xf] %vm306, %v753
        %v756 = vld [vmem:[%s132] sm:$0xf]
        %758 = vrot.lane.b32.xlu0 %v756, 96
        %v759 = vpop.permute.xlu0 %758
        %761 = vst.msk [vmem:[%s150 + $0x38] sm:$0xf] %vm257, %v759
        %v762 = vld [vmem:[%s132] sm:$0xf]
        %764 = vrot.lane.b32.xlu0 %v762, 96
        %v765 = vpop.permute.xlu0 %764
        %767 = vst.msk [vmem:[%s150 + $0x38] sm:$0xf] %vm264, %v765
        %v768 = vld [vmem:[%s132] sm:$0xf]
        %770 = vrot.lane.b32.xlu0 %v768, 96
        %v771 = vpop.permute.xlu0 %770
        %773 = vst.msk [vmem:[%s150 + $0x38] sm:$0xf] %vm271, %v771
        %v774 = vld [vmem:[%s132] sm:$0xf]
        %776 = vrot.lane.b32.xlu0 %v774, 96
        %v777 = vpop.permute.xlu0 %776
        %779 = vst.msk [vmem:[%s150 + $0x38] sm:$0xf] %vm278, %v777
        %v780 = vld [vmem:[%s132 + $0x4] sm:$0xf]
        %782 = vrot.lane.b32.xlu0 %v780, 96
        %v783 = vpop.permute.xlu0 %782
        %785 = vst.msk [vmem:[%s150 + $0x38] sm:$0xf] %vm285, %v783
        %v786 = vld [vmem:[%s132 + $0x4] sm:$0xf]
        %788 = vrot.lane.b32.xlu0 %v786, 96
        %v789 = vpop.permute.xlu0 %788
        %791 = vst.msk [vmem:[%s150 + $0x38] sm:$0xf] %vm292, %v789
        %v792 = vld [vmem:[%s132 + $0x4] sm:$0xf]
        %794 = vrot.lane.b32.xlu0 %v792, 96
        %v795 = vpop.permute.xlu0 %794
        %797 = vst.msk [vmem:[%s150 + $0x3c] sm:$0xf] %vm299, %v795
        %v798 = vld [vmem:[%s132 + $0x4] sm:$0xf]
        %800 = vrot.lane.b32.xlu0 %v798, 96
        %v801 = vpop.permute.xlu0 %800
        %803 = vst.msk [vmem:[%s150 + $0x3c] sm:$0xf] %vm306, %v801
        %v804 = vld [vmem:[%s132 + $0x4] sm:$0xf]
        %806 = vrot.lane.b32.xlu0 %v804, 96
        %v807 = vpop.permute.xlu0 %806
        %809 = vst.msk [vmem:[%s150 + $0x3c] sm:$0xf] %vm257, %v807
        %v810 = vld [vmem:[%s132 + $0x4] sm:$0xf]
        %812 = vrot.lane.b32.xlu0 %v810, 96
        %v813 = vpop.permute.xlu0 %812
        %815 = vst.msk [vmem:[%s150 + $0x3c] sm:$0xf] %vm264, %v813
        %v816 = vld [vmem:[%s132 + $0x4] sm:$0xf]
        %818 = vrot.lane.b32.xlu0 %v816, 96
        %v819 = vpop.permute.xlu0 %818
        %821 = vst.msk [vmem:[%s150 + $0x3c] sm:$0xf] %vm271, %v819
        %v822 = vld [vmem:[%s132 + $0x4] sm:$0xf]
        %824 = vrot.lane.b32.xlu0 %v822, 96
        %v825 = vpop.permute.xlu0 %824
        %827 = vst.msk [vmem:[%s150 + $0x3c] sm:$0xf] %vm278, %v825
        %v828 = vld [vmem:[%s132] sm:$0xf]
        %830 = vrot.lane.b32.xlu0 %v828, 94
        %v831 = vpop.permute.xlu0 %830
        %833 = vst.msk [vmem:[%s150 + $0x40] sm:$0xf] %vm391, %v831
        %v834 = vld [vmem:[%s132] sm:$0xf]
        %836 = vrot.lane.b32.xlu0 %v834, 94
        %v837 = vpop.permute.xlu0 %836
        %839 = vst.msk [vmem:[%s150 + $0x40] sm:$0xf] %vm398, %v837
        %v840 = vld [vmem:[%s132] sm:$0xf]
        %842 = vrot.lane.b32.xlu0 %v840, 94
        %v843 = vpop.permute.xlu0 %842
        %845 = vst.msk [vmem:[%s150 + $0x40] sm:$0xf] %vm349, %v843
        %v846 = vld [vmem:[%s132] sm:$0xf]
        %848 = vrot.lane.b32.xlu0 %v846, 94
        %v849 = vpop.permute.xlu0 %848
        %851 = vst.msk [vmem:[%s150 + $0x40] sm:$0xf] %vm356, %v849
        %v852 = vld [vmem:[%s132] sm:$0xf]
        %854 = vrot.lane.b32.xlu0 %v852, 94
        %v855 = vpop.permute.xlu0 %854
        %857 = vst.msk [vmem:[%s150 + $0x40] sm:$0xf] %vm363, %v855
        %v858 = vld [vmem:[%s132] sm:$0xf]
        %860 = vrot.lane.b32.xlu0 %v858, 94
        %v861 = vpop.permute.xlu0 %860
        %863 = vst.msk [vmem:[%s150 + $0x40] sm:$0xf] %vm370, %v861
        %v864 = vld [vmem:[%s132 + $0x4] sm:$0xf]
        %866 = vrot.lane.b32.xlu0 %v864, 94
        %v867 = vpop.permute.xlu0 %866
        %869 = vst.msk [vmem:[%s150 + $0x40] sm:$0xf] %vm377, %v867
        %v870 = vld [vmem:[%s132 + $0x4] sm:$0xf]
        %872 = vrot.lane.b32.xlu0 %v870, 94
        %v873 = vpop.permute.xlu0 %872
        %875 = vst.msk [vmem:[%s150 + $0x40] sm:$0xf] %vm384, %v873
        %v876 = vld [vmem:[%s132 + $0x4] sm:$0xf]
        %878 = vrot.lane.b32.xlu0 %v876, 94
        %v879 = vpop.permute.xlu0 %878
        %881 = vst.msk [vmem:[%s150 + $0x44] sm:$0xf] %vm391, %v879
        %v882 = vld [vmem:[%s132 + $0x4] sm:$0xf]
        %884 = vrot.lane.b32.xlu0 %v882, 94
        %v885 = vpop.permute.xlu0 %884
        %887 = vst.msk [vmem:[%s150 + $0x44] sm:$0xf] %vm398, %v885
        %v888 = vld [vmem:[%s132 + $0x4] sm:$0xf]
        %890 = vrot.lane.b32.xlu0 %v888, 94
        %v891 = vpop.permute.xlu0 %890
        %893 = vst.msk [vmem:[%s150 + $0x44] sm:$0xf] %vm349, %v891
        %v894 = vld [vmem:[%s132 + $0x4] sm:$0xf]
        %896 = vrot.lane.b32.xlu0 %v894, 94
        %v897 = vpop.permute.xlu0 %896
        %899 = vst.msk [vmem:[%s150 + $0x44] sm:$0xf] %vm356, %v897
        %v900 = vld [vmem:[%s132 + $0x4] sm:$0xf]
        %902 = vrot.lane.b32.xlu0 %v900, 94
        %v903 = vpop.permute.xlu0 %902
        %905 = vst.msk [vmem:[%s150 + $0x44] sm:$0xf] %vm363, %v903
        %v906 = vld [vmem:[%s132 + $0x4] sm:$0xf]
        %908 = vrot.lane.b32.xlu0 %v906, 94
        %v909 = vpop.permute.xlu0 %908
        %911 = vst.msk [vmem:[%s150 + $0x44] sm:$0xf] %vm370, %v909
        %s912 = sand.u32 %s68, 1
        %s913 = scalar_lea.sflag [#allocation4], %s912
        %s914 = sand.u32 %s68, 1
        %s915 = smul.addr %s914, 72
        %s916 = scalar_lea.vmem [#allocation5], %s915
        // Predicated region
        $region29: #{tpu_custom_call.1} parent=23 // pred_check
          %p917 = pneg %p78
        $region30: #{tpu_custom_call.1} parent=23 // pred_check_branch
          %919 = sbr.rel (%p917) target = $region32
        $region31: #{tpu_custom_call.1} parent=23 // pred_region
          %s921 = ssub.s32 1152, 1152
          %922 = vsyncadd %s913, %s921
          %s923 = smul.addr %s23, 18
          %s924 = smul.addr %s22, 18
          %s925 = sadd.s32 %s923, %s924
          %s926 = smul.addr %s925, 64
          %s927 = scalar_lea.hbm %s1, %s926
          %s929 = sshll.u32 %s916, 4
          %s930 = int_to_ptr.vmem [resolvable:$true] %s929
          %932 = dma.vmem_to_hbm [thread:$0]  %s930, 1152, %s927, %s913
        $region32: #{tpu_custom_call.1} parent=23 // pred_fallthru
          _
      $region24: #{tpu_custom_call.1} parent=5 // pred_fallthru
        _
      %p933 = scmp.le.s32.totalorder 2, %s13
      // Predicated region
      $region33: #{tpu_custom_call.1} parent=5 // pred_check
        %p934 = pneg %p933
      $region34: #{tpu_custom_call.1} parent=5 // pred_check_branch
        %936 = sbr.rel (%p934) target = $region36
      $region35: #{tpu_custom_call.1} parent=5 // pred_region
        %s937 = ssub.s32 %s13, 2
        // Predicated region
        $region37: #{tpu_custom_call.1} parent=35 // pred_check
          %p938 = pneg %p84
        $region38: #{tpu_custom_call.1} parent=35 // pred_check_branch
          %940 = sbr.rel (%p938) target = $region40
        $region39: #{tpu_custom_call.1} parent=35 // pred_region
          %s941 = sand.u32 %s69, 1
          %s942 = scalar_lea.sflag [#allocation4], %s941
          %s943 = sand.u32 %s69, 1
          %s944 = smul.addr %s943, 72
          %s945 = scalar_lea.vmem [#allocation5], %s944
          %946 = dma.done %s942, 1152
        $region40: #{tpu_custom_call.1} parent=35 // pred_fallthru
          _
      $region36: #{tpu_custom_call.1} parent=5 // pred_fallthru
        _
    $region6: #{tpu_custom_call.1} parent=1 // loop_footer
      %s17 = sadd.s32 1, %s13
    $region7: #{tpu_custom_call.1} parent=1 // loop_footer_branch
      %12 = sbr.rel target = $region3
    $region8: #{tpu_custom_call.1} parent=1 // loop_exit
      _
    %947 = vsyncpa [#allocation3], 1
    %s948 = scalar_lea.sflag [#allocation3], 1
    %949 = vsyncpa %s948, 1
    %950 = vsyncpa [#allocation4], 1
    %s951 = scalar_lea.sflag [#allocation4], 1
    %952 = vsyncpa %s951, 1

</llo_original>
